<compile_context>
chip_gen: v6e
topology: v6e:2x2x1
jax: 0.10.0
libtpu: 0.0.40
codegen_flags: <defaults>
</compile_context>

<pallas_src>
import functools

import jax
import jax.numpy as jnp
from jax.experimental import pallas as pl
from jax.experimental.pallas import tpu as pltpu

FF_DIM = 2048      # nn.TransformerEncoderLayer default dim_feedforward
LN_EPS = 1e-5      # nn.LayerNorm default eps


def _layer_norm(y, gamma, beta):
    mu = jnp.mean(y, axis=-1, keepdims=True)
    var = jnp.mean(jnp.square(y - mu), axis=-1, keepdims=True)
    return (y - mu) * jax.lax.rsqrt(var + LN_EPS) * gamma + beta


def _stable_sigmoid(x):
    # sigmoid via EUP exp + approx reciprocal; stable for large |x|.
    e = jnp.exp(-jnp.abs(x))
    inv = pl.reciprocal(1.0 + e, approx=True)
    return jnp.where(x >= 0, inv, e * inv)


def _make_tft_kernel(L, E, H):
    assert E % H == 0, "hidden_size must be divisible by num_heads"
    hd = E // H
    scale = 1.0 / (hd ** 0.5)
    bf16 = jnp.bfloat16
    f32 = jnp.float32

    def kernel(x_ref,
               g_w1rt, g_b1r, g_w2t, g_b2, g_wgt, g_bg,
               wq_t, bq, wk_t, bk, wv_t, bv, wo_t, bo,
               wff1_t, bff1, wff2_t, bff2,
               ln1_g, ln1_b, ln2_g, ln2_b,
               fc_wt, fc_b,
               o_ref, h_ref):
        layer = pl.program_id(0)
        n_layers = pl.num_programs(0)

        # ----- grid step 0: Gated Residual Network (pointwise, last column) --
        @pl.when(layer == 0)
        def _():
            xb = x_ref[...].astype(bf16)                              # (L, d_in)
            # fc1 and fc_residual fused into one matmul (shared LHS).
            both = jnp.dot(xb, g_w1rt[...],
                           preferred_element_type=f32) + g_b1r[...]   # (L, 2E)
            h1 = both[:, :E]
            xres = both[:, E:]
            # ELU(alpha=1); exp only on the non-positive branch.
            h1 = jnp.where(h1 > 0, h1, jnp.exp(jnp.minimum(h1, 0.0)) - 1.0)
            x1 = jnp.dot(h1.astype(bf16), g_w2t[...],
                         preferred_element_type=f32) + g_b2[...]
            gate = _stable_sigmoid(
                jnp.dot(x1.astype(bf16), g_wgt[...],
                        preferred_element_type=f32) + g_bg[...])
            # TODO(synk): Dropout is identity here (inference semantics).
            h_ref[...] = gate * x1 + (1.0 - gate) * xres               # (L, E)

        # ----- transformer encoder layer `layer` (post-norm, ReLU FF) --------
        h = h_ref[...]                                                 # (L, E) f32
        hb = h.astype(bf16)

        attn = jnp.zeros((L, E), f32)
        for i in range(H):                                             # unrolled
            qi = jnp.dot(hb, wq_t[i], preferred_element_type=f32) + bq[i]
            ki = jnp.dot(hb, wk_t[i], preferred_element_type=f32) + bk[i]
            vi = jnp.dot(hb, wv_t[i], preferred_element_type=f32) + bv[i]
            s = jax.lax.dot_general(qi.astype(bf16), ki.astype(bf16),
                                    (((1,), (1,)), ((), ())),
                                    preferred_element_type=f32) * scale  # (L, L)
            s = s - jnp.max(s, axis=-1, keepdims=True)
            p = jnp.exp(s)
            p = p * pl.reciprocal(jnp.sum(p, axis=-1, keepdims=True), approx=True)
            ctx = jnp.dot(p.astype(bf16), vi.astype(bf16),
                          preferred_element_type=f32)                   # (L, hd)
            attn = attn + jnp.dot(ctx.astype(bf16), wo_t[i],
                                  preferred_element_type=f32)           # (L, E)
        attn = attn + bo[0]

        y = _layer_norm(h + attn, ln1_g[0], ln1_b[0])

        ffh = jnp.dot(y.astype(bf16), wff1_t[0],
                      preferred_element_type=f32) + bff1[0]              # (L, 2048)
        ffh = jnp.maximum(ffh, 0.0)
        ff = jnp.dot(ffh.astype(bf16), wff2_t[0],
                     preferred_element_type=f32) + bff2[0]

        h_new = _layer_norm(y + ff, ln2_g[0], ln2_b[0])
        h_ref[...] = h_new

        # ----- last grid step: fused final projection + store ----------------
        @pl.when(layer == n_layers - 1)
        def _():
            out = jnp.dot(h_new.astype(bf16), fc_wt[...],
                          preferred_element_type=f32) + fc_b[...]
            o_ref[...] = out

    return kernel


def _const_spec(arr):
    """Full-array block, constant index map: DMA'd once, resident in VMEM."""
    nd = arr.ndim
    shape = tuple(arr.shape)

    def idx(l):
        return (0,) * nd

    return pl.BlockSpec(shape, idx)


def _layer_spec(arr, leading_block):
    """Per-layer block: leading axis tiled by the layer grid index."""
    nd = arr.ndim
    block = (leading_block,) + tuple(arr.shape[1:])

    def idx(l):
        return (l,) + (0,) * (nd - 1)

    return pl.BlockSpec(block, idx)


def tft_forward(x, params, num_heads):
    d0, d1, d_in = x.shape
    L = d0
    H = num_heads
    E = params["g_w2t"].shape[0]
    out_dim = params["fc_wt"].shape[1]
    num_layers = params["wff1_t"].shape[0]

    # The module returns fc(dropout(encoder(grn(x))[:, -1, :])).  The GRN is
    # pointwise and the encoder batches over d1, so the result depends only on
    # the last d1 column -> slice before launching (drops (d1-1)/d1 dead work).
    x_last = x[:, d1 - 1, :]                                   # (d0, d_in) f32

    grn_w = [params[k] for k in ("g_w1rt", "g_b1r", "g_w2t", "g_b2",
                                 "g_wgt", "g_bg")]
    head_w = [params[k] for k in ("wq_t", "bq", "wk_t", "bk",
                                  "wv_t", "bv", "wo_t")]       # lead = layers*H
    layer_w = [params[k] for k in ("bo", "wff1_t", "bff1", "wff2_t", "bff2",
                                   "ln1_g", "ln1_b", "ln2_g", "ln2_b")]
    fc_w = [params["fc_wt"], params["fc_b"]]

    in_specs = ([_const_spec(x_last)]
                + [_const_spec(a) for a in grn_w]
                + [_layer_spec(a, H) for a in head_w]
                + [_layer_spec(a, 1) for a in layer_w]
                + [_const_spec(a) for a in fc_w])

    kernel = _make_tft_kernel(L, E, H)
    out = pl.pallas_call(
        kernel,
        out_shape=jax.ShapeDtypeStruct((L, out_dim), jnp.float32),
        grid=(num_layers,),
        in_specs=in_specs,
        out_specs=pl.BlockSpec((L, out_dim), lambda l: (0, 0)),
        scratch_shapes=[pltpu.VMEM((L, E), jnp.float32)],      # persistent h
        compiler_params=pltpu.CompilerParams(
            dimension_semantics=("arbitrary",),                # layers are sequential
            vmem_limit_bytes=48 * 1024 * 1024,                 # headroom on v7x
        ),
    )(x_last, *grn_w, *head_w, *layer_w, *fc_w)

    return out                                                 # (d0, output_size)


# -----------------------------------------------------------------------------
# Deterministic parameter init (mimics nn.Linear default uniform bounds).
# Matmul weights stored transposed (and per-head pre-split) in bf16; biases /
# LayerNorm params in f32.
# -----------------------------------------------------------------------------
def _linear_init(key, out_dim, in_dim):
    k1, k2 = jax.random.split(key)
    bound = 1.0 / (in_dim ** 0.5)
    w = jax.random.uniform(k1, (out_dim, in_dim), jnp.float32, -bound, bound)
    b = jax.random.uniform(k2, (out_dim,), jnp.float32, -bound, bound)
    return w, b


def init_params(key, input_size, hidden_size, num_heads, num_layers, output_size):
    E, H = hidden_size, num_heads
    hd = E // H
    bf16 = jnp.bfloat16
    keys = list(jax.random.split(key, 4 + 4 * num_layers + 1))
    ki = iter(keys)

    w1, b1 = _linear_init(next(ki), E, input_size)       # GRN fc1
    w2, b2 = _linear_init(next(ki), E, E)                # GRN fc2
    wr, br = _linear_init(next(ki), E, input_size)       # GRN fc_residual
    wg, bg = _linear_init(next(ki), E, E)                # GRN gate

    # fc1 + fc_residual fused (shared LHS): (d_in, 2E) weight, (1, 2E) bias.
    g_w1rt = jnp.concatenate([w1.T, wr.T], axis=1).astype(bf16)
    g_b1r = jnp.concatenate([b1, br])[None, :]

    wq_t, bq, wk_t, bk, wv_t, bv, wo_t = ([] for _ in range(7))
    bo, wff1_t, bff1, wff2_t, bff2 = ([] for _ in range(5))
    ln1_g, ln1_b, ln2_g, ln2_b = ([] for _ in range(4))

    for _ in range(num_layers):
        w_in, b_in = _linear_init(next(ki), 3 * E, E)    # MHA in_proj (q,k,v)
        w_out, b_out = _linear_init(next(ki), E, E)      # MHA out_proj
        wf1, bf1 = _linear_init(next(ki), FF_DIM, E)     # linear1
        wf2, bf2 = _linear_init(next(ki), E, FF_DIM)     # linear2

        wq, wk, wv = w_in[:E], w_in[E:2 * E], w_in[2 * E:]
        bq_, bk_, bv_ = b_in[:E], b_in[E:2 * E], b_in[2 * E:]
        for h in range(H):
            sl = slice(h * hd, (h + 1) * hd)
            wq_t.append(wq[sl].T.astype(bf16))           # (E, hd)
            wk_t.append(wk[sl].T.astype(bf16))
            wv_t.append(wv[sl].T.astype(bf16))
            bq.append(bq_[sl][None, :])                  # (1, hd)
            bk.append(bk_[sl][None, :])
            bv.append(bv_[sl][None, :])
            wo_t.append(w_out[:, sl].T.astype(bf16))     # (hd, E)

        bo.append(b_out[None, None, :])                  # (1, 1, E)
        wff1_t.append(wf1.T.astype(bf16)[None])          # (1, E, FF_DIM)
        bff1.append(bf1[None, None, :])                  # (1, 1, FF_DIM)
        wff2_t.append(wf2.T.astype(bf16)[None])          # (1, FF_DIM, E)
        bff2.append(bf2[None, None, :])                  # (1, 1, E)
        ln1_g.append(jnp.ones((1, 1, E), jnp.float32))
        ln1_b.append(jnp.zeros((1, 1, E), jnp.float32))
        ln2_g.append(jnp.ones((1, 1, E), jnp.float32))
        ln2_b.append(jnp.zeros((1, 1, E), jnp.float32))

    wfc, bfc = _linear_init(next(ki), output_size, E)

    return dict(
        g_w1rt=g_w1rt, g_b1r=g_b1r,
        g_w2t=w2.T.astype(bf16), g_b2=b2[None, :],
        g_wgt=wg.T.astype(bf16), g_bg=bg[None, :],
        wq_t=jnp.stack(wq_t), bq=jnp.stack(bq),          # (layers*H, E, hd)/(.,1,hd)
        wk_t=jnp.stack(wk_t), bk=jnp.stack(bk),
        wv_t=jnp.stack(wv_t), bv=jnp.stack(bv),
        wo_t=jnp.stack(wo_t),                            # (layers*H, hd, E)
        bo=jnp.concatenate(bo, axis=0),                  # (layers, 1, E)
        wff1_t=jnp.concatenate(wff1_t, axis=0),
        bff1=jnp.concatenate(bff1, axis=0),
        wff2_t=jnp.concatenate(wff2_t, axis=0),
        bff2=jnp.concatenate(bff2, axis=0),
        ln1_g=jnp.concatenate(ln1_g, axis=0), ln1_b=jnp.concatenate(ln1_b, axis=0),
        ln2_g=jnp.concatenate(ln2_g, axis=0), ln2_b=jnp.concatenate(ln2_b, axis=0),
        fc_wt=wfc.T.astype(bf16), fc_b=bfc[None, :],
    )


if __name__ == "__main__":
    d0, d1 = 2, 8
    input_size, hidden_size = 16, 32
    num_heads, num_layers, output_size = 4, 2, 1

    key = jax.random.PRNGKey(0)
    kx, kp = jax.random.split(key)
    x = jax.random.normal(kx, (d0, d1, input_size), jnp.float32)
    params = init_params(kp, input_size, hidden_size, num_heads, num_layers,
                         output_size)

    fwd = jax.jit(functools.partial(tft_forward, num_heads=num_heads))
    out = jax.block_until_ready(fwd(x, params))
    assert out.shape == (d0, output_size), out.shape
    assert bool(jnp.all(jnp.isfinite(out)))
    print("KERNEL_OK")
</pallas_src>

<mosaic_0001>
module attributes {stable_mosaic.version = 11 : i64} {
  func.func @kernel(%arg0: i32, %arg1: memref<2x16xf32, #tpu.memory_space<vmem>>, %arg2: memref<16x64xbf16, #tpu.memory_space<vmem>>, %arg3: memref<1x64xf32, #tpu.memory_space<vmem>>, %arg4: memref<32x32xbf16, #tpu.memory_space<vmem>>, %arg5: memref<1x32xf32, #tpu.memory_space<vmem>>, %arg6: memref<32x32xbf16, #tpu.memory_space<vmem>>, %arg7: memref<1x32xf32, #tpu.memory_space<vmem>>, %arg8: memref<4x32x8xbf16, #tpu.memory_space<vmem>>, %arg9: memref<4x1x8xf32, #tpu.memory_space<vmem>>, %arg10: memref<4x32x8xbf16, #tpu.memory_space<vmem>>, %arg11: memref<4x1x8xf32, #tpu.memory_space<vmem>>, %arg12: memref<4x32x8xbf16, #tpu.memory_space<vmem>>, %arg13: memref<4x1x8xf32, #tpu.memory_space<vmem>>, %arg14: memref<4x8x32xbf16, #tpu.memory_space<vmem>>, %arg15: memref<1x1x32xf32, #tpu.memory_space<vmem>>, %arg16: memref<1x32x2048xbf16, #tpu.memory_space<vmem>>, %arg17: memref<1x1x2048xf32, #tpu.memory_space<vmem>>, %arg18: memref<1x2048x32xbf16, #tpu.memory_space<vmem>>, %arg19: memref<1x1x32xf32, #tpu.memory_space<vmem>>, %arg20: memref<1x1x32xf32, #tpu.memory_space<vmem>>, %arg21: memref<1x1x32xf32, #tpu.memory_space<vmem>>, %arg22: memref<1x1x32xf32, #tpu.memory_space<vmem>>, %arg23: memref<1x1x32xf32, #tpu.memory_space<vmem>>, %arg24: memref<32x1xbf16, #tpu.memory_space<vmem>>, %arg25: memref<1x1xf32, #tpu.memory_space<vmem>>, %arg26: memref<2x1xf32, #tpu.memory_space<vmem>>, %arg27: memref<2x32xf32, #tpu.memory_space<vmem>>) attributes {dimension_semantics = [#tpu.dimension_semantics<arbitrary>], iteration_bounds = array<i64: 2>, scalar_prefetch = 0 : i64, scratch_operands = 1 : i64, tpu.core_type = #tpu.core_type<tc>, window_params = [{pipeline_mode = #tpu.pipeline_mode<synchronous>, transform_indices = @transform_0, window_bounds = array<i64: 2, 16>}, {pipeline_mode = #tpu.pipeline_mode<synchronous>, transform_indices = @transform_1, window_bounds = array<i64: 16, 64>}, {pipeline_mode = #tpu.pipeline_mode<synchronous>, transform_indices = @transform_2, window_bounds = array<i64: 1, 64>}, {pipeline_mode = #tpu.pipeline_mode<synchronous>, transform_indices = @transform_3, window_bounds = array<i64: 32, 32>}, {pipeline_mode = #tpu.pipeline_mode<synchronous>, transform_indices = @transform_4, window_bounds = array<i64: 1, 32>}, {pipeline_mode = #tpu.pipeline_mode<synchronous>, transform_indices = @transform_5, window_bounds = array<i64: 32, 32>}, {pipeline_mode = #tpu.pipeline_mode<synchronous>, transform_indices = @transform_6, window_bounds = array<i64: 1, 32>}, {transform_indices = @transform_7, window_bounds = array<i64: 4, 32, 8>}, {transform_indices = @transform_8, window_bounds = array<i64: 4, 1, 8>}, {transform_indices = @transform_9, window_bounds = array<i64: 4, 32, 8>}, {transform_indices = @transform_10, window_bounds = array<i64: 4, 1, 8>}, {transform_indices = @transform_11, window_bounds = array<i64: 4, 32, 8>}, {transform_indices = @transform_12, window_bounds = array<i64: 4, 1, 8>}, {transform_indices = @transform_13, window_bounds = array<i64: 4, 8, 32>}, {transform_indices = @transform_14, window_bounds = array<i64: 1, 1, 32>}, {transform_indices = @transform_15, window_bounds = array<i64: 1, 32, 2048>}, {transform_indices = @transform_16, window_bounds = array<i64: 1, 1, 2048>}, {transform_indices = @transform_17, window_bounds = array<i64: 1, 2048, 32>}, {transform_indices = @transform_18, window_bounds = array<i64: 1, 1, 32>}, {transform_indices = @transform_19, window_bounds = array<i64: 1, 1, 32>}, {transform_indices = @transform_20, window_bounds = array<i64: 1, 1, 32>}, {transform_indices = @transform_21, window_bounds = array<i64: 1, 1, 32>}, {transform_indices = @transform_22, window_bounds = array<i64: 1, 1, 32>}, {pipeline_mode = #tpu.pipeline_mode<synchronous>, transform_indices = @transform_23, window_bounds = array<i64: 32, 1>}, {pipeline_mode = #tpu.pipeline_mode<synchronous>, transform_indices = @transform_24, window_bounds = array<i64: 1, 1>}, {pipeline_mode = #tpu.pipeline_mode<synchronous>, transform_indices = @transform_25, window_bounds = array<i64: 2, 1>}]} {
    %c0_i32 = arith.constant 0 : i32
    %0 = arith.cmpi eq, %arg0, %c0_i32 : i32
    %1 = arith.extui %0 : i1 to i32
    %c0_i32_0 = arith.constant 0 : i32
    %2 = arith.cmpi ne, %1, %c0_i32_0 : i32
    scf.if %2 {
      %c0_162 = arith.constant 0 : index
      %c0_163 = arith.constant 0 : index
      %262 = vector.load %arg1[%c0_162, %c0_163] : memref<2x16xf32, #tpu.memory_space<vmem>>, vector<2x16xf32>
      %263 = arith.truncf %262 : vector<2x16xf32> to vector<2x16xbf16>
      %c0_164 = arith.constant 0 : index
      %c0_165 = arith.constant 0 : index
      %264 = vector.load %arg2[%c0_164, %c0_165] : memref<16x64xbf16, #tpu.memory_space<vmem>>, vector<16x64xbf16>
      %cst_166 = arith.constant dense<0.000000e+00> : vector<2x64xf32>
      %265 = tpu.matmul %263, %264, %cst_166 {dimension_numbers = #tpu.dot_dimension_numbers<[1], [0], [0], [1], [0, 0, 1, 1], [], []>} : vector<2x16xbf16>, vector<16x64xbf16>, vector<2x64xf32> -> vector<2x64xf32>
      %c0_167 = arith.constant 0 : index
      %c0_168 = arith.constant 0 : index
      %266 = vector.load %arg3[%c0_167, %c0_168] : memref<1x64xf32, #tpu.memory_space<vmem>>, vector<1x64xf32>
      %267 = vector.broadcast %266 : vector<1x64xf32> to vector<2x64xf32>
      %268 = arith.addf %265, %267 : vector<2x64xf32>
      %269 = vector.extract_strided_slice %268 {offsets = [0, 0], sizes = [2, 32], strides = [1, 1]} : vector<2x64xf32> to vector<2x32xf32>
      %270 = vector.extract_strided_slice %268 {offsets = [0, 32], sizes = [2, 32], strides = [1, 1]} : vector<2x64xf32> to vector<2x32xf32>
      %cst_169 = arith.constant 0.000000e+00 : f32
      %271 = vector.broadcast %cst_169 : f32 to vector<2x32xf32>
      %272 = arith.cmpf ogt, %269, %271 : vector<2x32xf32>
      %cst_170 = arith.constant 0.000000e+00 : f32
      %273 = vector.broadcast %cst_170 : f32 to vector<2x32xf32>
      %274 = arith.minimumf %269, %273 : vector<2x32xf32>
      %275 = math.exp %274 : vector<2x32xf32>
      %cst_171 = arith.constant 1.000000e+00 : f32
      %276 = vector.broadcast %cst_171 : f32 to vector<2x32xf32>
      %277 = arith.subf %275, %276 : vector<2x32xf32>
      %278 = arith.select %272, %269, %277 : vector<2x32xi1>, vector<2x32xf32>
      %279 = arith.truncf %278 : vector<2x32xf32> to vector<2x32xbf16>
      %c0_172 = arith.constant 0 : index
      %c0_173 = arith.constant 0 : index
      %280 = vector.load %arg4[%c0_172, %c0_173] : memref<32x32xbf16, #tpu.memory_space<vmem>>, vector<32x32xbf16>
      %cst_174 = arith.constant dense<0.000000e+00> : vector<2x32xf32>
      %281 = tpu.matmul %279, %280, %cst_174 {dimension_numbers = #tpu.dot_dimension_numbers<[1], [0], [0], [1], [0, 0, 1, 1], [], []>} : vector<2x32xbf16>, vector<32x32xbf16>, vector<2x32xf32> -> vector<2x32xf32>
      %c0_175 = arith.constant 0 : index
      %c0_176 = arith.constant 0 : index
      %282 = vector.load %arg5[%c0_175, %c0_176] : memref<1x32xf32, #tpu.memory_space<vmem>>, vector<1x32xf32>
      %283 = vector.broadcast %282 : vector<1x32xf32> to vector<2x32xf32>
      %284 = arith.addf %281, %283 : vector<2x32xf32>
      %285 = arith.truncf %284 : vector<2x32xf32> to vector<2x32xbf16>
      %c0_177 = arith.constant 0 : index
      %c0_178 = arith.constant 0 : index
      %286 = vector.load %arg6[%c0_177, %c0_178] : memref<32x32xbf16, #tpu.memory_space<vmem>>, vector<32x32xbf16>
      %cst_179 = arith.constant dense<0.000000e+00> : vector<2x32xf32>
      %287 = tpu.matmul %285, %286, %cst_179 {dimension_numbers = #tpu.dot_dimension_numbers<[1], [0], [0], [1], [0, 0, 1, 1], [], []>} : vector<2x32xbf16>, vector<32x32xbf16>, vector<2x32xf32> -> vector<2x32xf32>
      %c0_180 = arith.constant 0 : index
      %c0_181 = arith.constant 0 : index
      %288 = vector.load %arg7[%c0_180, %c0_181] : memref<1x32xf32, #tpu.memory_space<vmem>>, vector<1x32xf32>
      %289 = vector.broadcast %288 : vector<1x32xf32> to vector<2x32xf32>
      %290 = arith.addf %287, %289 : vector<2x32xf32>
      %291 = math.absf %290 : vector<2x32xf32>
      %cst_182 = arith.constant 0.000000e+00 : f32
      %292 = vector.broadcast %cst_182 : f32 to vector<2x32xf32>
      %293 = arith.subf %292, %291 : vector<2x32xf32>
      %294 = math.exp %293 : vector<2x32xf32>
      %cst_183 = arith.constant 1.000000e+00 : f32
      %295 = vector.broadcast %cst_183 : f32 to vector<2x32xf32>
      %296 = arith.addf %295, %294 : vector<2x32xf32>
      %297 = tpu.reciprocal %296 {approx = true} : vector<2x32xf32> -> vector<2x32xf32>
      %cst_184 = arith.constant 0.000000e+00 : f32
      %298 = vector.broadcast %cst_184 : f32 to vector<2x32xf32>
      %299 = arith.cmpf oge, %290, %298 : vector<2x32xf32>
      %300 = arith.mulf %294, %297 : vector<2x32xf32>
      %301 = arith.select %299, %297, %300 : vector<2x32xi1>, vector<2x32xf32>
      %302 = arith.mulf %301, %284 : vector<2x32xf32>
      %cst_185 = arith.constant 1.000000e+00 : f32
      %303 = vector.broadcast %cst_185 : f32 to vector<2x32xf32>
      %304 = arith.subf %303, %301 : vector<2x32xf32>
      %305 = arith.mulf %304, %270 : vector<2x32xf32>
      %306 = arith.addf %302, %305 : vector<2x32xf32>
      %c0_186 = arith.constant 0 : index
      %c0_187 = arith.constant 0 : index
      %307 = vector.load %arg27[%c0_186, %c0_187] : memref<2x32xf32, #tpu.memory_space<vmem>>, vector<2x32xf32>
      tpu.vector_store %arg27[%c0_186, %c0_187], %306 {strides = array<i32>} : memref<2x32xf32, #tpu.memory_space<vmem>>, vector<2x32xf32>,
    } else {
    }
    %c0 = arith.constant 0 : index
    %c0_1 = arith.constant 0 : index
    %3 = vector.load %arg27[%c0, %c0_1] : memref<2x32xf32, #tpu.memory_space<vmem>>, vector<2x32xf32>
    %4 = arith.truncf %3 : vector<2x32xf32> to vector<2x32xbf16>
    %cst = arith.constant 0.000000e+00 : f32
    %5 = vector.broadcast %cst : f32 to vector<2x32xf32>
    %c0_2 = arith.constant 0 : index
    %c0_3 = arith.constant 0 : index
    %c0_4 = arith.constant 0 : index
    %6 = vector.load %arg8[%c0_2, %c0_3, %c0_4] : memref<4x32x8xbf16, #tpu.memory_space<vmem>>, vector<1x32x8xbf16>
    %7 = vector.shape_cast %6 : vector<1x32x8xbf16> to vector<32x8xbf16>
    %cst_5 = arith.constant dense<0.000000e+00> : vector<2x8xf32>
    %8 = tpu.matmul %4, %7, %cst_5 {dimension_numbers = #tpu.dot_dimension_numbers<[1], [0], [0], [1], [0, 0, 1, 1], [], []>} : vector<2x32xbf16>, vector<32x8xbf16>, vector<2x8xf32> -> vector<2x8xf32>
    %c0_6 = arith.constant 0 : index
    %c0_7 = arith.constant 0 : index
    %c0_8 = arith.constant 0 : index
    %9 = vector.load %arg9[%c0_6, %c0_7, %c0_8] : memref<4x1x8xf32, #tpu.memory_space<vmem>>, vector<1x1x8xf32>
    %10 = vector.shape_cast %9 : vector<1x1x8xf32> to vector<1x8xf32>
    %11 = vector.broadcast %10 : vector<1x8xf32> to vector<2x8xf32>
    %12 = arith.addf %8, %11 : vector<2x8xf32>
    %c0_9 = arith.constant 0 : index
    %c0_10 = arith.constant 0 : index
    %c0_11 = arith.constant 0 : index
    %13 = vector.load %arg10[%c0_9, %c0_10, %c0_11] : memref<4x32x8xbf16, #tpu.memory_space<vmem>>, vector<1x32x8xbf16>
    %14 = vector.shape_cast %13 : vector<1x32x8xbf16> to vector<32x8xbf16>
    %cst_12 = arith.constant dense<0.000000e+00> : vector<2x8xf32>
    %15 = tpu.matmul %4, %14, %cst_12 {dimension_numbers = #tpu.dot_dimension_numbers<[1], [0], [0], [1], [0, 0, 1, 1], [], []>} : vector<2x32xbf16>, vector<32x8xbf16>, vector<2x8xf32> -> vector<2x8xf32>
    %c0_13 = arith.constant 0 : index
    %c0_14 = arith.constant 0 : index
    %c0_15 = arith.constant 0 : index
    %16 = vector.load %arg11[%c0_13, %c0_14, %c0_15] : memref<4x1x8xf32, #tpu.memory_space<vmem>>, vector<1x1x8xf32>
    %17 = vector.shape_cast %16 : vector<1x1x8xf32> to vector<1x8xf32>
    %18 = vector.broadcast %17 : vector<1x8xf32> to vector<2x8xf32>
    %19 = arith.addf %15, %18 : vector<2x8xf32>
    %c0_16 = arith.constant 0 : index
    %c0_17 = arith.constant 0 : index
    %c0_18 = arith.constant 0 : index
    %20 = vector.load %arg12[%c0_16, %c0_17, %c0_18] : memref<4x32x8xbf16, #tpu.memory_space<vmem>>, vector<1x32x8xbf16>
    %21 = vector.shape_cast %20 : vector<1x32x8xbf16> to vector<32x8xbf16>
    %cst_19 = arith.constant dense<0.000000e+00> : vector<2x8xf32>
    %22 = tpu.matmul %4, %21, %cst_19 {dimension_numbers = #tpu.dot_dimension_numbers<[1], [0], [0], [1], [0, 0, 1, 1], [], []>} : vector<2x32xbf16>, vector<32x8xbf16>, vector<2x8xf32> -> vector<2x8xf32>
    %c0_20 = arith.constant 0 : index
    %c0_21 = arith.constant 0 : index
    %c0_22 = arith.constant 0 : index
    %23 = vector.load %arg13[%c0_20, %c0_21, %c0_22] : memref<4x1x8xf32, #tpu.memory_space<vmem>>, vector<1x1x8xf32>
    %24 = vector.shape_cast %23 : vector<1x1x8xf32> to vector<1x8xf32>
    %25 = vector.broadcast %24 : vector<1x8xf32> to vector<2x8xf32>
    %26 = arith.addf %22, %25 : vector<2x8xf32>
    %27 = arith.truncf %12 : vector<2x8xf32> to vector<2x8xbf16>
    %28 = arith.truncf %19 : vector<2x8xf32> to vector<2x8xbf16>
    %cst_23 = arith.constant dense<0.000000e+00> : vector<2x2xf32>
    %29 = tpu.matmul %27, %28, %cst_23 {dimension_numbers = #tpu.dot_dimension_numbers<[1], [1], [0], [0], [0, 0, 1, 0], [], []>} : vector<2x8xbf16>, vector<2x8xbf16>, vector<2x2xf32> -> vector<2x2xf32>
    %cst_24 = arith.constant 0.353553385 : f32
    %30 = vector.broadcast %cst_24 : f32 to vector<2x2xf32>
    %31 = arith.mulf %29, %30 : vector<2x2xf32>
    %cst_25 = arith.constant dense<0xFF800000> : vector<2xf32>
    %32 = vector.multi_reduction <maximumf>, %31, %cst_25 [1] : vector<2x2xf32> to vector<2xf32>
    %33 = vector.shape_cast %32 : vector<2xf32> to vector<2x1xf32>
    %34 = vector.broadcast %33 : vector<2x1xf32> to vector<2x2xf32>
    %35 = arith.subf %31, %34 : vector<2x2xf32>
    %36 = math.exp %35 : vector<2x2xf32>
    %cst_26 = arith.constant dense<0.000000e+00> : vector<2xf32>
    %37 = vector.multi_reduction <add>, %36, %cst_26 [1] : vector<2x2xf32> to vector<2xf32>
    %38 = vector.shape_cast %37 : vector<2xf32> to vector<2x1xf32>
    %39 = tpu.reciprocal %38 {approx = true} : vector<2x1xf32> -> vector<2x1xf32>
    %40 = vector.broadcast %39 : vector<2x1xf32> to vector<2x2xf32>
    %41 = arith.mulf %36, %40 : vector<2x2xf32>
    %42 = arith.truncf %41 : vector<2x2xf32> to vector<2x2xbf16>
    %43 = arith.truncf %26 : vector<2x8xf32> to vector<2x8xbf16>
    %cst_27 = arith.constant dense<0.000000e+00> : vector<2x8xf32>
    %44 = tpu.matmul %42, %43, %cst_27 {dimension_numbers = #tpu.dot_dimension_numbers<[1], [0], [0], [1], [0, 0, 1, 1], [], []>} : vector<2x2xbf16>, vector<2x8xbf16>, vector<2x8xf32> -> vector<2x8xf32>
    %45 = arith.truncf %44 : vector<2x8xf32> to vector<2x8xbf16>
    %c0_28 = arith.constant 0 : index
    %c0_29 = arith.constant 0 : index
    %c0_30 = arith.constant 0 : index
    %46 = vector.load %arg14[%c0_28, %c0_29, %c0_30] : memref<4x8x32xbf16, #tpu.memory_space<vmem>>, vector<1x8x32xbf16>
    %47 = vector.shape_cast %46 : vector<1x8x32xbf16> to vector<8x32xbf16>
    %cst_31 = arith.constant dense<0.000000e+00> : vector<2x32xf32>
    %48 = tpu.matmul %45, %47, %cst_31 {dimension_numbers = #tpu.dot_dimension_numbers<[1], [0], [0], [1], [0, 0, 1, 1], [], []>} : vector<2x8xbf16>, vector<8x32xbf16>, vector<2x32xf32> -> vector<2x32xf32>
    %49 = arith.addf %5, %48 : vector<2x32xf32>
    %c1 = arith.constant 1 : index
    %c0_32 = arith.constant 0 : index
    %c0_33 = arith.constant 0 : index
    %50 = vector.load %arg8[%c1, %c0_32, %c0_33] : memref<4x32x8xbf16, #tpu.memory_space<vmem>>, vector<1x32x8xbf16>
    %51 = vector.shape_cast %50 : vector<1x32x8xbf16> to vector<32x8xbf16>
    %cst_34 = arith.constant dense<0.000000e+00> : vector<2x8xf32>
    %52 = tpu.matmul %4, %51, %cst_34 {dimension_numbers = #tpu.dot_dimension_numbers<[1], [0], [0], [1], [0, 0, 1, 1], [], []>} : vector<2x32xbf16>, vector<32x8xbf16>, vector<2x8xf32> -> vector<2x8xf32>
    %c1_35 = arith.constant 1 : index
    %c0_36 = arith.constant 0 : index
    %c0_37 = arith.constant 0 : index
    %53 = vector.load %arg9[%c1_35, %c0_36, %c0_37] : memref<4x1x8xf32, #tpu.memory_space<vmem>>, vector<1x1x8xf32>
    %54 = vector.shape_cast %53 : vector<1x1x8xf32> to vector<1x8xf32>
    %55 = vector.broadcast %54 : vector<1x8xf32> to vector<2x8xf32>
    %56 = arith.addf %52, %55 : vector<2x8xf32>
    %c1_38 = arith.constant 1 : index
    %c0_39 = arith.constant 0 : index
    %c0_40 = arith.constant 0 : index
    %57 = vector.load %arg10[%c1_38, %c0_39, %c0_40] : memref<4x32x8xbf16, #tpu.memory_space<vmem>>, vector<1x32x8xbf16>
    %58 = vector.shape_cast %57 : vector<1x32x8xbf16> to vector<32x8xbf16>
    %cst_41 = arith.constant dense<0.000000e+00> : vector<2x8xf32>
    %59 = tpu.matmul %4, %58, %cst_41 {dimension_numbers = #tpu.dot_dimension_numbers<[1], [0], [0], [1], [0, 0, 1, 1], [], []>} : vector<2x32xbf16>, vector<32x8xbf16>, vector<2x8xf32> -> vector<2x8xf32>
    %c1_42 = arith.constant 1 : index
    %c0_43 = arith.constant 0 : index
    %c0_44 = arith.constant 0 : index
    %60 = vector.load %arg11[%c1_42, %c0_43, %c0_44] : memref<4x1x8xf32, #tpu.memory_space<vmem>>, vector<1x1x8xf32>
    %61 = vector.shape_cast %60 : vector<1x1x8xf32> to vector<1x8xf32>
    %62 = vector.broadcast %61 : vector<1x8xf32> to vector<2x8xf32>
    %63 = arith.addf %59, %62 : vector<2x8xf32>
    %c1_45 = arith.constant 1 : index
    %c0_46 = arith.constant 0 : index
    %c0_47 = arith.constant 0 : index
    %64 = vector.load %arg12[%c1_45, %c0_46, %c0_47] : memref<4x32x8xbf16, #tpu.memory_space<vmem>>, vector<1x32x8xbf16>
    %65 = vector.shape_cast %64 : vector<1x32x8xbf16> to vector<32x8xbf16>
    %cst_48 = arith.constant dense<0.000000e+00> : vector<2x8xf32>
    %66 = tpu.matmul %4, %65, %cst_48 {dimension_numbers = #tpu.dot_dimension_numbers<[1], [0], [0], [1], [0, 0, 1, 1], [], []>} : vector<2x32xbf16>, vector<32x8xbf16>, vector<2x8xf32> -> vector<2x8xf32>
    %c1_49 = arith.constant 1 : index
    %c0_50 = arith.constant 0 : index
    %c0_51 = arith.constant 0 : index
    %67 = vector.load %arg13[%c1_49, %c0_50, %c0_51] : memref<4x1x8xf32, #tpu.memory_space<vmem>>, vector<1x1x8xf32>
    %68 = vector.shape_cast %67 : vector<1x1x8xf32> to vector<1x8xf32>
    %69 = vector.broadcast %68 : vector<1x8xf32> to vector<2x8xf32>
    %70 = arith.addf %66, %69 : vector<2x8xf32>
    %71 = arith.truncf %56 : vector<2x8xf32> to vector<2x8xbf16>
    %72 = arith.truncf %63 : vector<2x8xf32> to vector<2x8xbf16>
    %cst_52 = arith.constant dense<0.000000e+00> : vector<2x2xf32>
    %73 = tpu.matmul %71, %72, %cst_52 {dimension_numbers = #tpu.dot_dimension_numbers<[1], [1], [0], [0], [0, 0, 1, 0], [], []>} : vector<2x8xbf16>, vector<2x8xbf16>, vector<2x2xf32> -> vector<2x2xf32>
    %cst_53 = arith.constant 0.353553385 : f32
    %74 = vector.broadcast %cst_53 : f32 to vector<2x2xf32>
    %75 = arith.mulf %73, %74 : vector<2x2xf32>
    %cst_54 = arith.constant dense<0xFF800000> : vector<2xf32>
    %76 = vector.multi_reduction <maximumf>, %75, %cst_54 [1] : vector<2x2xf32> to vector<2xf32>
    %77 = vector.shape_cast %76 : vector<2xf32> to vector<2x1xf32>
    %78 = vector.broadcast %77 : vector<2x1xf32> to vector<2x2xf32>
    %79 = arith.subf %75, %78 : vector<2x2xf32>
    %80 = math.exp %79 : vector<2x2xf32>
    %cst_55 = arith.constant dense<0.000000e+00> : vector<2xf32>
    %81 = vector.multi_reduction <add>, %80, %cst_55 [1] : vector<2x2xf32> to vector<2xf32>
    %82 = vector.shape_cast %81 : vector<2xf32> to vector<2x1xf32>
    %83 = tpu.reciprocal %82 {approx = true} : vector<2x1xf32> -> vector<2x1xf32>
    %84 = vector.broadcast %83 : vector<2x1xf32> to vector<2x2xf32>
    %85 = arith.mulf %80, %84 : vector<2x2xf32>
    %86 = arith.truncf %85 : vector<2x2xf32> to vector<2x2xbf16>
    %87 = arith.truncf %70 : vector<2x8xf32> to vector<2x8xbf16>
    %cst_56 = arith.constant dense<0.000000e+00> : vector<2x8xf32>
    %88 = tpu.matmul %86, %87, %cst_56 {dimension_numbers = #tpu.dot_dimension_numbers<[1], [0], [0], [1], [0, 0, 1, 1], [], []>} : vector<2x2xbf16>, vector<2x8xbf16>, vector<2x8xf32> -> vector<2x8xf32>
    %89 = arith.truncf %88 : vector<2x8xf32> to vector<2x8xbf16>
    %c1_57 = arith.constant 1 : index
    %c0_58 = arith.constant 0 : index
    %c0_59 = arith.constant 0 : index
    %90 = vector.load %arg14[%c1_57, %c0_58, %c0_59] : memref<4x8x32xbf16, #tpu.memory_space<vmem>>, vector<1x8x32xbf16>
    %91 = vector.shape_cast %90 : vector<1x8x32xbf16> to vector<8x32xbf16>
    %cst_60 = arith.constant dense<0.000000e+00> : vector<2x32xf32>
    %92 = tpu.matmul %89, %91, %cst_60 {dimension_numbers = #tpu.dot_dimension_numbers<[1], [0], [0], [1], [0, 0, 1, 1], [], []>} : vector<2x8xbf16>, vector<8x32xbf16>, vector<2x32xf32> -> vector<2x32xf32>
    %93 = arith.addf %49, %92 : vector<2x32xf32>
    %c2 = arith.constant 2 : index
    %c0_61 = arith.constant 0 : index
    %c0_62 = arith.constant 0 : index
    %94 = vector.load %arg8[%c2, %c0_61, %c0_62] : memref<4x32x8xbf16, #tpu.memory_space<vmem>>, vector<1x32x8xbf16>
    %95 = vector.shape_cast %94 : vector<1x32x8xbf16> to vector<32x8xbf16>
    %cst_63 = arith.constant dense<0.000000e+00> : vector<2x8xf32>
    %96 = tpu.matmul %4, %95, %cst_63 {dimension_numbers = #tpu.dot_dimension_numbers<[1], [0], [0], [1], [0, 0, 1, 1], [], []>} : vector<2x32xbf16>, vector<32x8xbf16>, vector<2x8xf32> -> vector<2x8xf32>
    %c2_64 = arith.constant 2 : index
    %c0_65 = arith.constant 0 : index
    %c0_66 = arith.constant 0 : index
    %97 = vector.load %arg9[%c2_64, %c0_65, %c0_66] : memref<4x1x8xf32, #tpu.memory_space<vmem>>, vector<1x1x8xf32>
    %98 = vector.shape_cast %97 : vector<1x1x8xf32> to vector<1x8xf32>
    %99 = vector.broadcast %98 : vector<1x8xf32> to vector<2x8xf32>
    %100 = arith.addf %96, %99 : vector<2x8xf32>
    %c2_67 = arith.constant 2 : index
    %c0_68 = arith.constant 0 : index
    %c0_69 = arith.constant 0 : index
    %101 = vector.load %arg10[%c2_67, %c0_68, %c0_69] : memref<4x32x8xbf16, #tpu.memory_space<vmem>>, vector<1x32x8xbf16>
    %102 = vector.shape_cast %101 : vector<1x32x8xbf16> to vector<32x8xbf16>
    %cst_70 = arith.constant dense<0.000000e+00> : vector<2x8xf32>
    %103 = tpu.matmul %4, %102, %cst_70 {dimension_numbers = #tpu.dot_dimension_numbers<[1], [0], [0], [1], [0, 0, 1, 1], [], []>} : vector<2x32xbf16>, vector<32x8xbf16>, vector<2x8xf32> -> vector<2x8xf32>
    %c2_71 = arith.constant 2 : index
    %c0_72 = arith.constant 0 : index
    %c0_73 = arith.constant 0 : index
    %104 = vector.load %arg11[%c2_71, %c0_72, %c0_73] : memref<4x1x8xf32, #tpu.memory_space<vmem>>, vector<1x1x8xf32>
    %105 = vector.shape_cast %104 : vector<1x1x8xf32> to vector<1x8xf32>
    %106 = vector.broadcast %105 : vector<1x8xf32> to vector<2x8xf32>
    %107 = arith.addf %103, %106 : vector<2x8xf32>
    %c2_74 = arith.constant 2 : index
    %c0_75 = arith.constant 0 : index
    %c0_76 = arith.constant 0 : index
    %108 = vector.load %arg12[%c2_74, %c0_75, %c0_76] : memref<4x32x8xbf16, #tpu.memory_space<vmem>>, vector<1x32x8xbf16>
    %109 = vector.shape_cast %108 : vector<1x32x8xbf16> to vector<32x8xbf16>
    %cst_77 = arith.constant dense<0.000000e+00> : vector<2x8xf32>
    %110 = tpu.matmul %4, %109, %cst_77 {dimension_numbers = #tpu.dot_dimension_numbers<[1], [0], [0], [1], [0, 0, 1, 1], [], []>} : vector<2x32xbf16>, vector<32x8xbf16>, vector<2x8xf32> -> vector<2x8xf32>
    %c2_78 = arith.constant 2 : index
    %c0_79 = arith.constant 0 : index
    %c0_80 = arith.constant 0 : index
    %111 = vector.load %arg13[%c2_78, %c0_79, %c0_80] : memref<4x1x8xf32, #tpu.memory_space<vmem>>, vector<1x1x8xf32>
    %112 = vector.shape_cast %111 : vector<1x1x8xf32> to vector<1x8xf32>
    %113 = vector.broadcast %112 : vector<1x8xf32> to vector<2x8xf32>
    %114 = arith.addf %110, %113 : vector<2x8xf32>
    %115 = arith.truncf %100 : vector<2x8xf32> to vector<2x8xbf16>
    %116 = arith.truncf %107 : vector<2x8xf32> to vector<2x8xbf16>
    %cst_81 = arith.constant dense<0.000000e+00> : vector<2x2xf32>
    %117 = tpu.matmul %115, %116, %cst_81 {dimension_numbers = #tpu.dot_dimension_numbers<[1], [1], [0], [0], [0, 0, 1, 0], [], []>} : vector<2x8xbf16>, vector<2x8xbf16>, vector<2x2xf32> -> vector<2x2xf32>
    %cst_82 = arith.constant 0.353553385 : f32
    %118 = vector.broadcast %cst_82 : f32 to vector<2x2xf32>
    %119 = arith.mulf %117, %118 : vector<2x2xf32>
    %cst_83 = arith.constant dense<0xFF800000> : vector<2xf32>
    %120 = vector.multi_reduction <maximumf>, %119, %cst_83 [1] : vector<2x2xf32> to vector<2xf32>
    %121 = vector.shape_cast %120 : vector<2xf32> to vector<2x1xf32>
    %122 = vector.broadcast %121 : vector<2x1xf32> to vector<2x2xf32>
    %123 = arith.subf %119, %122 : vector<2x2xf32>
    %124 = math.exp %123 : vector<2x2xf32>
    %cst_84 = arith.constant dense<0.000000e+00> : vector<2xf32>
    %125 = vector.multi_reduction <add>, %124, %cst_84 [1] : vector<2x2xf32> to vector<2xf32>
    %126 = vector.shape_cast %125 : vector<2xf32> to vector<2x1xf32>
    %127 = tpu.reciprocal %126 {approx = true} : vector<2x1xf32> -> vector<2x1xf32>
    %128 = vector.broadcast %127 : vector<2x1xf32> to vector<2x2xf32>
    %129 = arith.mulf %124, %128 : vector<2x2xf32>
    %130 = arith.truncf %129 : vector<2x2xf32> to vector<2x2xbf16>
    %131 = arith.truncf %114 : vector<2x8xf32> to vector<2x8xbf16>
    %cst_85 = arith.constant dense<0.000000e+00> : vector<2x8xf32>
    %132 = tpu.matmul %130, %131, %cst_85 {dimension_numbers = #tpu.dot_dimension_numbers<[1], [0], [0], [1], [0, 0, 1, 1], [], []>} : vector<2x2xbf16>, vector<2x8xbf16>, vector<2x8xf32> -> vector<2x8xf32>
    %133 = arith.truncf %132 : vector<2x8xf32> to vector<2x8xbf16>
    %c2_86 = arith.constant 2 : index
    %c0_87 = arith.constant 0 : index
    %c0_88 = arith.constant 0 : index
    %134 = vector.load %arg14[%c2_86, %c0_87, %c0_88] : memref<4x8x32xbf16, #tpu.memory_space<vmem>>, vector<1x8x32xbf16>
    %135 = vector.shape_cast %134 : vector<1x8x32xbf16> to vector<8x32xbf16>
    %cst_89 = arith.constant dense<0.000000e+00> : vector<2x32xf32>
    %136 = tpu.matmul %133, %135, %cst_89 {dimension_numbers = #tpu.dot_dimension_numbers<[1], [0], [0], [1], [0, 0, 1, 1], [], []>} : vector<2x8xbf16>, vector<8x32xbf16>, vector<2x32xf32> -> vector<2x32xf32>
    %137 = arith.addf %93, %136 : vector<2x32xf32>
    %c3 = arith.constant 3 : index
    %c0_90 = arith.constant 0 : index
    %c0_91 = arith.constant 0 : index
    %138 = vector.load %arg8[%c3, %c0_90, %c0_91] : memref<4x32x8xbf16, #tpu.memory_space<vmem>>, vector<1x32x8xbf16>
    %139 = vector.shape_cast %138 : vector<1x32x8xbf16> to vector<32x8xbf16>
    %cst_92 = arith.constant dense<0.000000e+00> : vector<2x8xf32>
    %140 = tpu.matmul %4, %139, %cst_92 {dimension_numbers = #tpu.dot_dimension_numbers<[1], [0], [0], [1], [0, 0, 1, 1], [], []>} : vector<2x32xbf16>, vector<32x8xbf16>, vector<2x8xf32> -> vector<2x8xf32>
    %c3_93 = arith.constant 3 : index
    %c0_94 = arith.constant 0 : index
    %c0_95 = arith.constant 0 : index
    %141 = vector.load %arg9[%c3_93, %c0_94, %c0_95] : memref<4x1x8xf32, #tpu.memory_space<vmem>>, vector<1x1x8xf32>
    %142 = vector.shape_cast %141 : vector<1x1x8xf32> to vector<1x8xf32>
    %143 = vector.broadcast %142 : vector<1x8xf32> to vector<2x8xf32>
    %144 = arith.addf %140, %143 : vector<2x8xf32>
    %c3_96 = arith.constant 3 : index
    %c0_97 = arith.constant 0 : index
    %c0_98 = arith.constant 0 : index
    %145 = vector.load %arg10[%c3_96, %c0_97, %c0_98] : memref<4x32x8xbf16, #tpu.memory_space<vmem>>, vector<1x32x8xbf16>
    %146 = vector.shape_cast %145 : vector<1x32x8xbf16> to vector<32x8xbf16>
    %cst_99 = arith.constant dense<0.000000e+00> : vector<2x8xf32>
    %147 = tpu.matmul %4, %146, %cst_99 {dimension_numbers = #tpu.dot_dimension_numbers<[1], [0], [0], [1], [0, 0, 1, 1], [], []>} : vector<2x32xbf16>, vector<32x8xbf16>, vector<2x8xf32> -> vector<2x8xf32>
    %c3_100 = arith.constant 3 : index
    %c0_101 = arith.constant 0 : index
    %c0_102 = arith.constant 0 : index
    %148 = vector.load %arg11[%c3_100, %c0_101, %c0_102] : memref<4x1x8xf32, #tpu.memory_space<vmem>>, vector<1x1x8xf32>
    %149 = vector.shape_cast %148 : vector<1x1x8xf32> to vector<1x8xf32>
    %150 = vector.broadcast %149 : vector<1x8xf32> to vector<2x8xf32>
    %151 = arith.addf %147, %150 : vector<2x8xf32>
    %c3_103 = arith.constant 3 : index
    %c0_104 = arith.constant 0 : index
    %c0_105 = arith.constant 0 : index
    %152 = vector.load %arg12[%c3_103, %c0_104, %c0_105] : memref<4x32x8xbf16, #tpu.memory_space<vmem>>, vector<1x32x8xbf16>
    %153 = vector.shape_cast %152 : vector<1x32x8xbf16> to vector<32x8xbf16>
    %cst_106 = arith.constant dense<0.000000e+00> : vector<2x8xf32>
    %154 = tpu.matmul %4, %153, %cst_106 {dimension_numbers = #tpu.dot_dimension_numbers<[1], [0], [0], [1], [0, 0, 1, 1], [], []>} : vector<2x32xbf16>, vector<32x8xbf16>, vector<2x8xf32> -> vector<2x8xf32>
    %c3_107 = arith.constant 3 : index
    %c0_108 = arith.constant 0 : index
    %c0_109 = arith.constant 0 : index
    %155 = vector.load %arg13[%c3_107, %c0_108, %c0_109] : memref<4x1x8xf32, #tpu.memory_space<vmem>>, vector<1x1x8xf32>
    %156 = vector.shape_cast %155 : vector<1x1x8xf32> to vector<1x8xf32>
    %157 = vector.broadcast %156 : vector<1x8xf32> to vector<2x8xf32>
    %158 = arith.addf %154, %157 : vector<2x8xf32>
    %159 = arith.truncf %144 : vector<2x8xf32> to vector<2x8xbf16>
    %160 = arith.truncf %151 : vector<2x8xf32> to vector<2x8xbf16>
    %cst_110 = arith.constant dense<0.000000e+00> : vector<2x2xf32>
    %161 = tpu.matmul %159, %160, %cst_110 {dimension_numbers = #tpu.dot_dimension_numbers<[1], [1], [0], [0], [0, 0, 1, 0], [], []>} : vector<2x8xbf16>, vector<2x8xbf16>, vector<2x2xf32> -> vector<2x2xf32>
    %cst_111 = arith.constant 0.353553385 : f32
    %162 = vector.broadcast %cst_111 : f32 to vector<2x2xf32>
    %163 = arith.mulf %161, %162 : vector<2x2xf32>
    %cst_112 = arith.constant dense<0xFF800000> : vector<2xf32>
    %164 = vector.multi_reduction <maximumf>, %163, %cst_112 [1] : vector<2x2xf32> to vector<2xf32>
    %165 = vector.shape_cast %164 : vector<2xf32> to vector<2x1xf32>
    %166 = vector.broadcast %165 : vector<2x1xf32> to vector<2x2xf32>
    %167 = arith.subf %163, %166 : vector<2x2xf32>
    %168 = math.exp %167 : vector<2x2xf32>
    %cst_113 = arith.constant dense<0.000000e+00> : vector<2xf32>
    %169 = vector.multi_reduction <add>, %168, %cst_113 [1] : vector<2x2xf32> to vector<2xf32>
    %170 = vector.shape_cast %169 : vector<2xf32> to vector<2x1xf32>
    %171 = tpu.reciprocal %170 {approx = true} : vector<2x1xf32> -> vector<2x1xf32>
    %172 = vector.broadcast %171 : vector<2x1xf32> to vector<2x2xf32>
    %173 = arith.mulf %168, %172 : vector<2x2xf32>
    %174 = arith.truncf %173 : vector<2x2xf32> to vector<2x2xbf16>
    %175 = arith.truncf %158 : vector<2x8xf32> to vector<2x8xbf16>
    %cst_114 = arith.constant dense<0.000000e+00> : vector<2x8xf32>
    %176 = tpu.matmul %174, %175, %cst_114 {dimension_numbers = #tpu.dot_dimension_numbers<[1], [0], [0], [1], [0, 0, 1, 1], [], []>} : vector<2x2xbf16>, vector<2x8xbf16>, vector<2x8xf32> -> vector<2x8xf32>
    %177 = arith.truncf %176 : vector<2x8xf32> to vector<2x8xbf16>
    %c3_115 = arith.constant 3 : index
    %c0_116 = arith.constant 0 : index
    %c0_117 = arith.constant 0 : index
    %178 = vector.load %arg14[%c3_115, %c0_116, %c0_117] : memref<4x8x32xbf16, #tpu.memory_space<vmem>>, vector<1x8x32xbf16>
    %179 = vector.shape_cast %178 : vector<1x8x32xbf16> to vector<8x32xbf16>
    %cst_118 = arith.constant dense<0.000000e+00> : vector<2x32xf32>
    %180 = tpu.matmul %177, %179, %cst_118 {dimension_numbers = #tpu.dot_dimension_numbers<[1], [0], [0], [1], [0, 0, 1, 1], [], []>} : vector<2x8xbf16>, vector<8x32xbf16>, vector<2x32xf32> -> vector<2x32xf32>
    %181 = arith.addf %137, %180 : vector<2x32xf32>
    %c0_119 = arith.constant 0 : index
    %c0_120 = arith.constant 0 : index
    %c0_121 = arith.constant 0 : index
    %182 = vector.load %arg15[%c0_119, %c0_120, %c0_121] : memref<1x1x32xf32, #tpu.memory_space<vmem>>, vector<1x1x32xf32>
    %183 = vector.shape_cast %182 : vector<1x1x32xf32> to vector<1x32xf32>
    %184 = vector.broadcast %183 : vector<1x32xf32> to vector<2x32xf32>
    %185 = arith.addf %181, %184 : vector<2x32xf32>
    %186 = arith.addf %3, %185 : vector<2x32xf32>
    %c0_122 = arith.constant 0 : index
    %c0_123 = arith.constant 0 : index
    %c0_124 = arith.constant 0 : index
    %187 = vector.load %arg20[%c0_122, %c0_123, %c0_124] : memref<1x1x32xf32, #tpu.memory_space<vmem>>, vector<1x1x32xf32>
    %188 = vector.shape_cast %187 : vector<1x1x32xf32> to vector<1x32xf32>
    %c0_125 = arith.constant 0 : index
    %c0_126 = arith.constant 0 : index
    %c0_127 = arith.constant 0 : index
    %189 = vector.load %arg21[%c0_125, %c0_126, %c0_127] : memref<1x1x32xf32, #tpu.memory_space<vmem>>, vector<1x1x32xf32>
    %190 = vector.shape_cast %189 : vector<1x1x32xf32> to vector<1x32xf32>
    %cst_128 = arith.constant dense<0.000000e+00> : vector<2xf32>
    %191 = vector.multi_reduction <add>, %186, %cst_128 [1] : vector<2x32xf32> to vector<2xf32>
    %192 = vector.shape_cast %191 : vector<2xf32> to vector<2x1xf32>
    %cst_129 = arith.constant 3.200000e+01 : f32
    %193 = vector.broadcast %cst_129 : f32 to vector<2x1xf32>
    %194 = arith.divf %192, %193 : vector<2x1xf32>
    %195 = vector.broadcast %194 : vector<2x1xf32> to vector<2x32xf32>
    %196 = arith.subf %186, %195 : vector<2x32xf32>
    %197 = arith.mulf %196, %196 : vector<2x32xf32>
    %cst_130 = arith.constant dense<0.000000e+00> : vector<2xf32>
    %198 = vector.multi_reduction <add>, %197, %cst_130 [1] : vector<2x32xf32> to vector<2xf32>
    %199 = vector.shape_cast %198 : vector<2xf32> to vector<2x1xf32>
    %cst_131 = arith.constant 3.200000e+01 : f32
    %200 = vector.broadcast %cst_131 : f32 to vector<2x1xf32>
    %201 = arith.divf %199, %200 : vector<2x1xf32>
    %202 = vector.broadcast %194 : vector<2x1xf32> to vector<2x32xf32>
    %203 = arith.subf %186, %202 : vector<2x32xf32>
    %cst_132 = arith.constant 9.99999974E-6 : f32
    %204 = vector.broadcast %cst_132 : f32 to vector<2x1xf32>
    %205 = arith.addf %201, %204 : vector<2x1xf32>
    %206 = math.rsqrt %205 : vector<2x1xf32>
    %207 = vector.broadcast %206 : vector<2x1xf32> to vector<2x32xf32>
    %208 = arith.mulf %203, %207 : vector<2x32xf32>
    %209 = vector.broadcast %188 : vector<1x32xf32> to vector<2x32xf32>
    %210 = arith.mulf %208, %209 : vector<2x32xf32>
    %211 = vector.broadcast %190 : vector<1x32xf32> to vector<2x32xf32>
    %212 = arith.addf %210, %211 : vector<2x32xf32>
    %213 = arith.truncf %212 : vector<2x32xf32> to vector<2x32xbf16>
    %c0_133 = arith.constant 0 : index
    %c0_134 = arith.constant 0 : index
    %c0_135 = arith.constant 0 : index
    %214 = vector.load %arg16[%c0_133, %c0_134, %c0_135] : memref<1x32x2048xbf16, #tpu.memory_space<vmem>>, vector<1x32x2048xbf16>
    %215 = vector.shape_cast %214 : vector<1x32x2048xbf16> to vector<32x2048xbf16>
    %cst_136 = arith.constant dense<0.000000e+00> : vector<2x2048xf32>
    %216 = tpu.matmul %213, %215, %cst_136 {dimension_numbers = #tpu.dot_dimension_numbers<[1], [0], [0], [1], [0, 0, 1, 1], [], []>} : vector<2x32xbf16>, vector<32x2048xbf16>, vector<2x2048xf32> -> vector<2x2048xf32>
    %c0_137 = arith.constant 0 : index
    %c0_138 = arith.constant 0 : index
    %c0_139 = arith.constant 0 : index
    %217 = vector.load %arg17[%c0_137, %c0_138, %c0_139] : memref<1x1x2048xf32, #tpu.memory_space<vmem>>, vector<1x1x2048xf32>
    %218 = vector.shape_cast %217 : vector<1x1x2048xf32> to vector<1x2048xf32>
    %219 = vector.broadcast %218 : vector<1x2048xf32> to vector<2x2048xf32>
    %220 = arith.addf %216, %219 : vector<2x2048xf32>
    %cst_140 = arith.constant 0.000000e+00 : f32
    %221 = vector.broadcast %cst_140 : f32 to vector<2x2048xf32>
    %222 = arith.maximumf %220, %221 : vector<2x2048xf32>
    %223 = arith.truncf %222 : vector<2x2048xf32> to vector<2x2048xbf16>
    %c0_141 = arith.constant 0 : index
    %c0_142 = arith.constant 0 : index
    %c0_143 = arith.constant 0 : index
    %224 = vector.load %arg18[%c0_141, %c0_142, %c0_143] : memref<1x2048x32xbf16, #tpu.memory_space<vmem>>, vector<1x2048x32xbf16>
    %225 = vector.shape_cast %224 : vector<1x2048x32xbf16> to vector<2048x32xbf16>
    %cst_144 = arith.constant dense<0.000000e+00> : vector<2x32xf32>
    %226 = tpu.matmul %223, %225, %cst_144 {dimension_numbers = #tpu.dot_dimension_numbers<[1], [0], [0], [1], [0, 0, 1, 1], [], []>} : vector<2x2048xbf16>, vector<2048x32xbf16>, vector<2x32xf32> -> vector<2x32xf32>
    %c0_145 = arith.constant 0 : index
    %c0_146 = arith.constant 0 : index
    %c0_147 = arith.constant 0 : index
    %227 = vector.load %arg19[%c0_145, %c0_146, %c0_147] : memref<1x1x32xf32, #tpu.memory_space<vmem>>, vector<1x1x32xf32>
    %228 = vector.shape_cast %227 : vector<1x1x32xf32> to vector<1x32xf32>
    %229 = vector.broadcast %228 : vector<1x32xf32> to vector<2x32xf32>
    %230 = arith.addf %226, %229 : vector<2x32xf32>
    %231 = arith.addf %212, %230 : vector<2x32xf32>
    %c0_148 = arith.constant 0 : index
    %c0_149 = arith.constant 0 : index
    %c0_150 = arith.constant 0 : index
    %232 = vector.load %arg22[%c0_148, %c0_149, %c0_150] : memref<1x1x32xf32, #tpu.memory_space<vmem>>, vector<1x1x32xf32>
    %233 = vector.shape_cast %232 : vector<1x1x32xf32> to vector<1x32xf32>
    %c0_151 = arith.constant 0 : index
    %c0_152 = arith.constant 0 : index
    %c0_153 = arith.constant 0 : index
    %234 = vector.load %arg23[%c0_151, %c0_152, %c0_153] : memref<1x1x32xf32, #tpu.memory_space<vmem>>, vector<1x1x32xf32>
    %235 = vector.shape_cast %234 : vector<1x1x32xf32> to vector<1x32xf32>
    %cst_154 = arith.constant dense<0.000000e+00> : vector<2xf32>
    %236 = vector.multi_reduction <add>, %231, %cst_154 [1] : vector<2x32xf32> to vector<2xf32>
    %237 = vector.shape_cast %236 : vector<2xf32> to vector<2x1xf32>
    %cst_155 = arith.constant 3.200000e+01 : f32
    %238 = vector.broadcast %cst_155 : f32 to vector<2x1xf32>
    %239 = arith.divf %237, %238 : vector<2x1xf32>
    %240 = vector.broadcast %239 : vector<2x1xf32> to vector<2x32xf32>
    %241 = arith.subf %231, %240 : vector<2x32xf32>
    %242 = arith.mulf %241, %241 : vector<2x32xf32>
    %cst_156 = arith.constant dense<0.000000e+00> : vector<2xf32>
    %243 = vector.multi_reduction <add>, %242, %cst_156 [1] : vector<2x32xf32> to vector<2xf32>
    %244 = vector.shape_cast %243 : vector<2xf32> to vector<2x1xf32>
    %cst_157 = arith.constant 3.200000e+01 : f32
    %245 = vector.broadcast %cst_157 : f32 to vector<2x1xf32>
    %246 = arith.divf %244, %245 : vector<2x1xf32>
    %247 = vector.broadcast %239 : vector<2x1xf32> to vector<2x32xf32>
    %248 = arith.subf %231, %247 : vector<2x32xf32>
    %cst_158 = arith.constant 9.99999974E-6 : f32
    %249 = vector.broadcast %cst_158 : f32 to vector<2x1xf32>
    %250 = arith.addf %246, %249 : vector<2x1xf32>
    %251 = math.rsqrt %250 : vector<2x1xf32>
    %252 = vector.broadcast %251 : vector<2x1xf32> to vector<2x32xf32>
    %253 = arith.mulf %248, %252 : vector<2x32xf32>
    %254 = vector.broadcast %233 : vector<1x32xf32> to vector<2x32xf32>
    %255 = arith.mulf %253, %254 : vector<2x32xf32>
    %256 = vector.broadcast %235 : vector<1x32xf32> to vector<2x32xf32>
    %257 = arith.addf %255, %256 : vector<2x32xf32>
    %c0_159 = arith.constant 0 : index
    %c0_160 = arith.constant 0 : index
    %258 = vector.load %arg27[%c0_159, %c0_160] : memref<2x32xf32, #tpu.memory_space<vmem>>, vector<2x32xf32>
    tpu.vector_store %arg27[%c0_159, %c0_160], %257 {strides = array<i32>} : memref<2x32xf32, #tpu.memory_space<vmem>>, vector<2x32xf32>,
    %c1_i32 = arith.constant 1 : i32
    %259 = arith.cmpi eq, %arg0, %c1_i32 : i32
    %260 = arith.extui %259 : i1 to i32
    %c0_i32_161 = arith.constant 0 : i32
    %261 = arith.cmpi ne, %260, %c0_i32_161 : i32
    scf.if %261 {
      %262 = arith.truncf %257 : vector<2x32xf32> to vector<2x32xbf16>
      %c0_162 = arith.constant 0 : index
      %c0_163 = arith.constant 0 : index
      %263 = vector.load %arg24[%c0_162, %c0_163] : memref<32x1xbf16, #tpu.memory_space<vmem>>, vector<32x1xbf16>
      %cst_164 = arith.constant dense<0.000000e+00> : vector<2x1xf32>
      %264 = tpu.matmul %262, %263, %cst_164 {dimension_numbers = #tpu.dot_dimension_numbers<[1], [0], [0], [1], [0, 0, 1, 1], [], []>} : vector<2x32xbf16>, vector<32x1xbf16>, vector<2x1xf32> -> vector<2x1xf32>
      %c0_165 = arith.constant 0 : index
      %c0_166 = arith.constant 0 : index
      %265 = vector.load %arg25[%c0_165, %c0_166] : memref<1x1xf32, #tpu.memory_space<vmem>>, vector<1x1xf32>
      %266 = vector.broadcast %265 : vector<1x1xf32> to vector<2x1xf32>
      %267 = arith.addf %264, %266 : vector<2x1xf32>
      %c0_167 = arith.constant 0 : index
      %c0_168 = arith.constant 0 : index
      %268 = vector.load %arg26[%c0_167, %c0_168] : memref<2x1xf32, #tpu.memory_space<vmem>>, vector<2x1xf32>
      tpu.vector_store %arg26[%c0_167, %c0_168], %267 {strides = array<i32>} : memref<2x1xf32, #tpu.memory_space<vmem>>, vector<2x1xf32>,
    } else {
    }
    return
  }
  func.func @transform_0(%arg0: i32) -> (i32, i32) {
    %c0_i32 = arith.constant 0 : i32
    %c0_i32_0 = arith.constant 0 : i32
    %c0_i32_1 = arith.constant 0 : i32
    return %c0_i32, %c0_i32_0 : i32, i32
  }
  func.func @transform_1(%arg0: i32) -> (i32, i32) {
    %c0_i32 = arith.constant 0 : i32
    %c0_i32_0 = arith.constant 0 : i32
    %c0_i32_1 = arith.constant 0 : i32
    return %c0_i32, %c0_i32_0 : i32, i32
  }
  func.func @transform_2(%arg0: i32) -> (i32, i32) {
    %c0_i32 = arith.constant 0 : i32
    %c0_i32_0 = arith.constant 0 : i32
    %c0_i32_1 = arith.constant 0 : i32
    return %c0_i32, %c0_i32_0 : i32, i32
  }
  func.func @transform_3(%arg0: i32) -> (i32, i32) {
    %c0_i32 = arith.constant 0 : i32
    %c0_i32_0 = arith.constant 0 : i32
    %c0_i32_1 = arith.constant 0 : i32
    return %c0_i32, %c0_i32_0 : i32, i32
  }
  func.func @transform_4(%arg0: i32) -> (i32, i32) {
    %c0_i32 = arith.constant 0 : i32
    %c0_i32_0 = arith.constant 0 : i32
    %c0_i32_1 = arith.constant 0 : i32
    return %c0_i32, %c0_i32_0 : i32, i32
  }
  func.func @transform_5(%arg0: i32) -> (i32, i32) {
    %c0_i32 = arith.constant 0 : i32
    %c0_i32_0 = arith.constant 0 : i32
    %c0_i32_1 = arith.constant 0 : i32
    return %c0_i32, %c0_i32_0 : i32, i32
  }
  func.func @transform_6(%arg0: i32) -> (i32, i32) {
    %c0_i32 = arith.constant 0 : i32
    %c0_i32_0 = arith.constant 0 : i32
    %c0_i32_1 = arith.constant 0 : i32
    return %c0_i32, %c0_i32_0 : i32, i32
  }
  func.func @transform_7(%arg0: i32) -> (i32, i32, i32) {
    %c0_i32 = arith.constant 0 : i32
    %c0_i32_0 = arith.constant 0 : i32
    %c0_i32_1 = arith.constant 0 : i32
    return %arg0, %c0_i32, %c0_i32_0 : i32, i32, i32
  }
  func.func @transform_8(%arg0: i32) -> (i32, i32, i32) {
    %c0_i32 = arith.constant 0 : i32
    %c0_i32_0 = arith.constant 0 : i32
    %c0_i32_1 = arith.constant 0 : i32
    return %arg0, %c0_i32, %c0_i32_0 : i32, i32, i32
  }
  func.func @transform_9(%arg0: i32) -> (i32, i32, i32) {
    %c0_i32 = arith.constant 0 : i32
    %c0_i32_0 = arith.constant 0 : i32
    %c0_i32_1 = arith.constant 0 : i32
    return %arg0, %c0_i32, %c0_i32_0 : i32, i32, i32
  }
  func.func @transform_10(%arg0: i32) -> (i32, i32, i32) {
    %c0_i32 = arith.constant 0 : i32
    %c0_i32_0 = arith.constant 0 : i32
    %c0_i32_1 = arith.constant 0 : i32
    return %arg0, %c0_i32, %c0_i32_0 : i32, i32, i32
  }
  func.func @transform_11(%arg0: i32) -> (i32, i32, i32) {
    %c0_i32 = arith.constant 0 : i32
    %c0_i32_0 = arith.constant 0 : i32
    %c0_i32_1 = arith.constant 0 : i32
    return %arg0, %c0_i32, %c0_i32_0 : i32, i32, i32
  }
  func.func @transform_12(%arg0: i32) -> (i32, i32, i32) {
    %c0_i32 = arith.constant 0 : i32
    %c0_i32_0 = arith.constant 0 : i32
    %c0_i32_1 = arith.constant 0 : i32
    return %arg0, %c0_i32, %c0_i32_0 : i32, i32, i32
  }
  func.func @transform_13(%arg0: i32) -> (i32, i32, i32) {
    %c0_i32 = arith.constant 0 : i32
    %c0_i32_0 = arith.constant 0 : i32
    %c0_i32_1 = arith.constant 0 : i32
    return %arg0, %c0_i32, %c0_i32_0 : i32, i32, i32
  }
  func.func @transform_14(%arg0: i32) -> (i32, i32, i32) {
    %c0_i32 = arith.constant 0 : i32
    %c0_i32_0 = arith.constant 0 : i32
    %c0_i32_1 = arith.constant 0 : i32
    return %arg0, %c0_i32, %c0_i32_0 : i32, i32, i32
  }
  func.func @transform_15(%arg0: i32) -> (i32, i32, i32) {
    %c0_i32 = arith.constant 0 : i32
    %c0_i32_0 = arith.constant 0 : i32
    %c0_i32_1 = arith.constant 0 : i32
    return %arg0, %c0_i32, %c0_i32_0 : i32, i32, i32
  }
  func.func @transform_16(%arg0: i32) -> (i32, i32, i32) {
    %c0_i32 = arith.constant 0 : i32
    %c0_i32_0 = arith.constant 0 : i32
    %c0_i32_1 = arith.constant 0 : i32
    return %arg0, %c0_i32, %c0_i32_0 : i32, i32, i32
  }
  func.func @transform_17(%arg0: i32) -> (i32, i32, i32) {
    %c0_i32 = arith.constant 0 : i32
    %c0_i32_0 = arith.constant 0 : i32
    %c0_i32_1 = arith.constant 0 : i32
    return %arg0, %c0_i32, %c0_i32_0 : i32, i32, i32
  }
  func.func @transform_18(%arg0: i32) -> (i32, i32, i32) {
    %c0_i32 = arith.constant 0 : i32
    %c0_i32_0 = arith.constant 0 : i32
    %c0_i32_1 = arith.constant 0 : i32
    return %arg0, %c0_i32, %c0_i32_0 : i32, i32, i32
  }
  func.func @transform_19(%arg0: i32) -> (i32, i32, i32) {
    %c0_i32 = arith.constant 0 : i32
    %c0_i32_0 = arith.constant 0 : i32
    %c0_i32_1 = arith.constant 0 : i32
    return %arg0, %c0_i32, %c0_i32_0 : i32, i32, i32
  }
  func.func @transform_20(%arg0: i32) -> (i32, i32, i32) {
    %c0_i32 = arith.constant 0 : i32
    %c0_i32_0 = arith.constant 0 : i32
    %c0_i32_1 = arith.constant 0 : i32
    return %arg0, %c0_i32, %c0_i32_0 : i32, i32, i32
  }
  func.func @transform_21(%arg0: i32) -> (i32, i32, i32) {
    %c0_i32 = arith.constant 0 : i32
    %c0_i32_0 = arith.constant 0 : i32
    %c0_i32_1 = arith.constant 0 : i32
    return %arg0, %c0_i32, %c0_i32_0 : i32, i32, i32
  }
  func.func @transform_22(%arg0: i32) -> (i32, i32, i32) {
    %c0_i32 = arith.constant 0 : i32
    %c0_i32_0 = arith.constant 0 : i32
    %c0_i32_1 = arith.constant 0 : i32
    return %arg0, %c0_i32, %c0_i32_0 : i32, i32, i32
  }
  func.func @transform_23(%arg0: i32) -> (i32, i32) {
    %c0_i32 = arith.constant 0 : i32
    %c0_i32_0 = arith.constant 0 : i32
    %c0_i32_1 = arith.constant 0 : i32
    return %c0_i32, %c0_i32_0 : i32, i32
  }
  func.func @transform_24(%arg0: i32) -> (i32, i32) {
    %c0_i32 = arith.constant 0 : i32
    %c0_i32_0 = arith.constant 0 : i32
    %c0_i32_1 = arith.constant 0 : i32
    return %c0_i32, %c0_i32_0 : i32, i32
  }
  func.func @transform_25(%arg0: i32) -> (i32, i32) {
    %c0_i32 = arith.constant 0 : i32
    %c0_i32_0 = arith.constant 0 : i32
    %c0_i32_1 = arith.constant 0 : i32
    return %c0_i32, %c0_i32_0 : i32, i32
  }
}

</mosaic_0001>

<llo_original>
// kernel: tft_forward.1
$region0: #{tft_forward.1}
  #allocation0 [shape = 'u32[]', space=smem, size = 0x4, offset = 0x4, fixed_abs, tag = 'smem constant byte address 0x4 - core index']
  #allocation1 [shape = 'u32[144,128]{1,0:T(1,128)}', space=vmem, size = 0x12000, scoped, tag = 'internal scratch']
  #allocation2 [shape = 'f32[2,32]{1,0:T(2,128)}', space=vmem, size = 0x400, scoped, tag = 'scratch operand']
  #allocation3 [shape = 'f32[1,1]{1,0:T(1,128)S(1)}', space=vmem, size = 0x200, scoped, tag = 'scoped memory for tft_forward.1']
  %s0 = inlined_call_operand.vmem [shape: f32[2,16], index: 0, kind: input, shape index: {}]
  %s1 = inlined_call_operand.vmem [shape: bf16[16,64], index: 1, kind: input, shape index: {}]
  %s2 = inlined_call_operand.vmem [shape: f32[1,64], index: 2, kind: input, shape index: {}]
  %s3 = inlined_call_operand.vmem [shape: bf16[32,32], index: 3, kind: input, shape index: {}]
  %s4 = inlined_call_operand.vmem [shape: f32[1,32], index: 4, kind: input, shape index: {}]
  %s5 = inlined_call_operand.vmem [shape: bf16[32,32], index: 5, kind: input, shape index: {}]
  %s6 = inlined_call_operand.vmem [shape: f32[1,32], index: 6, kind: input, shape index: {}]
  %s7 = inlined_call_operand.vmem [shape: bf16[8,32,8], index: 7, kind: input, shape index: {}]
  %s8 = inlined_call_operand.vmem [shape: f32[8,1,8], index: 8, kind: input, shape index: {}]
  %s9 = inlined_call_operand.vmem [shape: bf16[8,32,8], index: 9, kind: input, shape index: {}]
  %s10 = inlined_call_operand.vmem [shape: f32[8,1,8], index: 10, kind: input, shape index: {}]
  %s11 = inlined_call_operand.vmem [shape: bf16[8,32,8], index: 11, kind: input, shape index: {}]
  %s12 = inlined_call_operand.vmem [shape: f32[8,1,8], index: 12, kind: input, shape index: {}]
  %s13 = inlined_call_operand.vmem [shape: bf16[8,8,32], index: 13, kind: input, shape index: {}]
  %s14 = inlined_call_operand.vmem [shape: f32[2,1,32], index: 14, kind: input, shape index: {}]
  %s15 = inlined_call_operand.vmem [shape: bf16[2,32,2048], index: 15, kind: input, shape index: {}]
  %s16 = inlined_call_operand.vmem [shape: f32[2,1,2048], index: 16, kind: input, shape index: {}]
  %s17 = inlined_call_operand.vmem [shape: bf16[2,2048,32], index: 17, kind: input, shape index: {}]
  %s18 = inlined_call_operand.vmem [shape: f32[2,1,32], index: 18, kind: input, shape index: {}]
  %s19 = inlined_call_operand.vmem [shape: f32[2,1,32], index: 19, kind: input, shape index: {}]
  %s20 = inlined_call_operand.vmem [shape: f32[2,1,32], index: 20, kind: input, shape index: {}]
  %s21 = inlined_call_operand.vmem [shape: f32[2,1,32], index: 21, kind: input, shape index: {}]
  %s22 = inlined_call_operand.vmem [shape: f32[2,1,32], index: 22, kind: input, shape index: {}]
  %s23 = inlined_call_operand.vmem [shape: bf16[32,1], index: 23, kind: input, shape index: {}]
  %s24 = inlined_call_operand.<no memory space> [shape: f32[1,1], index: 24, kind: input, shape index: {}]
  %s25 = inlined_call_operand.vmem [shape: f32[2,1], index: 25, kind: output, shape index: {}]
  %s26 = sld [smem:[#allocation0]]
  $region141: #{tft_forward.1} parent=0
    _
  %s28 = ssub.s32 1, %s26
  %s29 = scalar_select 0, %s28, %s26
  %v30 = vstv %s24
  %31 = vst [vmem:[#allocation3] sm:$0x1] %v30
  loop: start=0, step=1, limit=4
  $region2: #{tft_forward.1} parent=0 // loop_pre_header
    _
  $region3: #{tft_forward.1} parent=0 // loop_header
    %s33 = sphi 0, %s37
    %p34 = scmp.ge.s32.totalorder %s33, 4
    %s41 = sphi 0, %s41
    %s43 = sphi 0, %s41
    %s44 = sphi 0, %s43
    %s58 = sphi 0, %s44
    %s62 = sphi 0, %s62
    %s64 = sphi 0, %s62
    %s65 = sphi 0, %s64
    %s79 = sphi 0, %s65
    %s83 = sphi 0, %s83
    %s85 = sphi 0, %s83
    %s86 = sphi 0, %s85
    %s100 = sphi 0, %s86
    %s104 = sphi 0, %s104
    %s106 = sphi 0, %s104
    %s107 = sphi 0, %s106
    %s121 = sphi 0, %s107
    %s125 = sphi 0, %s125
    %s127 = sphi 0, %s125
    %s128 = sphi 0, %s127
    %s142 = sphi 0, %s128
    %s146 = sphi 0, %s146
    %s148 = sphi 0, %s146
    %s149 = sphi 0, %s148
    %s163 = sphi 0, %s149
    %s167 = sphi 0, %s167
    %s169 = sphi 0, %s167
    %s170 = sphi 0, %s169
    %s184 = sphi 0, %s170
    %s190 = sphi 0, %s192
    %s193 = sphi 0, %s190
    %s194 = sphi 0, %s193
    %s210 = sphi 0, %s194
    %s216 = sphi 0, %s218
    %s219 = sphi 0, %s216
    %s220 = sphi 0, %s219
    %s236 = sphi 0, %s220
    %s242 = sphi 0, %s244
    %s245 = sphi 0, %s242
    %s246 = sphi 0, %s245
    %s262 = sphi 0, %s246
    %s268 = sphi 0, %s270
    %s271 = sphi 0, %s268
    %s272 = sphi 0, %s271
    %s288 = sphi 0, %s272
    %s294 = sphi 0, %s296
    %s297 = sphi 0, %s294
    %s298 = sphi 0, %s297
    %s314 = sphi 0, %s298
    %s320 = sphi 0, %s322
    %s323 = sphi 0, %s320
    %s324 = sphi 0, %s323
    %s340 = sphi 0, %s324
    %s346 = sphi 0, %s348
    %s349 = sphi 0, %s346
    %s350 = sphi 0, %s349
    %s366 = sphi 0, %s350
    %s372 = sphi 0, %s374
    %s375 = sphi 0, %s372
    %s376 = sphi 0, %s375
    %s392 = sphi 0, %s376
    %s398 = sphi 0, %s400
    %s401 = sphi 0, %s398
    %s402 = sphi 0, %s401
    %s418 = sphi 0, %s402
    %s424 = sphi 0, %s426
    %s427 = sphi 0, %s424
    %s428 = sphi 0, %s427
    %s444 = sphi 0, %s428
    %s450 = sphi 0, %s452
    %s453 = sphi 0, %s450
    %s454 = sphi 0, %s453
    %s470 = sphi 0, %s454
    %s476 = sphi 0, %s478
    %s479 = sphi 0, %s476
    %s480 = sphi 0, %s479
    %s496 = sphi 0, %s480
    %s502 = sphi 0, %s504
    %s505 = sphi 0, %s502
    %s506 = sphi 0, %s505
    %s522 = sphi 0, %s506
    %s528 = sphi 0, %s530
    %s531 = sphi 0, %s528
    %s532 = sphi 0, %s531
    %s548 = sphi 0, %s532
    %s554 = sphi 0, %s556
    %s557 = sphi 0, %s554
    %s558 = sphi 0, %s557
    %s574 = sphi 0, %s558
    %s580 = sphi 0, %s582
    %s583 = sphi 0, %s580
    %s584 = sphi 0, %s583
    %s600 = sphi 0, %s584
    %s604 = sphi 0, %s604
    %s606 = sphi 0, %s604
    %s607 = sphi 0, %s606
    %s621 = sphi 0, %s607
    %s625 = sphi 0, %s625
    %s627 = sphi 0, %s625
    %s628 = sphi 0, %s627
    %s642 = sphi 0, %s628
    %s646 = sphi 0, %s646
    %s648 = sphi 0, %s646
    %s649 = sphi 0, %s648
    %s663 = sphi 0, %s649
  $region4: #{tft_forward.1} parent=0 // loop_header_branch
    %36 = sbr.rel (%p34) target = $region8
  $region5: #{tft_forward.1} parent=0 // loop_body
    %s38 = ssub.s32 %s33, 1
    %s39 = ssub.s32 %s33, 2
    %s40 = sadd.s32 %s33, 1
    %s42 = sadd.s32 %s41, 1
    %p45 = scmp.eq.s32.totalorder %s33, 1
    %p46 = scmp.ne.s32.totalorder %s41, %s43
    %p47 = scmp.eq.s32.totalorder %s33, 0
    %p48 = por %p46, %p47
    %p49 = scmp.ne.s32.totalorder %s41, %s43
    %p50 = scmp.eq.s32.totalorder %s38, 1
    %p51 = por %p49, %p50
    %p52 = scmp.ne.s32.totalorder %s43, %s44
    %p53 = scmp.eq.s32.totalorder %s38, 0
    %p54 = por %p52, %p53
    %p55 = scmp.ne.s32.totalorder %s43, %s44
    %p56 = scmp.eq.s32.totalorder %s39, 1
    %p57 = por %p55, %p56
    %p59 = scmp.ne.s32.totalorder %s44, %s58
    %p60 = scmp.eq.s32.totalorder %s39, 0
    %p61 = por %p59, %p60
    %s63 = sadd.s32 %s62, 1
    %p66 = scmp.eq.s32.totalorder %s33, 1
    %p67 = scmp.ne.s32.totalorder %s62, %s64
    %p68 = scmp.eq.s32.totalorder %s33, 0
    %p69 = por %p67, %p68
    %p70 = scmp.ne.s32.totalorder %s62, %s64
    %p71 = scmp.eq.s32.totalorder %s38, 1
    %p72 = por %p70, %p71
    %p73 = scmp.ne.s32.totalorder %s64, %s65
    %p74 = scmp.eq.s32.totalorder %s38, 0
    %p75 = por %p73, %p74
    %p76 = scmp.ne.s32.totalorder %s64, %s65
    %p77 = scmp.eq.s32.totalorder %s39, 1
    %p78 = por %p76, %p77
    %p80 = scmp.ne.s32.totalorder %s65, %s79
    %p81 = scmp.eq.s32.totalorder %s39, 0
    %p82 = por %p80, %p81
    %s84 = sadd.s32 %s83, 1
    %p87 = scmp.eq.s32.totalorder %s33, 1
    %p88 = scmp.ne.s32.totalorder %s83, %s85
    %p89 = scmp.eq.s32.totalorder %s33, 0
    %p90 = por %p88, %p89
    %p91 = scmp.ne.s32.totalorder %s83, %s85
    %p92 = scmp.eq.s32.totalorder %s38, 1
    %p93 = por %p91, %p92
    %p94 = scmp.ne.s32.totalorder %s85, %s86
    %p95 = scmp.eq.s32.totalorder %s38, 0
    %p96 = por %p94, %p95
    %p97 = scmp.ne.s32.totalorder %s85, %s86
    %p98 = scmp.eq.s32.totalorder %s39, 1
    %p99 = por %p97, %p98
    %p101 = scmp.ne.s32.totalorder %s86, %s100
    %p102 = scmp.eq.s32.totalorder %s39, 0
    %p103 = por %p101, %p102
    %s105 = sadd.s32 %s104, 1
    %p108 = scmp.eq.s32.totalorder %s33, 1
    %p109 = scmp.ne.s32.totalorder %s104, %s106
    %p110 = scmp.eq.s32.totalorder %s33, 0
    %p111 = por %p109, %p110
    %p112 = scmp.ne.s32.totalorder %s104, %s106
    %p113 = scmp.eq.s32.totalorder %s38, 1
    %p114 = por %p112, %p113
    %p115 = scmp.ne.s32.totalorder %s106, %s107
    %p116 = scmp.eq.s32.totalorder %s38, 0
    %p117 = por %p115, %p116
    %p118 = scmp.ne.s32.totalorder %s106, %s107
    %p119 = scmp.eq.s32.totalorder %s39, 1
    %p120 = por %p118, %p119
    %p122 = scmp.ne.s32.totalorder %s107, %s121
    %p123 = scmp.eq.s32.totalorder %s39, 0
    %p124 = por %p122, %p123
    %s126 = sadd.s32 %s125, 1
    %p129 = scmp.eq.s32.totalorder %s33, 1
    %p130 = scmp.ne.s32.totalorder %s125, %s127
    %p131 = scmp.eq.s32.totalorder %s33, 0
    %p132 = por %p130, %p131
    %p133 = scmp.ne.s32.totalorder %s125, %s127
    %p134 = scmp.eq.s32.totalorder %s38, 1
    %p135 = por %p133, %p134
    %p136 = scmp.ne.s32.totalorder %s127, %s128
    %p137 = scmp.eq.s32.totalorder %s38, 0
    %p138 = por %p136, %p137
    %p139 = scmp.ne.s32.totalorder %s127, %s128
    %p140 = scmp.eq.s32.totalorder %s39, 1
    %p141 = por %p139, %p140
    %p143 = scmp.ne.s32.totalorder %s128, %s142
    %p144 = scmp.eq.s32.totalorder %s39, 0
    %p145 = por %p143, %p144
    %s147 = sadd.s32 %s146, 1
    %p150 = scmp.eq.s32.totalorder %s33, 1
    %p151 = scmp.ne.s32.totalorder %s146, %s148
    %p152 = scmp.eq.s32.totalorder %s33, 0
    %p153 = por %p151, %p152
    %p154 = scmp.ne.s32.totalorder %s146, %s148
    %p155 = scmp.eq.s32.totalorder %s38, 1
    %p156 = por %p154, %p155
    %p157 = scmp.ne.s32.totalorder %s148, %s149
    %p158 = scmp.eq.s32.totalorder %s38, 0
    %p159 = por %p157, %p158
    %p160 = scmp.ne.s32.totalorder %s148, %s149
    %p161 = scmp.eq.s32.totalorder %s39, 1
    %p162 = por %p160, %p161
    %p164 = scmp.ne.s32.totalorder %s149, %s163
    %p165 = scmp.eq.s32.totalorder %s39, 0
    %p166 = por %p164, %p165
    %s168 = sadd.s32 %s167, 1
    %p171 = scmp.eq.s32.totalorder %s33, 1
    %p172 = scmp.ne.s32.totalorder %s167, %s169
    %p173 = scmp.eq.s32.totalorder %s33, 0
    %p174 = por %p172, %p173
    %p175 = scmp.ne.s32.totalorder %s167, %s169
    %p176 = scmp.eq.s32.totalorder %s38, 1
    %p177 = por %p175, %p176
    %p178 = scmp.ne.s32.totalorder %s169, %s170
    %p179 = scmp.eq.s32.totalorder %s38, 0
    %p180 = por %p178, %p179
    %p181 = scmp.ne.s32.totalorder %s169, %s170
    %p182 = scmp.eq.s32.totalorder %s39, 1
    %p183 = por %p181, %p182
    %p185 = scmp.ne.s32.totalorder %s170, %s184
    %p186 = scmp.eq.s32.totalorder %s39, 0
    %p187 = por %p185, %p186
    %s188 = ssub.s32 %s33, %s40
    %p189 = scmp.eq.s32.totalorder %s188, 0
    %s191 = sadd.s32 %s190, 1
    %s192 = scalar_select %p189, %s190, %s191
    %p195 = pneg %p189
    %p196 = scmp.eq.s32.totalorder %s33, 1
    %p197 = por %p195, %p196
    %p198 = scmp.ne.s32.totalorder %s190, %s193
    %p199 = scmp.eq.s32.totalorder %s33, 0
    %p200 = por %p198, %p199
    %p201 = scmp.ne.s32.totalorder %s190, %s193
    %p202 = scmp.eq.s32.totalorder %s38, 1
    %p203 = por %p201, %p202
    %p204 = scmp.ne.s32.totalorder %s193, %s194
    %p205 = scmp.eq.s32.totalorder %s38, 0
    %p206 = por %p204, %p205
    %p207 = scmp.ne.s32.totalorder %s193, %s194
    %p208 = scmp.eq.s32.totalorder %s39, 1
    %p209 = por %p207, %p208
    %p211 = scmp.ne.s32.totalorder %s194, %s210
    %p212 = scmp.eq.s32.totalorder %s39, 0
    %p213 = por %p211, %p212
    %s214 = ssub.s32 %s33, %s40
    %p215 = scmp.eq.s32.totalorder %s214, 0
    %s217 = sadd.s32 %s216, 1
    %s218 = scalar_select %p215, %s216, %s217
    %p221 = pneg %p215
    %p222 = scmp.eq.s32.totalorder %s33, 1
    %p223 = por %p221, %p222
    %p224 = scmp.ne.s32.totalorder %s216, %s219
    %p225 = scmp.eq.s32.totalorder %s33, 0
    %p226 = por %p224, %p225
    %p227 = scmp.ne.s32.totalorder %s216, %s219
    %p228 = scmp.eq.s32.totalorder %s38, 1
    %p229 = por %p227, %p228
    %p230 = scmp.ne.s32.totalorder %s219, %s220
    %p231 = scmp.eq.s32.totalorder %s38, 0
    %p232 = por %p230, %p231
    %p233 = scmp.ne.s32.totalorder %s219, %s220
    %p234 = scmp.eq.s32.totalorder %s39, 1
    %p235 = por %p233, %p234
    %p237 = scmp.ne.s32.totalorder %s220, %s236
    %p238 = scmp.eq.s32.totalorder %s39, 0
    %p239 = por %p237, %p238
    %s240 = ssub.s32 %s33, %s40
    %p241 = scmp.eq.s32.totalorder %s240, 0
    %s243 = sadd.s32 %s242, 1
    %s244 = scalar_select %p241, %s242, %s243
    %p247 = pneg %p241
    %p248 = scmp.eq.s32.totalorder %s33, 1
    %p249 = por %p247, %p248
    %p250 = scmp.ne.s32.totalorder %s242, %s245
    %p251 = scmp.eq.s32.totalorder %s33, 0
    %p252 = por %p250, %p251
    %p253 = scmp.ne.s32.totalorder %s242, %s245
    %p254 = scmp.eq.s32.totalorder %s38, 1
    %p255 = por %p253, %p254
    %p256 = scmp.ne.s32.totalorder %s245, %s246
    %p257 = scmp.eq.s32.totalorder %s38, 0
    %p258 = por %p256, %p257
    %p259 = scmp.ne.s32.totalorder %s245, %s246
    %p260 = scmp.eq.s32.totalorder %s39, 1
    %p261 = por %p259, %p260
    %p263 = scmp.ne.s32.totalorder %s246, %s262
    %p264 = scmp.eq.s32.totalorder %s39, 0
    %p265 = por %p263, %p264
    %s266 = ssub.s32 %s33, %s40
    %p267 = scmp.eq.s32.totalorder %s266, 0
    %s269 = sadd.s32 %s268, 1
    %s270 = scalar_select %p267, %s268, %s269
    %p273 = pneg %p267
    %p274 = scmp.eq.s32.totalorder %s33, 1
    %p275 = por %p273, %p274
    %p276 = scmp.ne.s32.totalorder %s268, %s271
    %p277 = scmp.eq.s32.totalorder %s33, 0
    %p278 = por %p276, %p277
    %p279 = scmp.ne.s32.totalorder %s268, %s271
    %p280 = scmp.eq.s32.totalorder %s38, 1
    %p281 = por %p279, %p280
    %p282 = scmp.ne.s32.totalorder %s271, %s272
    %p283 = scmp.eq.s32.totalorder %s38, 0
    %p284 = por %p282, %p283
    %p285 = scmp.ne.s32.totalorder %s271, %s272
    %p286 = scmp.eq.s32.totalorder %s39, 1
    %p287 = por %p285, %p286
    %p289 = scmp.ne.s32.totalorder %s272, %s288
    %p290 = scmp.eq.s32.totalorder %s39, 0
    %p291 = por %p289, %p290
    %s292 = ssub.s32 %s33, %s40
    %p293 = scmp.eq.s32.totalorder %s292, 0
    %s295 = sadd.s32 %s294, 1
    %s296 = scalar_select %p293, %s294, %s295
    %p299 = pneg %p293
    %p300 = scmp.eq.s32.totalorder %s33, 1
    %p301 = por %p299, %p300
    %p302 = scmp.ne.s32.totalorder %s294, %s297
    %p303 = scmp.eq.s32.totalorder %s33, 0
    %p304 = por %p302, %p303
    %p305 = scmp.ne.s32.totalorder %s294, %s297
    %p306 = scmp.eq.s32.totalorder %s38, 1
    %p307 = por %p305, %p306
    %p308 = scmp.ne.s32.totalorder %s297, %s298
    %p309 = scmp.eq.s32.totalorder %s38, 0
    %p310 = por %p308, %p309
    %p311 = scmp.ne.s32.totalorder %s297, %s298
    %p312 = scmp.eq.s32.totalorder %s39, 1
    %p313 = por %p311, %p312
    %p315 = scmp.ne.s32.totalorder %s298, %s314
    %p316 = scmp.eq.s32.totalorder %s39, 0
    %p317 = por %p315, %p316
    %s318 = ssub.s32 %s33, %s40
    %p319 = scmp.eq.s32.totalorder %s318, 0
    %s321 = sadd.s32 %s320, 1
    %s322 = scalar_select %p319, %s320, %s321
    %p325 = pneg %p319
    %p326 = scmp.eq.s32.totalorder %s33, 1
    %p327 = por %p325, %p326
    %p328 = scmp.ne.s32.totalorder %s320, %s323
    %p329 = scmp.eq.s32.totalorder %s33, 0
    %p330 = por %p328, %p329
    %p331 = scmp.ne.s32.totalorder %s320, %s323
    %p332 = scmp.eq.s32.totalorder %s38, 1
    %p333 = por %p331, %p332
    %p334 = scmp.ne.s32.totalorder %s323, %s324
    %p335 = scmp.eq.s32.totalorder %s38, 0
    %p336 = por %p334, %p335
    %p337 = scmp.ne.s32.totalorder %s323, %s324
    %p338 = scmp.eq.s32.totalorder %s39, 1
    %p339 = por %p337, %p338
    %p341 = scmp.ne.s32.totalorder %s324, %s340
    %p342 = scmp.eq.s32.totalorder %s39, 0
    %p343 = por %p341, %p342
    %s344 = ssub.s32 %s33, %s40
    %p345 = scmp.eq.s32.totalorder %s344, 0
    %s347 = sadd.s32 %s346, 1
    %s348 = scalar_select %p345, %s346, %s347
    %p351 = pneg %p345
    %p352 = scmp.eq.s32.totalorder %s33, 1
    %p353 = por %p351, %p352
    %p354 = scmp.ne.s32.totalorder %s346, %s349
    %p355 = scmp.eq.s32.totalorder %s33, 0
    %p356 = por %p354, %p355
    %p357 = scmp.ne.s32.totalorder %s346, %s349
    %p358 = scmp.eq.s32.totalorder %s38, 1
    %p359 = por %p357, %p358
    %p360 = scmp.ne.s32.totalorder %s349, %s350
    %p361 = scmp.eq.s32.totalorder %s38, 0
    %p362 = por %p360, %p361
    %p363 = scmp.ne.s32.totalorder %s349, %s350
    %p364 = scmp.eq.s32.totalorder %s39, 1
    %p365 = por %p363, %p364
    %p367 = scmp.ne.s32.totalorder %s350, %s366
    %p368 = scmp.eq.s32.totalorder %s39, 0
    %p369 = por %p367, %p368
    %s370 = ssub.s32 %s33, %s40
    %p371 = scmp.eq.s32.totalorder %s370, 0
    %s373 = sadd.s32 %s372, 1
    %s374 = scalar_select %p371, %s372, %s373
    %p377 = pneg %p371
    %p378 = scmp.eq.s32.totalorder %s33, 1
    %p379 = por %p377, %p378
    %p380 = scmp.ne.s32.totalorder %s372, %s375
    %p381 = scmp.eq.s32.totalorder %s33, 0
    %p382 = por %p380, %p381
    %p383 = scmp.ne.s32.totalorder %s372, %s375
    %p384 = scmp.eq.s32.totalorder %s38, 1
    %p385 = por %p383, %p384
    %p386 = scmp.ne.s32.totalorder %s375, %s376
    %p387 = scmp.eq.s32.totalorder %s38, 0
    %p388 = por %p386, %p387
    %p389 = scmp.ne.s32.totalorder %s375, %s376
    %p390 = scmp.eq.s32.totalorder %s39, 1
    %p391 = por %p389, %p390
    %p393 = scmp.ne.s32.totalorder %s376, %s392
    %p394 = scmp.eq.s32.totalorder %s39, 0
    %p395 = por %p393, %p394
    %s396 = ssub.s32 %s33, %s40
    %p397 = scmp.eq.s32.totalorder %s396, 0
    %s399 = sadd.s32 %s398, 1
    %s400 = scalar_select %p397, %s398, %s399
    %p403 = pneg %p397
    %p404 = scmp.eq.s32.totalorder %s33, 1
    %p405 = por %p403, %p404
    %p406 = scmp.ne.s32.totalorder %s398, %s401
    %p407 = scmp.eq.s32.totalorder %s33, 0
    %p408 = por %p406, %p407
    %p409 = scmp.ne.s32.totalorder %s398, %s401
    %p410 = scmp.eq.s32.totalorder %s38, 1
    %p411 = por %p409, %p410
    %p412 = scmp.ne.s32.totalorder %s401, %s402
    %p413 = scmp.eq.s32.totalorder %s38, 0
    %p414 = por %p412, %p413
    %p415 = scmp.ne.s32.totalorder %s401, %s402
    %p416 = scmp.eq.s32.totalorder %s39, 1
    %p417 = por %p415, %p416
    %p419 = scmp.ne.s32.totalorder %s402, %s418
    %p420 = scmp.eq.s32.totalorder %s39, 0
    %p421 = por %p419, %p420
    %s422 = ssub.s32 %s33, %s40
    %p423 = scmp.eq.s32.totalorder %s422, 0
    %s425 = sadd.s32 %s424, 1
    %s426 = scalar_select %p423, %s424, %s425
    %p429 = pneg %p423
    %p430 = scmp.eq.s32.totalorder %s33, 1
    %p431 = por %p429, %p430
    %p432 = scmp.ne.s32.totalorder %s424, %s427
    %p433 = scmp.eq.s32.totalorder %s33, 0
    %p434 = por %p432, %p433
    %p435 = scmp.ne.s32.totalorder %s424, %s427
    %p436 = scmp.eq.s32.totalorder %s38, 1
    %p437 = por %p435, %p436
    %p438 = scmp.ne.s32.totalorder %s427, %s428
    %p439 = scmp.eq.s32.totalorder %s38, 0
    %p440 = por %p438, %p439
    %p441 = scmp.ne.s32.totalorder %s427, %s428
    %p442 = scmp.eq.s32.totalorder %s39, 1
    %p443 = por %p441, %p442
    %p445 = scmp.ne.s32.totalorder %s428, %s444
    %p446 = scmp.eq.s32.totalorder %s39, 0
    %p447 = por %p445, %p446
    %s448 = ssub.s32 %s33, %s40
    %p449 = scmp.eq.s32.totalorder %s448, 0
    %s451 = sadd.s32 %s450, 1
    %s452 = scalar_select %p449, %s450, %s451
    %p455 = pneg %p449
    %p456 = scmp.eq.s32.totalorder %s33, 1
    %p457 = por %p455, %p456
    %p458 = scmp.ne.s32.totalorder %s450, %s453
    %p459 = scmp.eq.s32.totalorder %s33, 0
    %p460 = por %p458, %p459
    %p461 = scmp.ne.s32.totalorder %s450, %s453
    %p462 = scmp.eq.s32.totalorder %s38, 1
    %p463 = por %p461, %p462
    %p464 = scmp.ne.s32.totalorder %s453, %s454
    %p465 = scmp.eq.s32.totalorder %s38, 0
    %p466 = por %p464, %p465
    %p467 = scmp.ne.s32.totalorder %s453, %s454
    %p468 = scmp.eq.s32.totalorder %s39, 1
    %p469 = por %p467, %p468
    %p471 = scmp.ne.s32.totalorder %s454, %s470
    %p472 = scmp.eq.s32.totalorder %s39, 0
    %p473 = por %p471, %p472
    %s474 = ssub.s32 %s33, %s40
    %p475 = scmp.eq.s32.totalorder %s474, 0
    %s477 = sadd.s32 %s476, 1
    %s478 = scalar_select %p475, %s476, %s477
    %p481 = pneg %p475
    %p482 = scmp.eq.s32.totalorder %s33, 1
    %p483 = por %p481, %p482
    %p484 = scmp.ne.s32.totalorder %s476, %s479
    %p485 = scmp.eq.s32.totalorder %s33, 0
    %p486 = por %p484, %p485
    %p487 = scmp.ne.s32.totalorder %s476, %s479
    %p488 = scmp.eq.s32.totalorder %s38, 1
    %p489 = por %p487, %p488
    %p490 = scmp.ne.s32.totalorder %s479, %s480
    %p491 = scmp.eq.s32.totalorder %s38, 0
    %p492 = por %p490, %p491
    %p493 = scmp.ne.s32.totalorder %s479, %s480
    %p494 = scmp.eq.s32.totalorder %s39, 1
    %p495 = por %p493, %p494
    %p497 = scmp.ne.s32.totalorder %s480, %s496
    %p498 = scmp.eq.s32.totalorder %s39, 0
    %p499 = por %p497, %p498
    %s500 = ssub.s32 %s33, %s40
    %p501 = scmp.eq.s32.totalorder %s500, 0
    %s503 = sadd.s32 %s502, 1
    %s504 = scalar_select %p501, %s502, %s503
    %p507 = pneg %p501
    %p508 = scmp.eq.s32.totalorder %s33, 1
    %p509 = por %p507, %p508
    %p510 = scmp.ne.s32.totalorder %s502, %s505
    %p511 = scmp.eq.s32.totalorder %s33, 0
    %p512 = por %p510, %p511
    %p513 = scmp.ne.s32.totalorder %s502, %s505
    %p514 = scmp.eq.s32.totalorder %s38, 1
    %p515 = por %p513, %p514
    %p516 = scmp.ne.s32.totalorder %s505, %s506
    %p517 = scmp.eq.s32.totalorder %s38, 0
    %p518 = por %p516, %p517
    %p519 = scmp.ne.s32.totalorder %s505, %s506
    %p520 = scmp.eq.s32.totalorder %s39, 1
    %p521 = por %p519, %p520
    %p523 = scmp.ne.s32.totalorder %s506, %s522
    %p524 = scmp.eq.s32.totalorder %s39, 0
    %p525 = por %p523, %p524
    %s526 = ssub.s32 %s33, %s40
    %p527 = scmp.eq.s32.totalorder %s526, 0
    %s529 = sadd.s32 %s528, 1
    %s530 = scalar_select %p527, %s528, %s529
    %p533 = pneg %p527
    %p534 = scmp.eq.s32.totalorder %s33, 1
    %p535 = por %p533, %p534
    %p536 = scmp.ne.s32.totalorder %s528, %s531
    %p537 = scmp.eq.s32.totalorder %s33, 0
    %p538 = por %p536, %p537
    %p539 = scmp.ne.s32.totalorder %s528, %s531
    %p540 = scmp.eq.s32.totalorder %s38, 1
    %p541 = por %p539, %p540
    %p542 = scmp.ne.s32.totalorder %s531, %s532
    %p543 = scmp.eq.s32.totalorder %s38, 0
    %p544 = por %p542, %p543
    %p545 = scmp.ne.s32.totalorder %s531, %s532
    %p546 = scmp.eq.s32.totalorder %s39, 1
    %p547 = por %p545, %p546
    %p549 = scmp.ne.s32.totalorder %s532, %s548
    %p550 = scmp.eq.s32.totalorder %s39, 0
    %p551 = por %p549, %p550
    %s552 = ssub.s32 %s33, %s40
    %p553 = scmp.eq.s32.totalorder %s552, 0
    %s555 = sadd.s32 %s554, 1
    %s556 = scalar_select %p553, %s554, %s555
    %p559 = pneg %p553
    %p560 = scmp.eq.s32.totalorder %s33, 1
    %p561 = por %p559, %p560
    %p562 = scmp.ne.s32.totalorder %s554, %s557
    %p563 = scmp.eq.s32.totalorder %s33, 0
    %p564 = por %p562, %p563
    %p565 = scmp.ne.s32.totalorder %s554, %s557
    %p566 = scmp.eq.s32.totalorder %s38, 1
    %p567 = por %p565, %p566
    %p568 = scmp.ne.s32.totalorder %s557, %s558
    %p569 = scmp.eq.s32.totalorder %s38, 0
    %p570 = por %p568, %p569
    %p571 = scmp.ne.s32.totalorder %s557, %s558
    %p572 = scmp.eq.s32.totalorder %s39, 1
    %p573 = por %p571, %p572
    %p575 = scmp.ne.s32.totalorder %s558, %s574
    %p576 = scmp.eq.s32.totalorder %s39, 0
    %p577 = por %p575, %p576
    %s578 = ssub.s32 %s33, %s40
    %p579 = scmp.eq.s32.totalorder %s578, 0
    %s581 = sadd.s32 %s580, 1
    %s582 = scalar_select %p579, %s580, %s581
    %p585 = pneg %p579
    %p586 = scmp.eq.s32.totalorder %s33, 1
    %p587 = por %p585, %p586
    %p588 = scmp.ne.s32.totalorder %s580, %s583
    %p589 = scmp.eq.s32.totalorder %s33, 0
    %p590 = por %p588, %p589
    %p591 = scmp.ne.s32.totalorder %s580, %s583
    %p592 = scmp.eq.s32.totalorder %s38, 1
    %p593 = por %p591, %p592
    %p594 = scmp.ne.s32.totalorder %s583, %s584
    %p595 = scmp.eq.s32.totalorder %s38, 0
    %p596 = por %p594, %p595
    %p597 = scmp.ne.s32.totalorder %s583, %s584
    %p598 = scmp.eq.s32.totalorder %s39, 1
    %p599 = por %p597, %p598
    %p601 = scmp.ne.s32.totalorder %s584, %s600
    %p602 = scmp.eq.s32.totalorder %s39, 0
    %p603 = por %p601, %p602
    %s605 = sadd.s32 %s604, 1
    %p608 = scmp.eq.s32.totalorder %s33, 1
    %p609 = scmp.ne.s32.totalorder %s604, %s606
    %p610 = scmp.eq.s32.totalorder %s33, 0
    %p611 = por %p609, %p610
    %p612 = scmp.ne.s32.totalorder %s604, %s606
    %p613 = scmp.eq.s32.totalorder %s38, 1
    %p614 = por %p612, %p613
    %p615 = scmp.ne.s32.totalorder %s606, %s607
    %p616 = scmp.eq.s32.totalorder %s38, 0
    %p617 = por %p615, %p616
    %p618 = scmp.ne.s32.totalorder %s606, %s607
    %p619 = scmp.eq.s32.totalorder %s39, 1
    %p620 = por %p618, %p619
    %p622 = scmp.ne.s32.totalorder %s607, %s621
    %p623 = scmp.eq.s32.totalorder %s39, 0
    %p624 = por %p622, %p623
    %s626 = sadd.s32 %s625, 1
    %p629 = scmp.eq.s32.totalorder %s33, 1
    %p630 = scmp.ne.s32.totalorder %s625, %s627
    %p631 = scmp.eq.s32.totalorder %s33, 0
    %p632 = por %p630, %p631
    %p633 = scmp.ne.s32.totalorder %s625, %s627
    %p634 = scmp.eq.s32.totalorder %s38, 1
    %p635 = por %p633, %p634
    %p636 = scmp.ne.s32.totalorder %s627, %s628
    %p637 = scmp.eq.s32.totalorder %s38, 0
    %p638 = por %p636, %p637
    %p639 = scmp.ne.s32.totalorder %s627, %s628
    %p640 = scmp.eq.s32.totalorder %s39, 1
    %p641 = por %p639, %p640
    %p643 = scmp.ne.s32.totalorder %s628, %s642
    %p644 = scmp.eq.s32.totalorder %s39, 0
    %p645 = por %p643, %p644
    %s647 = sadd.s32 %s646, 1
    %p650 = scmp.eq.s32.totalorder %s33, 1
    %p651 = scmp.ne.s32.totalorder %s646, %s648
    %p652 = scmp.eq.s32.totalorder %s33, 0
    %p653 = por %p651, %p652
    %p654 = scmp.ne.s32.totalorder %s646, %s648
    %p655 = scmp.eq.s32.totalorder %s38, 1
    %p656 = por %p654, %p655
    %p657 = scmp.ne.s32.totalorder %s648, %s649
    %p658 = scmp.eq.s32.totalorder %s38, 0
    %p659 = por %p657, %p658
    %p660 = scmp.ne.s32.totalorder %s648, %s649
    %p661 = scmp.eq.s32.totalorder %s39, 1
    %p662 = por %p660, %p661
    %p664 = scmp.ne.s32.totalorder %s649, %s663
    %p665 = scmp.eq.s32.totalorder %s39, 0
    %p666 = por %p664, %p665
    %p667 = scmp.le.s32.totalorder 1, %s33
    %p668 = scmp.lt.s32.totalorder %s33, 3
    %p669 = pnand %p667, %p668
    %p670 = pneg %p669
    // Predicated region
    $region9: #{tft_forward.1} parent=5 // pred_check
      _
    $region10: #{tft_forward.1} parent=5 // pred_check_branch
      %672 = sbr.rel (%p669) target = $region12
    $region11: #{tft_forward.1} parent=5 // pred_region
      %s673 = ssub.s32 %s33, 1
      // Predicated region
      $region13: #{tft_forward.1} parent=11 // pred_check
        %p674 = pneg %p54
      $region14: #{tft_forward.1} parent=11 // pred_check_branch
        %676 = sbr.rel (%p674) target = $region16
      $region15: #{tft_forward.1} parent=11 // pred_region
        _
      $region16: #{tft_forward.1} parent=11 // pred_fallthru
        _
      // Predicated region
      $region17: #{tft_forward.1} parent=11 // pred_check
        %p677 = pneg %p75
      $region18: #{tft_forward.1} parent=11 // pred_check_branch
        %679 = sbr.rel (%p677) target = $region20
      $region19: #{tft_forward.1} parent=11 // pred_region
        _
      $region20: #{tft_forward.1} parent=11 // pred_fallthru
        _
      // Predicated region
      $region21: #{tft_forward.1} parent=11 // pred_check
        %p680 = pneg %p96
      $region22: #{tft_forward.1} parent=11 // pred_check_branch
        %682 = sbr.rel (%p680) target = $region24
      $region23: #{tft_forward.1} parent=11 // pred_region
        _
      $region24: #{tft_forward.1} parent=11 // pred_fallthru
        _
      // Predicated region
      $region25: #{tft_forward.1} parent=11 // pred_check
        %p683 = pneg %p117
      $region26: #{tft_forward.1} parent=11 // pred_check_branch
        %685 = sbr.rel (%p683) target = $region28
      $region27: #{tft_forward.1} parent=11 // pred_region
        _
      $region28: #{tft_forward.1} parent=11 // pred_fallthru
        _
      // Predicated region
      $region29: #{tft_forward.1} parent=11 // pred_check
        %p686 = pneg %p138
      $region30: #{tft_forward.1} parent=11 // pred_check_branch
        %688 = sbr.rel (%p686) target = $region32
      $region31: #{tft_forward.1} parent=11 // pred_region
        _
      $region32: #{tft_forward.1} parent=11 // pred_fallthru
        _
      // Predicated region
      $region33: #{tft_forward.1} parent=11 // pred_check
        %p689 = pneg %p159
      $region34: #{tft_forward.1} parent=11 // pred_check_branch
        %691 = sbr.rel (%p689) target = $region36
      $region35: #{tft_forward.1} parent=11 // pred_region
        _
      $region36: #{tft_forward.1} parent=11 // pred_fallthru
        _
      // Predicated region
      $region37: #{tft_forward.1} parent=11 // pred_check
        %p692 = pneg %p180
      $region38: #{tft_forward.1} parent=11 // pred_check_branch
        %694 = sbr.rel (%p692) target = $region40
      $region39: #{tft_forward.1} parent=11 // pred_region
        _
      $region40: #{tft_forward.1} parent=11 // pred_fallthru
        _
      // Predicated region
      $region41: #{tft_forward.1} parent=11 // pred_check
        %p695 = pneg %p617
      $region42: #{tft_forward.1} parent=11 // pred_check_branch
        %697 = sbr.rel (%p695) target = $region44
      $region43: #{tft_forward.1} parent=11 // pred_region
        _
      $region44: #{tft_forward.1} parent=11 // pred_fallthru
        _
      // Predicated region
      $region45: #{tft_forward.1} parent=11 // pred_check
        %p698 = pneg %p638
      $region46: #{tft_forward.1} parent=11 // pred_check_branch
        %700 = sbr.rel (%p698) target = $region48
      $region47: #{tft_forward.1} parent=11 // pred_region
        _
      $region48: #{tft_forward.1} parent=11 // pred_fallthru
        _
    $region12: #{tft_forward.1} parent=5 // pred_fallthru
      _
    %p701 = scmp.lt.s32.totalorder %s33, 2
    // Predicated region
    $region49: #{tft_forward.1} parent=5 // pred_check
      %p702 = pneg %p701
    $region50: #{tft_forward.1} parent=5 // pred_check_branch
      %704 = sbr.rel (%p702) target = $region52
    $region51: #{tft_forward.1} parent=5 // pred_region
      // Predicated region
      $region53: #{tft_forward.1} parent=51 // pred_check
        %p705 = pneg %p200
      $region54: #{tft_forward.1} parent=51 // pred_check_branch
        %707 = sbr.rel (%p705) target = $region56
      $region55: #{tft_forward.1} parent=51 // pred_region
        %s708 = smul.u32 4, %s33
        %p709 = scmp.lt.s32.totalorder %s708, 7
        %s710 = scalar_select %p709, %s708, 7
        %s711 = smul.addr %s710, 4
        %s712 = smul.addr %s711, 4
        %s713 = scalar_lea.vmem %s7, %s712
        %s714 = smul.u32 4, %s33
      $region56: #{tft_forward.1} parent=51 // pred_fallthru
        _
      // Predicated region
      $region57: #{tft_forward.1} parent=51 // pred_check
        %p715 = pneg %p226
      $region58: #{tft_forward.1} parent=51 // pred_check_branch
        %717 = sbr.rel (%p715) target = $region60
      $region59: #{tft_forward.1} parent=51 // pred_region
        %s718 = smul.u32 4, %s33
        %p719 = scmp.lt.s32.totalorder %s718, 7
        %s720 = scalar_select %p719, %s718, 7
        %s721 = scalar_lea.vmem %s8, %s720
        %s722 = smul.u32 4, %s33
      $region60: #{tft_forward.1} parent=51 // pred_fallthru
        _
      // Predicated region
      $region61: #{tft_forward.1} parent=51 // pred_check
        %p723 = pneg %p252
      $region62: #{tft_forward.1} parent=51 // pred_check_branch
        %725 = sbr.rel (%p723) target = $region64
      $region63: #{tft_forward.1} parent=51 // pred_region
        %s726 = smul.u32 4, %s33
        %p727 = scmp.lt.s32.totalorder %s726, 7
        %s728 = scalar_select %p727, %s726, 7
        %s729 = smul.addr %s728, 4
        %s730 = smul.addr %s729, 4
        %s731 = scalar_lea.vmem %s9, %s730
        %s732 = smul.u32 4, %s33
      $region64: #{tft_forward.1} parent=51 // pred_fallthru
        _
      // Predicated region
      $region65: #{tft_forward.1} parent=51 // pred_check
        %p733 = pneg %p278
      $region66: #{tft_forward.1} parent=51 // pred_check_branch
        %735 = sbr.rel (%p733) target = $region68
      $region67: #{tft_forward.1} parent=51 // pred_region
        %s736 = smul.u32 4, %s33
        %p737 = scmp.lt.s32.totalorder %s736, 7
        %s738 = scalar_select %p737, %s736, 7
        %s739 = scalar_lea.vmem %s10, %s738
        %s740 = smul.u32 4, %s33
      $region68: #{tft_forward.1} parent=51 // pred_fallthru
        _
      // Predicated region
      $region69: #{tft_forward.1} parent=51 // pred_check
        %p741 = pneg %p304
      $region70: #{tft_forward.1} parent=51 // pred_check_branch
        %743 = sbr.rel (%p741) target = $region72
      $region71: #{tft_forward.1} parent=51 // pred_region
        %s744 = smul.u32 4, %s33
        %p745 = scmp.lt.s32.totalorder %s744, 7
        %s746 = scalar_select %p745, %s744, 7
        %s747 = smul.addr %s746, 4
        %s748 = smul.addr %s747, 4
        %s749 = scalar_lea.vmem %s11, %s748
        %s750 = smul.u32 4, %s33
      $region72: #{tft_forward.1} parent=51 // pred_fallthru
        _
      // Predicated region
      $region73: #{tft_forward.1} parent=51 // pred_check
        %p751 = pneg %p330
      $region74: #{tft_forward.1} parent=51 // pred_check_branch
        %753 = sbr.rel (%p751) target = $region76
      $region75: #{tft_forward.1} parent=51 // pred_region
        %s754 = smul.u32 4, %s33
        %p755 = scmp.lt.s32.totalorder %s754, 7
        %s756 = scalar_select %p755, %s754, 7
        %s757 = scalar_lea.vmem %s12, %s756
        %s758 = smul.u32 4, %s33
      $region76: #{tft_forward.1} parent=51 // pred_fallthru
        _
      // Predicated region
      $region77: #{tft_forward.1} parent=51 // pred_check
        %p759 = pneg %p356
      $region78: #{tft_forward.1} parent=51 // pred_check_branch
        %761 = sbr.rel (%p759) target = $region80
      $region79: #{tft_forward.1} parent=51 // pred_region
        %s762 = smul.u32 4, %s33
        %p763 = scmp.lt.s32.totalorder %s762, 7
        %s764 = scalar_select %p763, %s762, 7
        %s765 = smul.addr %s764, 4
        %s766 = scalar_lea.vmem %s13, %s765
        %s767 = smul.u32 4, %s33
      $region80: #{tft_forward.1} parent=51 // pred_fallthru
        _
      // Predicated region
      $region81: #{tft_forward.1} parent=51 // pred_check
        %p768 = pneg %p382
      $region82: #{tft_forward.1} parent=51 // pred_check_branch
        %770 = sbr.rel (%p768) target = $region84
      $region83: #{tft_forward.1} parent=51 // pred_region
        %p771 = scmp.lt.s32.totalorder %s33, 1
        %s772 = scalar_select %p771, %s33, 1
        %s773 = scalar_lea.vmem %s14, %s772
      $region84: #{tft_forward.1} parent=51 // pred_fallthru
        _
      // Predicated region
      $region85: #{tft_forward.1} parent=51 // pred_check
        %p774 = pneg %p408
      $region86: #{tft_forward.1} parent=51 // pred_check_branch
        %776 = sbr.rel (%p774) target = $region88
      $region87: #{tft_forward.1} parent=51 // pred_region
        %p777 = scmp.lt.s32.totalorder %s33, 1
        %s778 = scalar_select %p777, %s33, 1
        %s779 = smul.addr %s778, 64
        %s780 = smul.addr %s779, 4
        %s781 = scalar_lea.vmem %s15, %s780
      $region88: #{tft_forward.1} parent=51 // pred_fallthru
        _
      // Predicated region
      $region89: #{tft_forward.1} parent=51 // pred_check
        %p782 = pneg %p434
      $region90: #{tft_forward.1} parent=51 // pred_check_branch
        %784 = sbr.rel (%p782) target = $region92
      $region91: #{tft_forward.1} parent=51 // pred_region
        %p785 = scmp.lt.s32.totalorder %s33, 1
        %s786 = scalar_select %p785, %s33, 1
        %s787 = smul.addr %s786, 16
        %s788 = scalar_lea.vmem %s16, %s787
      $region92: #{tft_forward.1} parent=51 // pred_fallthru
        _
      // Predicated region
      $region93: #{tft_forward.1} parent=51 // pred_check
        %p789 = pneg %p460
      $region94: #{tft_forward.1} parent=51 // pred_check_branch
        %791 = sbr.rel (%p789) target = $region96
      $region95: #{tft_forward.1} parent=51 // pred_region
        %p792 = scmp.lt.s32.totalorder %s33, 1
        %s793 = scalar_select %p792, %s33, 1
        %s794 = smul.addr %s793, 256
        %s795 = smul.addr %s794, 4
        %s796 = scalar_lea.vmem %s17, %s795
      $region96: #{tft_forward.1} parent=51 // pred_fallthru
        _
      // Predicated region
      $region97: #{tft_forward.1} parent=51 // pred_check
        %p797 = pneg %p486
      $region98: #{tft_forward.1} parent=51 // pred_check_branch
        %799 = sbr.rel (%p797) target = $region100
      $region99: #{tft_forward.1} parent=51 // pred_region
        %p800 = scmp.lt.s32.totalorder %s33, 1
        %s801 = scalar_select %p800, %s33, 1
        %s802 = scalar_lea.vmem %s18, %s801
      $region100: #{tft_forward.1} parent=51 // pred_fallthru
        _
      // Predicated region
      $region101: #{tft_forward.1} parent=51 // pred_check
        %p803 = pneg %p512
      $region102: #{tft_forward.1} parent=51 // pred_check_branch
        %805 = sbr.rel (%p803) target = $region104
      $region103: #{tft_forward.1} parent=51 // pred_region
        %p806 = scmp.lt.s32.totalorder %s33, 1
        %s807 = scalar_select %p806, %s33, 1
        %s808 = scalar_lea.vmem %s19, %s807
      $region104: #{tft_forward.1} parent=51 // pred_fallthru
        _
      // Predicated region
      $region105: #{tft_forward.1} parent=51 // pred_check
        %p809 = pneg %p538
      $region106: #{tft_forward.1} parent=51 // pred_check_branch
        %811 = sbr.rel (%p809) target = $region108
      $region107: #{tft_forward.1} parent=51 // pred_region
        %p812 = scmp.lt.s32.totalorder %s33, 1
        %s813 = scalar_select %p812, %s33, 1
        %s814 = scalar_lea.vmem %s20, %s813
      $region108: #{tft_forward.1} parent=51 // pred_fallthru
        _
      // Predicated region
      $region109: #{tft_forward.1} parent=51 // pred_check
        %p815 = pneg %p564
      $region110: #{tft_forward.1} parent=51 // pred_check_branch
        %817 = sbr.rel (%p815) target = $region112
      $region111: #{tft_forward.1} parent=51 // pred_region
        %p818 = scmp.lt.s32.totalorder %s33, 1
        %s819 = scalar_select %p818, %s33, 1
        %s820 = scalar_lea.vmem %s21, %s819
      $region112: #{tft_forward.1} parent=51 // pred_fallthru
        _
      // Predicated region
      $region113: #{tft_forward.1} parent=51 // pred_check
        %p821 = pneg %p590
      $region114: #{tft_forward.1} parent=51 // pred_check_branch
        %823 = sbr.rel (%p821) target = $region116
      $region115: #{tft_forward.1} parent=51 // pred_region
        %p824 = scmp.lt.s32.totalorder %s33, 1
        %s825 = scalar_select %p824, %s33, 1
        %s826 = scalar_lea.vmem %s22, %s825
      $region116: #{tft_forward.1} parent=51 // pred_fallthru
        _
    $region52: #{tft_forward.1} parent=5 // pred_fallthru
      _
    %p827 = scmp.le.s32.totalorder 1, %s33
    %p828 = scmp.lt.s32.totalorder %s33, 3
    %p829 = pnand %p827, %p828
    %p830 = pneg %p829
    // Predicated region
    $region117: #{tft_forward.1} parent=5 // pred_check
      _
    $region118: #{tft_forward.1} parent=5 // pred_check_branch
      %832 = sbr.rel (%p829) target = $region120
    $region119: #{tft_forward.1} parent=5 // pred_region
      %s833 = ssub.s32 %s33, 1
      %p834 = pneg %p54
      %p835 = pneg %p51
      %p836 = pneg %p75
      %p837 = pneg %p72
      %p838 = pneg %p96
      %p839 = pneg %p93
      %p840 = pneg %p117
      %p841 = pneg %p114
      %p842 = pneg %p138
      %p843 = pneg %p135
      %p844 = pneg %p159
      %p845 = pneg %p156
      %p846 = pneg %p180
      %p847 = pneg %p177
      %s848 = smul.u32 4, %s38
      %p849 = scmp.lt.s32.totalorder %s848, 7
      %s850 = scalar_select %p849, %s848, 7
      %s851 = smul.addr %s850, 4
      %s852 = smul.addr %s851, 4
      %s853 = scalar_lea.vmem %s7, %s852
      %p854 = pneg %p206
      %p855 = pneg %p203
      %s856 = smul.u32 4, %s38
      %p857 = scmp.lt.s32.totalorder %s856, 7
      %s858 = scalar_select %p857, %s856, 7
      %s859 = scalar_lea.vmem %s8, %s858
      %p860 = pneg %p232
      %p861 = pneg %p229
      %s862 = smul.u32 4, %s38
      %p863 = scmp.lt.s32.totalorder %s862, 7
      %s864 = scalar_select %p863, %s862, 7
      %s865 = smul.addr %s864, 4
      %s866 = smul.addr %s865, 4
      %s867 = scalar_lea.vmem %s9, %s866
      %p868 = pneg %p258
      %p869 = pneg %p255
      %s870 = smul.u32 4, %s38
      %p871 = scmp.lt.s32.totalorder %s870, 7
      %s872 = scalar_select %p871, %s870, 7
      %s873 = scalar_lea.vmem %s10, %s872
      %p874 = pneg %p284
      %p875 = pneg %p281
      %s876 = smul.u32 4, %s38
      %p877 = scmp.lt.s32.totalorder %s876, 7
      %s878 = scalar_select %p877, %s876, 7
      %s879 = smul.addr %s878, 4
      %s880 = smul.addr %s879, 4
      %s881 = scalar_lea.vmem %s11, %s880
      %p882 = pneg %p310
      %p883 = pneg %p307
      %s884 = smul.u32 4, %s38
      %p885 = scmp.lt.s32.totalorder %s884, 7
      %s886 = scalar_select %p885, %s884, 7
      %s887 = scalar_lea.vmem %s12, %s886
      %p888 = pneg %p336
      %p889 = pneg %p333
      %s890 = smul.u32 4, %s38
      %p891 = scmp.lt.s32.totalorder %s890, 7
      %s892 = scalar_select %p891, %s890, 7
      %s893 = smul.addr %s892, 4
      %s894 = scalar_lea.vmem %s13, %s893
      %p895 = pneg %p362
      %p896 = pneg %p359
      %p897 = scmp.lt.s32.totalorder %s38, 1
      %s898 = scalar_select %p897, %s38, 1
      %s899 = scalar_lea.vmem %s14, %s898
      %p900 = pneg %p388
      %p901 = pneg %p385
      %p902 = scmp.lt.s32.totalorder %s38, 1
      %s903 = scalar_select %p902, %s38, 1
      %s904 = smul.addr %s903, 64
      %s905 = smul.addr %s904, 4
      %s906 = scalar_lea.vmem %s15, %s905
      %p907 = pneg %p414
      %p908 = pneg %p411
      %p909 = scmp.lt.s32.totalorder %s38, 1
      %s910 = scalar_select %p909, %s38, 1
      %s911 = smul.addr %s910, 16
      %s912 = scalar_lea.vmem %s16, %s911
      %p913 = pneg %p440
      %p914 = pneg %p437
      %p915 = scmp.lt.s32.totalorder %s38, 1
      %s916 = scalar_select %p915, %s38, 1
      %s917 = smul.addr %s916, 256
      %s918 = smul.addr %s917, 4
      %s919 = scalar_lea.vmem %s17, %s918
      %p920 = pneg %p466
      %p921 = pneg %p463
      %p922 = scmp.lt.s32.totalorder %s38, 1
      %s923 = scalar_select %p922, %s38, 1
      %s924 = scalar_lea.vmem %s18, %s923
      %p925 = pneg %p492
      %p926 = pneg %p489
      %p927 = scmp.lt.s32.totalorder %s38, 1
      %s928 = scalar_select %p927, %s38, 1
      %s929 = scalar_lea.vmem %s19, %s928
      %p930 = pneg %p518
      %p931 = pneg %p515
      %p932 = scmp.lt.s32.totalorder %s38, 1
      %s933 = scalar_select %p932, %s38, 1
      %s934 = scalar_lea.vmem %s20, %s933
      %p935 = pneg %p544
      %p936 = pneg %p541
      %p937 = scmp.lt.s32.totalorder %s38, 1
      %s938 = scalar_select %p937, %s38, 1
      %s939 = scalar_lea.vmem %s21, %s938
      %p940 = pneg %p570
      %p941 = pneg %p567
      %p942 = scmp.lt.s32.totalorder %s38, 1
      %s943 = scalar_select %p942, %s38, 1
      %s944 = scalar_lea.vmem %s22, %s943
      %p945 = pneg %p596
      %p946 = pneg %p593
      %p947 = pneg %p617
      %p948 = pneg %p614
      %p949 = pneg %p638
      %p950 = pneg %p635
      %p951 = pneg %p659
      %p952 = pneg %p656
      %s953 = smul.u32 4, %s38
      %p954 = scmp.lt.s32.totalorder %s953, 7
      %s955 = scalar_select %p954, %s953, 7
      %s956 = smul.addr %s955, 4
      %s957 = smul.addr %s956, 4
      %s958 = scalar_lea.vmem %s7, %s957
      %s959 = smul.u32 4, %s38
      %s960 = smul.u32 4, %s38
      %p961 = scmp.lt.s32.totalorder %s960, 7
      %s962 = scalar_select %p961, %s960, 7
      %s963 = scalar_lea.vmem %s8, %s962
      %s964 = smul.u32 4, %s38
      %s965 = smul.u32 4, %s38
      %p966 = scmp.lt.s32.totalorder %s965, 7
      %s967 = scalar_select %p966, %s965, 7
      %s968 = smul.addr %s967, 4
      %s969 = smul.addr %s968, 4
      %s970 = scalar_lea.vmem %s9, %s969
      %s971 = smul.u32 4, %s38
      %s972 = smul.u32 4, %s38
      %p973 = scmp.lt.s32.totalorder %s972, 7
      %s974 = scalar_select %p973, %s972, 7
      %s975 = scalar_lea.vmem %s10, %s974
      %s976 = smul.u32 4, %s38
      %s977 = smul.u32 4, %s38
      %p978 = scmp.lt.s32.totalorder %s977, 7
      %s979 = scalar_select %p978, %s977, 7
      %s980 = smul.addr %s979, 4
      %s981 = smul.addr %s980, 4
      %s982 = scalar_lea.vmem %s11, %s981
      %s983 = smul.u32 4, %s38
      %s984 = smul.u32 4, %s38
      %p985 = scmp.lt.s32.totalorder %s984, 7
      %s986 = scalar_select %p985, %s984, 7
      %s987 = scalar_lea.vmem %s12, %s986
      %s988 = smul.u32 4, %s38
      %s989 = smul.u32 4, %s38
      %p990 = scmp.lt.s32.totalorder %s989, 7
      %s991 = scalar_select %p990, %s989, 7
      %s992 = smul.addr %s991, 4
      %s993 = scalar_lea.vmem %s13, %s992
      %s994 = smul.u32 4, %s38
      %p995 = scmp.lt.s32.totalorder %s38, 1
      %s996 = scalar_select %p995, %s38, 1
      %s997 = scalar_lea.vmem %s14, %s996
      %p998 = scmp.lt.s32.totalorder %s38, 1
      %s999 = scalar_select %p998, %s38, 1
      %s1000 = smul.addr %s999, 64
      %s1001 = smul.addr %s1000, 4
      %s1002 = scalar_lea.vmem %s15, %s1001
      %p1003 = scmp.lt.s32.totalorder %s38, 1
      %s1004 = scalar_select %p1003, %s38, 1
      %s1005 = smul.addr %s1004, 16
      %s1006 = scalar_lea.vmem %s16, %s1005
      %p1007 = scmp.lt.s32.totalorder %s38, 1
      %s1008 = scalar_select %p1007, %s38, 1
      %s1009 = smul.addr %s1008, 256
      %s1010 = smul.addr %s1009, 4
      %s1011 = scalar_lea.vmem %s17, %s1010
      %p1012 = scmp.lt.s32.totalorder %s38, 1
      %s1013 = scalar_select %p1012, %s38, 1
      %s1014 = scalar_lea.vmem %s18, %s1013
      %p1015 = scmp.lt.s32.totalorder %s38, 1
      %s1016 = scalar_select %p1015, %s38, 1
      %s1017 = scalar_lea.vmem %s19, %s1016
      %p1018 = scmp.lt.s32.totalorder %s38, 1
      %s1019 = scalar_select %p1018, %s38, 1
      %s1020 = scalar_lea.vmem %s20, %s1019
      %p1021 = scmp.lt.s32.totalorder %s38, 1
      %s1022 = scalar_select %p1021, %s38, 1
      %s1023 = scalar_lea.vmem %s21, %s1022
      %p1024 = scmp.lt.s32.totalorder %s38, 1
      %s1025 = scalar_select %p1024, %s38, 1
      %s1026 = scalar_lea.vmem %s22, %s1025
      %p1028 = scmp.eq.s32.totalorder %s38, 0
      // Predicated region
      $region121: #{tft_forward.1} parent=119 // pred_check
        %p1029 = pneg %p1028
      $region122: #{tft_forward.1} parent=119 // pred_check_branch
        %1031 = sbr.rel (%p1029) target = $region124
      $region123: #{tft_forward.1} parent=119 // pred_region
        %v1032 = vld [vmem:[%s0] sm:$0x3]
        %v1033 = vpack.c.bf16 %v1032, %v1032
        %v1034 = vld [vmem:[%s1] sm:$0xf]
        %v1035 = vld [vmem:[%s1 + $0x4] sm:$0xf]
        %v1036 = vld [vmem:[%s2] sm:$0x1]
        %v1038 = vlaneseq
        %v1039 = vshrl.u32 %v1038, 7
        %v1040 = vsub.s32 0, %v1039
        %v1041 = vrot.slane %v1036, %v1040
        %v1045 = vunpack.c.l.b16 %v1034
        %v1046 = vunpack.c.l.b16 %v1035
        %v1047 = vpack.c.b16 %v1046, %v1045
        %vm1049 = vcmask 130048
        %v1051 = vsel %vm1049, %v1033, 0
        %1053 = vmatprep.subr.bf16.mxu0 0
        %1054 = vmatpush1.bf16.msra.mxu0 0
        %1055 = vmatprep.subr.bf16.mxu0 0
        %1056 = vmatpush1.bf16.msra.mxu0 0
        %1057 = vmatprep.subr.bf16.mxu0 0
        %1058 = vmatpush1.bf16.msra.mxu0 0
        %1059 = vmatprep.subr.bf16.mxu0 0
        %1060 = vmatpush1.bf16.msra.mxu0 0
        %1061 = vmatprep.subr.bf16.mxu0 0
        %1062 = vmatpush1.bf16.msra.mxu0 0
        %1063 = vmatprep.subr.bf16.mxu0 0
        %1064 = vmatpush1.bf16.msra.mxu0 0
        %1065 = vmatprep.subr.bf16.mxu0 0
        %1066 = vmatpush1.bf16.msra.mxu0 0
        %1067 = vmatprep.subr.bf16.mxu0 0
        %1068 = vmatpush1.bf16.msra.mxu0 %v1047
        %1069 = vmatprep.subr.bf16.mxu0 0
        %1070 = vmatpush2.bf16.msra.mxu0 0
        %1071 = vmatprep.subr.bf16.mxu0 0
        %1072 = vmatpush2.bf16.msra.mxu0 0
        %1073 = vmatprep.subr.bf16.mxu0 0
        %1074 = vmatpush2.bf16.msra.mxu0 0
        %1075 = vmatprep.subr.bf16.mxu0 0
        %1076 = vmatpush2.bf16.msra.mxu0 0
        %1077 = vmatprep.subr.bf16.mxu0 0
        %1078 = vmatpush2.bf16.msra.mxu0 0
        %1079 = vmatprep.subr.bf16.mxu0 0
        %1080 = vmatpush2.bf16.msra.mxu0 0
        %1081 = vmatprep.subr.bf16.mxu0 0
        %1082 = vmatpush2.bf16.msra.mxu0 0
        %1083 = vmatprep.subr.bf16.mxu0 0
        %1084 = vmatpush2.bf16.msra.mxu0 0
        %1085 = vmatprep.mubr.bf16.mxu0 0
        %1086 = vmatmul.mubr.bf16.gmra.mxu0 %v1051
        %v1087 = vpop.f32.mrf.mxu0
        %v1088 = vadd.f32 %v1041, %v1087
        %v1089 = vpop.f32.mrf.mxu0
        %v1090 = vpop.f32.mrf.mxu0
        %v1091 = vpop.f32.mrf.mxu0
        %1092 = vdwg.mxu0
        %vm1093 = vcmp.gt.f32.partialorder %v1088, 0.0
        %v1094 = vmin.f32 %v1088, 0.0
        %v1095 = vmul.f32 %v1094, 1.442695
        %v1096 = vpow.pop %v1095
        %v1097 = vsub.f32 %v1096, 1.0
        %v1098 = vsel %vm1093, %v1088, %v1097
        %v1099 = vpack.c.bf16 %v1098, %v1098
        %v1100 = vld [vmem:[%s3] sm:$0xf]
        %v1101 = vld [vmem:[%s3 + $0x4] sm:$0xf]
        %v1102 = vld [vmem:[%s3 + $0x8] sm:$0xf]
        %v1103 = vld [vmem:[%s3 + $0xc] sm:$0xf]
        %v1104 = vld [vmem:[%s4] sm:$0x1]
        %v1106 = vlaneseq
        %v1107 = vshrl.u32 %v1106, 7
        %v1108 = vsub.s32 0, %v1107
        %v1109 = vrot.slane %v1104, %v1108
        %v1115 = vunpack.c.l.b16 %v1100
        %v1116 = vunpack.c.l.b16 %v1101
        %v1117 = vunpack.c.l.b16 %v1102
        %v1118 = vunpack.c.l.b16 %v1103
        %v1119 = vpack.c.b16 %v1116, %v1115
        %v1120 = vpack.c.b16 %v1118, %v1117
        %vm1123 = vcmask 261120
        %v1125 = vsel %vm1123, %v1099, 0
        %1127 = vmatprep.subr.bf16.mxu0 0
        %1128 = vmatpush1.bf16.msra.mxu0 0
        %1129 = vmatprep.subr.bf16.mxu0 0
        %1130 = vmatpush1.bf16.msra.mxu0 0
        %1131 = vmatprep.subr.bf16.mxu0 0
        %1132 = vmatpush1.bf16.msra.mxu0 0
        %1133 = vmatprep.subr.bf16.mxu0 0
        %1134 = vmatpush1.bf16.msra.mxu0 0
        %1135 = vmatprep.subr.bf16.mxu0 0
        %1136 = vmatpush1.bf16.msra.mxu0 0
        %1137 = vmatprep.subr.bf16.mxu0 0
        %1138 = vmatpush1.bf16.msra.mxu0 0
        %1139 = vmatprep.subr.bf16.mxu0 0
        %1140 = vmatpush1.bf16.msra.mxu0 %v1120
        %1141 = vmatprep.subr.bf16.mxu0 0
        %1142 = vmatpush1.bf16.msra.mxu0 %v1119
        %1143 = vmatprep.subr.bf16.mxu0 0
        %1144 = vmatpush2.bf16.msra.mxu0 0
        %1145 = vmatprep.subr.bf16.mxu0 0
        %1146 = vmatpush2.bf16.msra.mxu0 0
        %1147 = vmatprep.subr.bf16.mxu0 0
        %1148 = vmatpush2.bf16.msra.mxu0 0
        %1149 = vmatprep.subr.bf16.mxu0 0
        %1150 = vmatpush2.bf16.msra.mxu0 0
        %1151 = vmatprep.subr.bf16.mxu0 0
        %1152 = vmatpush2.bf16.msra.mxu0 0
        %1153 = vmatprep.subr.bf16.mxu0 0
        %1154 = vmatpush2.bf16.msra.mxu0 0
        %1155 = vmatprep.subr.bf16.mxu0 0
        %1156 = vmatpush2.bf16.msra.mxu0 0
        %1157 = vmatprep.subr.bf16.mxu0 0
        %1158 = vmatpush2.bf16.msra.mxu0 0
        %1159 = vmatprep.mubr.bf16.mxu0 0
        %1160 = vmatmul.mubr.bf16.gmra.mxu0 %v1125
        %v1161 = vpop.f32.mrf.mxu0
        %v1162 = vadd.f32 %v1109, %v1161
        %v1163 = vpop.f32.mrf.mxu0
        %v1164 = vpop.f32.mrf.mxu0
        %v1165 = vpop.f32.mrf.mxu0
        %1166 = vdwg.mxu0
        %v1167 = vpack.c.bf16 %v1162, %v1162
        %v1168 = vld [vmem:[%s5] sm:$0xf]
        %v1169 = vld [vmem:[%s5 + $0x4] sm:$0xf]
        %v1170 = vld [vmem:[%s5 + $0x8] sm:$0xf]
        %v1171 = vld [vmem:[%s5 + $0xc] sm:$0xf]
        %v1172 = vld [vmem:[%s6] sm:$0x1]
        %v1174 = vlaneseq
        %v1175 = vshrl.u32 %v1174, 7
        %v1176 = vsub.s32 0, %v1175
        %v1177 = vrot.slane %v1172, %v1176
        %v1183 = vunpack.c.l.b16 %v1168
        %v1184 = vunpack.c.l.b16 %v1169
        %v1185 = vunpack.c.l.b16 %v1170
        %v1186 = vunpack.c.l.b16 %v1171
        %v1187 = vpack.c.b16 %v1184, %v1183
        %v1188 = vpack.c.b16 %v1186, %v1185
        %v1192 = vsel %vm1123, %v1167, 0
        %1194 = vmatprep.subr.bf16.mxu0 0
        %1195 = vmatpush1.bf16.msra.mxu0 0
        %1196 = vmatprep.subr.bf16.mxu0 0
        %1197 = vmatpush1.bf16.msra.mxu0 0
        %1198 = vmatprep.subr.bf16.mxu0 0
        %1199 = vmatpush1.bf16.msra.mxu0 0
        %1200 = vmatprep.subr.bf16.mxu0 0
        %1201 = vmatpush1.bf16.msra.mxu0 0
        %1202 = vmatprep.subr.bf16.mxu0 0
        %1203 = vmatpush1.bf16.msra.mxu0 0
        %1204 = vmatprep.subr.bf16.mxu0 0
        %1205 = vmatpush1.bf16.msra.mxu0 0
        %1206 = vmatprep.subr.bf16.mxu0 0
        %1207 = vmatpush1.bf16.msra.mxu0 %v1188
        %1208 = vmatprep.subr.bf16.mxu0 0
        %1209 = vmatpush1.bf16.msra.mxu0 %v1187
        %1210 = vmatprep.subr.bf16.mxu0 0
        %1211 = vmatpush2.bf16.msra.mxu0 0
        %1212 = vmatprep.subr.bf16.mxu0 0
        %1213 = vmatpush2.bf16.msra.mxu0 0
        %1214 = vmatprep.subr.bf16.mxu0 0
        %1215 = vmatpush2.bf16.msra.mxu0 0
        %1216 = vmatprep.subr.bf16.mxu0 0
        %1217 = vmatpush2.bf16.msra.mxu0 0
        %1218 = vmatprep.subr.bf16.mxu0 0
        %1219 = vmatpush2.bf16.msra.mxu0 0
        %1220 = vmatprep.subr.bf16.mxu0 0
        %1221 = vmatpush2.bf16.msra.mxu0 0
        %1222 = vmatprep.subr.bf16.mxu0 0
        %1223 = vmatpush2.bf16.msra.mxu0 0
        %1224 = vmatprep.subr.bf16.mxu0 0
        %1225 = vmatpush2.bf16.msra.mxu0 0
        %1226 = vmatprep.mubr.bf16.mxu0 0
        %1227 = vmatmul.mubr.bf16.gmra.mxu0 %v1192
        %v1228 = vpop.f32.mrf.mxu0
        %v1229 = vadd.f32 %v1177, %v1228
        %v1230 = vpop.f32.mrf.mxu0
        %v1231 = vpop.f32.mrf.mxu0
        %v1232 = vpop.f32.mrf.mxu0
        %1233 = vdwg.mxu0
        %v1234 = vand.u32 2147483647, %v1229
        %v1235 = vsub.f32 0.0, %v1234
        %v1236 = vmul.f32 %v1235, 1.442695
        %v1237 = vpow.pop %v1236
        %v1238 = vadd.f32 %v1237, 1.0
        %v1239 = vrcp.pop %v1238
        %vm1240 = vcmp.ge.f32.partialorder %v1229, 0.0
        %v1241 = vmul.f32 %v1237, %v1239
        %v1242 = vsel %vm1240, %v1239, %v1241
        %v1243 = vmul.f32 %v1242, %v1162
        %v1244 = vsub.f32 1.0, %v1242
        %1246 = vrot.lane.b32.xlu0 %v1088, 96
        %v1247 = vpop.permute.xlu0 %1246
        %v1249 = vmul.f32 %v1244, %v1247
        %v1250 = vadd.f32 %v1243, %v1249
        %vm1251 = vcmask 254976
        %1252 = vst.msk [vmem:[#allocation2] sm:$0x3] %vm1251, %v1250
      $region124: #{tft_forward.1} parent=119 // pred_fallthru
        _
      %v1253 = vld [vmem:[#allocation2] sm:$0x3]
      %v1254 = vpack.c.bf16 %v1253, %v1253
      %v1255 = vld [vmem:[%s958] sm:$0xf]
      %v1256 = vld [vmem:[%s958 + $0x4] sm:$0xf]
      %v1257 = vld [vmem:[%s958 + $0x8] sm:$0xf]
      %v1258 = vld [vmem:[%s958 + $0xc] sm:$0xf]
      %v1259 = vld [vmem:[%s963] sm:$0x1]
      %v1261 = vlaneseq
      %v1262 = vshrl.u32 %v1261, 7
      %v1263 = vsub.s32 0, %v1262
      %v1264 = vrot.slane %v1259, %v1263
      %v1270 = vunpack.c.l.b16 %v1255
      %v1271 = vunpack.c.l.b16 %v1256
      %v1272 = vunpack.c.l.b16 %v1257
      %v1273 = vunpack.c.l.b16 %v1258
      %v1274 = vpack.c.b16 %v1271, %v1270
      %v1275 = vpack.c.b16 %v1273, %v1272
      %vm1278 = vcmask 261120
      %v1280 = vsel %vm1278, %v1254, 0
      %1282 = vmatprep.subr.bf16.mxu0 0
      %1283 = vmatpush1.bf16.msra.mxu0 0
      %1284 = vmatprep.subr.bf16.mxu0 0
      %1285 = vmatpush1.bf16.msra.mxu0 0
      %1286 = vmatprep.subr.bf16.mxu0 0
      %1287 = vmatpush1.bf16.msra.mxu0 0
      %1288 = vmatprep.subr.bf16.mxu0 0
      %1289 = vmatpush1.bf16.msra.mxu0 0
      %1290 = vmatprep.subr.bf16.mxu0 0
      %1291 = vmatpush1.bf16.msra.mxu0 0
      %1292 = vmatprep.subr.bf16.mxu0 0
      %1293 = vmatpush1.bf16.msra.mxu0 0
      %1294 = vmatprep.subr.bf16.mxu0 0
      %1295 = vmatpush1.bf16.msra.mxu0 %v1275
      %1296 = vmatprep.subr.bf16.mxu0 0
      %1297 = vmatpush1.bf16.msra.mxu0 %v1274
      %1298 = vmatprep.subr.bf16.mxu0 0
      %1299 = vmatpush2.bf16.msra.mxu0 0
      %1300 = vmatprep.subr.bf16.mxu0 0
      %1301 = vmatpush2.bf16.msra.mxu0 0
      %1302 = vmatprep.subr.bf16.mxu0 0
      %1303 = vmatpush2.bf16.msra.mxu0 0
      %1304 = vmatprep.subr.bf16.mxu0 0
      %1305 = vmatpush2.bf16.msra.mxu0 0
      %1306 = vmatprep.subr.bf16.mxu0 0
      %1307 = vmatpush2.bf16.msra.mxu0 0
      %1308 = vmatprep.subr.bf16.mxu0 0
      %1309 = vmatpush2.bf16.msra.mxu0 0
      %1310 = vmatprep.subr.bf16.mxu0 0
      %1311 = vmatpush2.bf16.msra.mxu0 0
      %1312 = vmatprep.subr.bf16.mxu0 0
      %1313 = vmatpush2.bf16.msra.mxu0 0
      %1314 = vmatprep.mubr.bf16.mxu0 0
      %1315 = vmatmul.mubr.bf16.gmra.mxu0 %v1280
      %v1316 = vpop.f32.mrf.mxu0
      %v1317 = vadd.f32 %v1264, %v1316
      %v1318 = vpop.f32.mrf.mxu0
      %v1319 = vpop.f32.mrf.mxu0
      %v1320 = vpop.f32.mrf.mxu0
      %1321 = vdwg.mxu0
      %v1322 = vld [vmem:[%s970] sm:$0xf]
      %v1323 = vld [vmem:[%s970 + $0x4] sm:$0xf]
      %v1324 = vld [vmem:[%s970 + $0x8] sm:$0xf]
      %v1325 = vld [vmem:[%s970 + $0xc] sm:$0xf]
      %v1326 = vld [vmem:[%s975] sm:$0x1]
      %v1328 = vlaneseq
      %v1329 = vshrl.u32 %v1328, 7
      %v1330 = vsub.s32 0, %v1329
      %v1331 = vrot.slane %v1326, %v1330
      %v1337 = vunpack.c.l.b16 %v1322
      %v1338 = vunpack.c.l.b16 %v1323
      %v1339 = vunpack.c.l.b16 %v1324
      %v1340 = vunpack.c.l.b16 %v1325
      %v1341 = vpack.c.b16 %v1338, %v1337
      %v1342 = vpack.c.b16 %v1340, %v1339
      %1345 = vmatprep.subr.bf16.mxu0 0
      %1346 = vmatpush1.bf16.msra.mxu0 0
      %1347 = vmatprep.subr.bf16.mxu0 0
      %1348 = vmatpush1.bf16.msra.mxu0 0
      %1349 = vmatprep.subr.bf16.mxu0 0
      %1350 = vmatpush1.bf16.msra.mxu0 0
      %1351 = vmatprep.subr.bf16.mxu0 0
      %1352 = vmatpush1.bf16.msra.mxu0 0
      %1353 = vmatprep.subr.bf16.mxu0 0
      %1354 = vmatpush1.bf16.msra.mxu0 0
      %1355 = vmatprep.subr.bf16.mxu0 0
      %1356 = vmatpush1.bf16.msra.mxu0 0
      %1357 = vmatprep.subr.bf16.mxu0 0
      %1358 = vmatpush1.bf16.msra.mxu0 %v1342
      %1359 = vmatprep.subr.bf16.mxu0 0
      %1360 = vmatpush1.bf16.msra.mxu0 %v1341
      %1361 = vmatprep.subr.bf16.mxu0 0
      %1362 = vmatpush2.bf16.msra.mxu0 0
      %1363 = vmatprep.subr.bf16.mxu0 0
      %1364 = vmatpush2.bf16.msra.mxu0 0
      %1365 = vmatprep.subr.bf16.mxu0 0
      %1366 = vmatpush2.bf16.msra.mxu0 0
      %1367 = vmatprep.subr.bf16.mxu0 0
      %1368 = vmatpush2.bf16.msra.mxu0 0
      %1369 = vmatprep.subr.bf16.mxu0 0
      %1370 = vmatpush2.bf16.msra.mxu0 0
      %1371 = vmatprep.subr.bf16.mxu0 0
      %1372 = vmatpush2.bf16.msra.mxu0 0
      %1373 = vmatprep.subr.bf16.mxu0 0
      %1374 = vmatpush2.bf16.msra.mxu0 0
      %1375 = vmatprep.subr.bf16.mxu0 0
      %1376 = vmatpush2.bf16.msra.mxu0 0
      %1377 = vmatprep.mubr.bf16.mxu0 0
      %1378 = vmatmul.mubr.bf16.gmra.mxu0 %v1280
      %v1379 = vpop.f32.mrf.mxu0
      %v1380 = vadd.f32 %v1331, %v1379
      %v1381 = vpop.f32.mrf.mxu0
      %v1382 = vpop.f32.mrf.mxu0
      %v1383 = vpop.f32.mrf.mxu0
      %1384 = vdwg.mxu0
      %v1385 = vld [vmem:[%s982] sm:$0xf]
      %v1386 = vld [vmem:[%s982 + $0x4] sm:$0xf]
      %v1387 = vld [vmem:[%s982 + $0x8] sm:$0xf]
      %v1388 = vld [vmem:[%s982 + $0xc] sm:$0xf]
      %v1389 = vld [vmem:[%s987] sm:$0x1]
      %v1391 = vlaneseq
      %v1392 = vshrl.u32 %v1391, 7
      %v1393 = vsub.s32 0, %v1392
      %v1394 = vrot.slane %v1389, %v1393
      %v1400 = vunpack.c.l.b16 %v1385
      %v1401 = vunpack.c.l.b16 %v1386
      %v1402 = vunpack.c.l.b16 %v1387
      %v1403 = vunpack.c.l.b16 %v1388
      %v1404 = vpack.c.b16 %v1401, %v1400
      %v1405 = vpack.c.b16 %v1403, %v1402
      %1408 = vmatprep.subr.bf16.mxu0 0
      %1409 = vmatpush1.bf16.msra.mxu0 0
      %1410 = vmatprep.subr.bf16.mxu0 0
      %1411 = vmatpush1.bf16.msra.mxu0 0
      %1412 = vmatprep.subr.bf16.mxu0 0
      %1413 = vmatpush1.bf16.msra.mxu0 0
      %1414 = vmatprep.subr.bf16.mxu0 0
      %1415 = vmatpush1.bf16.msra.mxu0 0
      %1416 = vmatprep.subr.bf16.mxu0 0
      %1417 = vmatpush1.bf16.msra.mxu0 0
      %1418 = vmatprep.subr.bf16.mxu0 0
      %1419 = vmatpush1.bf16.msra.mxu0 0
      %1420 = vmatprep.subr.bf16.mxu0 0
      %1421 = vmatpush1.bf16.msra.mxu0 %v1405
      %1422 = vmatprep.subr.bf16.mxu0 0
      %1423 = vmatpush1.bf16.msra.mxu0 %v1404
      %1424 = vmatprep.subr.bf16.mxu0 0
      %1425 = vmatpush2.bf16.msra.mxu0 0
      %1426 = vmatprep.subr.bf16.mxu0 0
      %1427 = vmatpush2.bf16.msra.mxu0 0
      %1428 = vmatprep.subr.bf16.mxu0 0
      %1429 = vmatpush2.bf16.msra.mxu0 0
      %1430 = vmatprep.subr.bf16.mxu0 0
      %1431 = vmatpush2.bf16.msra.mxu0 0
      %1432 = vmatprep.subr.bf16.mxu0 0
      %1433 = vmatpush2.bf16.msra.mxu0 0
      %1434 = vmatprep.subr.bf16.mxu0 0
      %1435 = vmatpush2.bf16.msra.mxu0 0
      %1436 = vmatprep.subr.bf16.mxu0 0
      %1437 = vmatpush2.bf16.msra.mxu0 0
      %1438 = vmatprep.subr.bf16.mxu0 0
      %1439 = vmatpush2.bf16.msra.mxu0 0
      %1440 = vmatprep.mubr.bf16.mxu0 0
      %1441 = vmatmul.mubr.bf16.gmra.mxu0 %v1280
      %v1442 = vpop.f32.mrf.mxu0
      %v1443 = vadd.f32 %v1394, %v1442
      %v1444 = vpop.f32.mrf.mxu0
      %v1445 = vpop.f32.mrf.mxu0
      %v1446 = vpop.f32.mrf.mxu0
      %1447 = vdwg.mxu0
      %v1448 = vpack.c.bf16 %v1317, %v1317
      %v1449 = vpack.c.bf16 %v1380, %v1380
      %vm1450 = vcmask 64512
      %v1452 = vsel %vm1450, %v1448, 0
      %v1455 = vsel %vm1450, %v1449, 0
      %1457 = vmatprep.subr.bf16.mxu0 0
      %1458 = vmatpush1.bf16.xpose.msra.mxu0 0
      %1459 = vmatprep.subr.bf16.mxu0 0
      %1460 = vmatpush1.bf16.xpose.msra.mxu0 0
      %1461 = vmatprep.subr.bf16.mxu0 0
      %1462 = vmatpush1.bf16.xpose.msra.mxu0 0
      %1463 = vmatprep.subr.bf16.mxu0 0
      %1464 = vmatpush1.bf16.xpose.msra.mxu0 0
      %1465 = vmatprep.subr.bf16.mxu0 0
      %1466 = vmatpush1.bf16.xpose.msra.mxu0 0
      %1467 = vmatprep.subr.bf16.mxu0 0
      %1468 = vmatpush1.bf16.xpose.msra.mxu0 0
      %1469 = vmatprep.subr.bf16.mxu0 0
      %1470 = vmatpush1.bf16.xpose.msra.mxu0 0
      %1471 = vmatprep.subr.bf16.mxu0 0
      %1472 = vmatpush1.bf16.xpose.msra.mxu0 %v1455
      %1473 = vmatprep.subr.bf16.mxu0 0
      %1474 = vmatpush2.bf16.xpose.msra.mxu0 0
      %1475 = vmatprep.subr.bf16.mxu0 0
      %1476 = vmatpush2.bf16.xpose.msra.mxu0 0
      %1477 = vmatprep.subr.bf16.mxu0 0
      %1478 = vmatpush2.bf16.xpose.msra.mxu0 0
      %1479 = vmatprep.subr.bf16.mxu0 0
      %1480 = vmatpush2.bf16.xpose.msra.mxu0 0
      %1481 = vmatprep.subr.bf16.mxu0 0
      %1482 = vmatpush2.bf16.xpose.msra.mxu0 0
      %1483 = vmatprep.subr.bf16.mxu0 0
      %1484 = vmatpush2.bf16.xpose.msra.mxu0 0
      %1485 = vmatprep.subr.bf16.mxu0 0
      %1486 = vmatpush2.bf16.xpose.msra.mxu0 0
      %1487 = vmatprep.subr.bf16.mxu0 0
      %1488 = vmatpush2.bf16.xpose.msra.mxu0 0
      %1489 = vmatprep.mubr.bf16.mxu0 0
      %1490 = vmatmul.mubr.bf16.gmra.mxu0 %v1452
      %v1491 = vpop.f32.mrf.mxu0
      %v1492 = vadd.f32 0.0, %v1491
      %v1493 = vpop.f32.mrf.mxu0
      %v1494 = vpop.f32.mrf.mxu0
      %v1495 = vpop.f32.mrf.mxu0
      %1496 = vdwg.mxu0
      %v1497 = vmul.f32 %v1492, 0.35355338
      %vm1498 = vcmask 9216
      %v1499 = vsel %vm1498, %v1497, -inf
      %1500 = vmax.xlane.f32.xlu0 %v1499
      %v1501 = vpop.xlane.xlu0 %1500
      %v1502 = vsub.f32 %v1497, %v1501
      %v1503 = vmul.f32 %v1502, 1.442695
      %v1504 = vpow.pop %v1503
      %v1505 = vsel %vm1498, %v1504, 0.0
      %1506 = vadd.xlane.f32.xlu0 %v1505
      %v1507 = vpop.xlane.xlu0 %1506
      %v1508 = vrcp.pop %v1507
      %v1509 = vmul.f32 %v1504, %v1508
      %v1510 = vpack.c.bf16 %v1509, %v1509
      %v1511 = vpack.c.bf16 %v1443, %v1443
      %vm1512 = vcmask 15360
      %v1514 = vsel %vm1512, %v1510, 0
      %vm1516 = vcmask 1040384
      %v1518 = vsel %vm1516, %v1511, 0
      %1520 = vmatprep.subr.bf16.mxu0 0
      %1521 = vmatpush1.bf16.msra.mxu0 0
      %1522 = vmatprep.subr.bf16.mxu0 0
      %1523 = vmatpush1.bf16.msra.mxu0 0
      %1524 = vmatprep.subr.bf16.mxu0 0
      %1525 = vmatpush1.bf16.msra.mxu0 0
      %1526 = vmatprep.subr.bf16.mxu0 0
      %1527 = vmatpush1.bf16.msra.mxu0 0
      %1528 = vmatprep.subr.bf16.mxu0 0
      %1529 = vmatpush1.bf16.msra.mxu0 0
      %1530 = vmatprep.subr.bf16.mxu0 0
      %1531 = vmatpush1.bf16.msra.mxu0 0
      %1532 = vmatprep.subr.bf16.mxu0 0
      %1533 = vmatpush1.bf16.msra.mxu0 0
      %1534 = vmatprep.subr.bf16.mxu0 0
      %1535 = vmatpush1.bf16.msra.mxu0 %v1518
      %1536 = vmatprep.subr.bf16.mxu0 0
      %1537 = vmatpush2.bf16.msra.mxu0 0
      %1538 = vmatprep.subr.bf16.mxu0 0
      %1539 = vmatpush2.bf16.msra.mxu0 0
      %1540 = vmatprep.subr.bf16.mxu0 0
      %1541 = vmatpush2.bf16.msra.mxu0 0
      %1542 = vmatprep.subr.bf16.mxu0 0
      %1543 = vmatpush2.bf16.msra.mxu0 0
      %1544 = vmatprep.subr.bf16.mxu0 0
      %1545 = vmatpush2.bf16.msra.mxu0 0
      %1546 = vmatprep.subr.bf16.mxu0 0
      %1547 = vmatpush2.bf16.msra.mxu0 0
      %1548 = vmatprep.subr.bf16.mxu0 0
      %1549 = vmatpush2.bf16.msra.mxu0 0
      %1550 = vmatprep.subr.bf16.mxu0 0
      %1551 = vmatpush2.bf16.msra.mxu0 0
      %1552 = vmatprep.mubr.bf16.mxu0 0
      %1553 = vmatmul.mubr.bf16.gmra.mxu0 %v1514
      %v1554 = vpop.f32.mrf.mxu0
      %v1555 = vadd.f32 0.0, %v1554
      %v1556 = vpop.f32.mrf.mxu0
      %v1557 = vpop.f32.mrf.mxu0
      %v1558 = vpop.f32.mrf.mxu0
      %1559 = vdwg.mxu0
      %v1560 = vpack.c.bf16 %v1555, %v1555
      %v1561 = vld [vmem:[%s993] sm:$0xf]
      %s1562 = scalar_lea.vmem %s958, 16
      %v1563 = vld [vmem:[%s1562] sm:$0xf]
      %v1564 = vld [vmem:[%s1562 + $0x4] sm:$0xf]
      %v1565 = vld [vmem:[%s1562 + $0x8] sm:$0xf]
      %v1566 = vld [vmem:[%s1562 + $0xc] sm:$0xf]
      %s1567 = scalar_lea.vmem %s963, 1
      %v1568 = vld [vmem:[%s1567] sm:$0x1]
      %v1570 = vlaneseq
      %v1571 = vshrl.u32 %v1570, 7
      %v1572 = vsub.s32 0, %v1571
      %v1573 = vrot.slane %v1568, %v1572
      %v1579 = vunpack.c.l.b16 %v1563
      %v1580 = vunpack.c.l.b16 %v1564
      %v1581 = vunpack.c.l.b16 %v1565
      %v1582 = vunpack.c.l.b16 %v1566
      %v1583 = vpack.c.b16 %v1580, %v1579
      %v1584 = vpack.c.b16 %v1582, %v1581
      %1587 = vmatprep.subr.bf16.mxu0 0
      %1588 = vmatpush1.bf16.msra.mxu0 0
      %1589 = vmatprep.subr.bf16.mxu0 0
      %1590 = vmatpush1.bf16.msra.mxu0 0
      %1591 = vmatprep.subr.bf16.mxu0 0
      %1592 = vmatpush1.bf16.msra.mxu0 0
      %1593 = vmatprep.subr.bf16.mxu0 0
      %1594 = vmatpush1.bf16.msra.mxu0 0
      %1595 = vmatprep.subr.bf16.mxu0 0
      %1596 = vmatpush1.bf16.msra.mxu0 0
      %1597 = vmatprep.subr.bf16.mxu0 0
      %1598 = vmatpush1.bf16.msra.mxu0 0
      %1599 = vmatprep.subr.bf16.mxu0 0
      %1600 = vmatpush1.bf16.msra.mxu0 %v1584
      %1601 = vmatprep.subr.bf16.mxu0 0
      %1602 = vmatpush1.bf16.msra.mxu0 %v1583
      %1603 = vmatprep.subr.bf16.mxu0 0
      %1604 = vmatpush2.bf16.msra.mxu0 0
      %1605 = vmatprep.subr.bf16.mxu0 0
      %1606 = vmatpush2.bf16.msra.mxu0 0
      %1607 = vmatprep.subr.bf16.mxu0 0
      %1608 = vmatpush2.bf16.msra.mxu0 0
      %1609 = vmatprep.subr.bf16.mxu0 0
      %1610 = vmatpush2.bf16.msra.mxu0 0
      %1611 = vmatprep.subr.bf16.mxu0 0
      %1612 = vmatpush2.bf16.msra.mxu0 0
      %1613 = vmatprep.subr.bf16.mxu0 0
      %1614 = vmatpush2.bf16.msra.mxu0 0
      %1615 = vmatprep.subr.bf16.mxu0 0
      %1616 = vmatpush2.bf16.msra.mxu0 0
      %1617 = vmatprep.subr.bf16.mxu0 0
      %1618 = vmatpush2.bf16.msra.mxu0 0
      %1619 = vmatprep.mubr.bf16.mxu0 0
      %1620 = vmatmul.mubr.bf16.gmra.mxu0 %v1280
      %v1621 = vpop.f32.mrf.mxu0
      %v1622 = vadd.f32 %v1573, %v1621
      %v1623 = vpop.f32.mrf.mxu0
      %v1624 = vpop.f32.mrf.mxu0
      %v1625 = vpop.f32.mrf.mxu0
      %1626 = vdwg.mxu0
      %s1627 = scalar_lea.vmem %s970, 16
      %v1628 = vld [vmem:[%s1627] sm:$0xf]
      %v1629 = vld [vmem:[%s1627 + $0x4] sm:$0xf]
      %v1630 = vld [vmem:[%s1627 + $0x8] sm:$0xf]
      %v1631 = vld [vmem:[%s1627 + $0xc] sm:$0xf]
      %s1632 = scalar_lea.vmem %s975, 1
      %v1633 = vld [vmem:[%s1632] sm:$0x1]
      %v1635 = vlaneseq
      %v1636 = vshrl.u32 %v1635, 7
      %v1637 = vsub.s32 0, %v1636
      %v1638 = vrot.slane %v1633, %v1637
      %v1644 = vunpack.c.l.b16 %v1628
      %v1645 = vunpack.c.l.b16 %v1629
      %v1646 = vunpack.c.l.b16 %v1630
      %v1647 = vunpack.c.l.b16 %v1631
      %v1648 = vpack.c.b16 %v1645, %v1644
      %v1649 = vpack.c.b16 %v1647, %v1646
      %1652 = vmatprep.subr.bf16.mxu0 0
      %1653 = vmatpush1.bf16.msra.mxu0 0
      %1654 = vmatprep.subr.bf16.mxu0 0
      %1655 = vmatpush1.bf16.msra.mxu0 0
      %1656 = vmatprep.subr.bf16.mxu0 0
      %1657 = vmatpush1.bf16.msra.mxu0 0
      %1658 = vmatprep.subr.bf16.mxu0 0
      %1659 = vmatpush1.bf16.msra.mxu0 0
      %1660 = vmatprep.subr.bf16.mxu0 0
      %1661 = vmatpush1.bf16.msra.mxu0 0
      %1662 = vmatprep.subr.bf16.mxu0 0
      %1663 = vmatpush1.bf16.msra.mxu0 0
      %1664 = vmatprep.subr.bf16.mxu0 0
      %1665 = vmatpush1.bf16.msra.mxu0 %v1649
      %1666 = vmatprep.subr.bf16.mxu0 0
      %1667 = vmatpush1.bf16.msra.mxu0 %v1648
      %1668 = vmatprep.subr.bf16.mxu0 0
      %1669 = vmatpush2.bf16.msra.mxu0 0
      %1670 = vmatprep.subr.bf16.mxu0 0
      %1671 = vmatpush2.bf16.msra.mxu0 0
      %1672 = vmatprep.subr.bf16.mxu0 0
      %1673 = vmatpush2.bf16.msra.mxu0 0
      %1674 = vmatprep.subr.bf16.mxu0 0
      %1675 = vmatpush2.bf16.msra.mxu0 0
      %1676 = vmatprep.subr.bf16.mxu0 0
      %1677 = vmatpush2.bf16.msra.mxu0 0
      %1678 = vmatprep.subr.bf16.mxu0 0
      %1679 = vmatpush2.bf16.msra.mxu0 0
      %1680 = vmatprep.subr.bf16.mxu0 0
      %1681 = vmatpush2.bf16.msra.mxu0 0
      %1682 = vmatprep.subr.bf16.mxu0 0
      %1683 = vmatpush2.bf16.msra.mxu0 0
      %1684 = vmatprep.mubr.bf16.mxu0 0
      %1685 = vmatmul.mubr.bf16.gmra.mxu0 %v1280
      %v1686 = vpop.f32.mrf.mxu0
      %v1687 = vadd.f32 %v1638, %v1686
      %v1688 = vpop.f32.mrf.mxu0
      %v1689 = vpop.f32.mrf.mxu0
      %v1690 = vpop.f32.mrf.mxu0
      %1691 = vdwg.mxu0
      %s1692 = scalar_lea.vmem %s982, 16
      %v1693 = vld [vmem:[%s1692] sm:$0xf]
      %v1694 = vld [vmem:[%s1692 + $0x4] sm:$0xf]
      %v1695 = vld [vmem:[%s1692 + $0x8] sm:$0xf]
      %v1696 = vld [vmem:[%s1692 + $0xc] sm:$0xf]
      %s1697 = scalar_lea.vmem %s987, 1
      %v1698 = vld [vmem:[%s1697] sm:$0x1]
      %v1700 = vlaneseq
      %v1701 = vshrl.u32 %v1700, 7
      %v1702 = vsub.s32 0, %v1701
      %v1703 = vrot.slane %v1698, %v1702
      %v1709 = vunpack.c.l.b16 %v1693
      %v1710 = vunpack.c.l.b16 %v1694
      %v1711 = vunpack.c.l.b16 %v1695
      %v1712 = vunpack.c.l.b16 %v1696
      %v1713 = vpack.c.b16 %v1710, %v1709
      %v1714 = vpack.c.b16 %v1712, %v1711
      %1717 = vmatprep.subr.bf16.mxu0 0
      %1718 = vmatpush1.bf16.msra.mxu0 0
      %1719 = vmatprep.subr.bf16.mxu0 0
      %1720 = vmatpush1.bf16.msra.mxu0 0
      %1721 = vmatprep.subr.bf16.mxu0 0
      %1722 = vmatpush1.bf16.msra.mxu0 0
      %1723 = vmatprep.subr.bf16.mxu0 0
      %1724 = vmatpush1.bf16.msra.mxu0 0
      %1725 = vmatprep.subr.bf16.mxu0 0
      %1726 = vmatpush1.bf16.msra.mxu0 0
      %1727 = vmatprep.subr.bf16.mxu0 0
      %1728 = vmatpush1.bf16.msra.mxu0 0
      %1729 = vmatprep.subr.bf16.mxu0 0
      %1730 = vmatpush1.bf16.msra.mxu0 %v1714
      %1731 = vmatprep.subr.bf16.mxu0 0
      %1732 = vmatpush1.bf16.msra.mxu0 %v1713
      %1733 = vmatprep.subr.bf16.mxu0 0
      %1734 = vmatpush2.bf16.msra.mxu0 0
      %1735 = vmatprep.subr.bf16.mxu0 0
      %1736 = vmatpush2.bf16.msra.mxu0 0
      %1737 = vmatprep.subr.bf16.mxu0 0
      %1738 = vmatpush2.bf16.msra.mxu0 0
      %1739 = vmatprep.subr.bf16.mxu0 0
      %1740 = vmatpush2.bf16.msra.mxu0 0
      %1741 = vmatprep.subr.bf16.mxu0 0
      %1742 = vmatpush2.bf16.msra.mxu0 0
      %1743 = vmatprep.subr.bf16.mxu0 0
      %1744 = vmatpush2.bf16.msra.mxu0 0
      %1745 = vmatprep.subr.bf16.mxu0 0
      %1746 = vmatpush2.bf16.msra.mxu0 0
      %1747 = vmatprep.subr.bf16.mxu0 0
      %1748 = vmatpush2.bf16.msra.mxu0 0
      %1749 = vmatprep.mubr.bf16.mxu0 0
      %1750 = vmatmul.mubr.bf16.gmra.mxu0 %v1280
      %v1751 = vpop.f32.mrf.mxu0
      %v1752 = vadd.f32 %v1703, %v1751
      %v1753 = vpop.f32.mrf.mxu0
      %v1754 = vpop.f32.mrf.mxu0
      %v1755 = vpop.f32.mrf.mxu0
      %1756 = vdwg.mxu0
      %v1757 = vpack.c.bf16 %v1622, %v1622
      %v1758 = vpack.c.bf16 %v1687, %v1687
      %v1760 = vsel %vm1450, %v1757, 0
      %v1763 = vsel %vm1450, %v1758, 0
      %1765 = vmatprep.subr.bf16.mxu0 0
      %1766 = vmatpush1.bf16.xpose.msra.mxu0 0
      %1767 = vmatprep.subr.bf16.mxu0 0
      %1768 = vmatpush1.bf16.xpose.msra.mxu0 0
      %1769 = vmatprep.subr.bf16.mxu0 0
      %1770 = vmatpush1.bf16.xpose.msra.mxu0 0
      %1771 = vmatprep.subr.bf16.mxu0 0
      %1772 = vmatpush1.bf16.xpose.msra.mxu0 0
      %1773 = vmatprep.subr.bf16.mxu0 0
      %1774 = vmatpush1.bf16.xpose.msra.mxu0 0
      %1775 = vmatprep.subr.bf16.mxu0 0
      %1776 = vmatpush1.bf16.xpose.msra.mxu0 0
      %1777 = vmatprep.subr.bf16.mxu0 0
      %1778 = vmatpush1.bf16.xpose.msra.mxu0 0
      %1779 = vmatprep.subr.bf16.mxu0 0
      %1780 = vmatpush1.bf16.xpose.msra.mxu0 %v1763
      %1781 = vmatprep.subr.bf16.mxu0 0
      %1782 = vmatpush2.bf16.xpose.msra.mxu0 0
      %1783 = vmatprep.subr.bf16.mxu0 0
      %1784 = vmatpush2.bf16.xpose.msra.mxu0 0
      %1785 = vmatprep.subr.bf16.mxu0 0
      %1786 = vmatpush2.bf16.xpose.msra.mxu0 0
      %1787 = vmatprep.subr.bf16.mxu0 0
      %1788 = vmatpush2.bf16.xpose.msra.mxu0 0
      %1789 = vmatprep.subr.bf16.mxu0 0
      %1790 = vmatpush2.bf16.xpose.msra.mxu0 0
      %1791 = vmatprep.subr.bf16.mxu0 0
      %1792 = vmatpush2.bf16.xpose.msra.mxu0 0
      %1793 = vmatprep.subr.bf16.mxu0 0
      %1794 = vmatpush2.bf16.xpose.msra.mxu0 0
      %1795 = vmatprep.subr.bf16.mxu0 0
      %1796 = vmatpush2.bf16.xpose.msra.mxu0 0
      %1797 = vmatprep.mubr.bf16.mxu0 0
      %1798 = vmatmul.mubr.bf16.gmra.mxu0 %v1760
      %v1799 = vpop.f32.mrf.mxu0
      %v1800 = vadd.f32 0.0, %v1799
      %v1801 = vpop.f32.mrf.mxu0
      %v1802 = vpop.f32.mrf.mxu0
      %v1803 = vpop.f32.mrf.mxu0
      %1804 = vdwg.mxu0
      %v1805 = vmul.f32 %v1800, 0.35355338
      %v1806 = vsel %vm1498, %v1805, -inf
      %1807 = vmax.xlane.f32.xlu0 %v1806
      %v1808 = vpop.xlane.xlu0 %1807
      %v1809 = vsub.f32 %v1805, %v1808
      %v1810 = vmul.f32 %v1809, 1.442695
      %v1811 = vpow.pop %v1810
      %v1812 = vsel %vm1498, %v1811, 0.0
      %1813 = vadd.xlane.f32.xlu0 %v1812
      %v1814 = vpop.xlane.xlu0 %1813
      %v1815 = vrcp.pop %v1814
      %v1816 = vmul.f32 %v1811, %v1815
      %v1817 = vpack.c.bf16 %v1816, %v1816
      %v1818 = vpack.c.bf16 %v1752, %v1752
      %v1820 = vsel %vm1512, %v1817, 0
      %v1823 = vsel %vm1516, %v1818, 0
      %1825 = vmatprep.subr.bf16.mxu0 0
      %1826 = vmatpush1.bf16.msra.mxu0 0
      %1827 = vmatprep.subr.bf16.mxu0 0
      %1828 = vmatpush1.bf16.msra.mxu0 0
      %1829 = vmatprep.subr.bf16.mxu0 0
      %1830 = vmatpush1.bf16.msra.mxu0 0
      %1831 = vmatprep.subr.bf16.mxu0 0
      %1832 = vmatpush1.bf16.msra.mxu0 0
      %1833 = vmatprep.subr.bf16.mxu0 0
      %1834 = vmatpush1.bf16.msra.mxu0 0
      %1835 = vmatprep.subr.bf16.mxu0 0
      %1836 = vmatpush1.bf16.msra.mxu0 0
      %1837 = vmatprep.subr.bf16.mxu0 0
      %1838 = vmatpush1.bf16.msra.mxu0 0
      %1839 = vmatprep.subr.bf16.mxu0 0
      %1840 = vmatpush1.bf16.msra.mxu0 %v1823
      %1841 = vmatprep.subr.bf16.mxu0 0
      %1842 = vmatpush2.bf16.msra.mxu0 0
      %1843 = vmatprep.subr.bf16.mxu0 0
      %1844 = vmatpush2.bf16.msra.mxu0 0
      %1845 = vmatprep.subr.bf16.mxu0 0
      %1846 = vmatpush2.bf16.msra.mxu0 0
      %1847 = vmatprep.subr.bf16.mxu0 0
      %1848 = vmatpush2.bf16.msra.mxu0 0
      %1849 = vmatprep.subr.bf16.mxu0 0
      %1850 = vmatpush2.bf16.msra.mxu0 0
      %1851 = vmatprep.subr.bf16.mxu0 0
      %1852 = vmatpush2.bf16.msra.mxu0 0
      %1853 = vmatprep.subr.bf16.mxu0 0
      %1854 = vmatpush2.bf16.msra.mxu0 0
      %1855 = vmatprep.subr.bf16.mxu0 0
      %1856 = vmatpush2.bf16.msra.mxu0 0
      %1857 = vmatprep.mubr.bf16.mxu0 0
      %1858 = vmatmul.mubr.bf16.gmra.mxu0 %v1820
      %v1859 = vpop.f32.mrf.mxu0
      %v1860 = vadd.f32 0.0, %v1859
      %v1861 = vpop.f32.mrf.mxu0
      %v1862 = vpop.f32.mrf.mxu0
      %v1863 = vpop.f32.mrf.mxu0
      %1864 = vdwg.mxu0
      %v1865 = vpack.c.bf16 %v1860, %v1860
      %s1866 = scalar_lea.vmem %s993, 4
      %v1867 = vld [vmem:[%s1866] sm:$0xf]
      %v1869 = vsel %vm1450, %v1865, 0
      %vm1871 = vcmask 1043456
      %v1873 = vsel %vm1871, %v1867, 0
      %1875 = vmatprep.subr.bf16.mxu0 0
      %1876 = vmatpush1.bf16.msra.mxu0 0
      %1877 = vmatprep.subr.bf16.mxu0 0
      %1878 = vmatpush1.bf16.msra.mxu0 0
      %1879 = vmatprep.subr.bf16.mxu0 0
      %1880 = vmatpush1.bf16.msra.mxu0 0
      %1881 = vmatprep.subr.bf16.mxu0 0
      %1882 = vmatpush1.bf16.msra.mxu0 0
      %1883 = vmatprep.subr.bf16.mxu0 0
      %1884 = vmatpush1.bf16.msra.mxu0 0
      %1885 = vmatprep.subr.bf16.mxu0 0
      %1886 = vmatpush1.bf16.msra.mxu0 0
      %1887 = vmatprep.subr.bf16.mxu0 0
      %1888 = vmatpush1.bf16.msra.mxu0 0
      %1889 = vmatprep.subr.bf16.mxu0 0
      %1890 = vmatpush1.bf16.msra.mxu0 %v1873
      %1891 = vmatprep.subr.bf16.mxu0 0
      %1892 = vmatpush2.bf16.msra.mxu0 0
      %1893 = vmatprep.subr.bf16.mxu0 0
      %1894 = vmatpush2.bf16.msra.mxu0 0
      %1895 = vmatprep.subr.bf16.mxu0 0
      %1896 = vmatpush2.bf16.msra.mxu0 0
      %1897 = vmatprep.subr.bf16.mxu0 0
      %1898 = vmatpush2.bf16.msra.mxu0 0
      %1899 = vmatprep.subr.bf16.mxu0 0
      %1900 = vmatpush2.bf16.msra.mxu0 0
      %1901 = vmatprep.subr.bf16.mxu0 0
      %1902 = vmatpush2.bf16.msra.mxu0 0
      %1903 = vmatprep.subr.bf16.mxu0 0
      %1904 = vmatpush2.bf16.msra.mxu0 0
      %1905 = vmatprep.subr.bf16.mxu0 0
      %1906 = vmatpush2.bf16.msra.mxu0 0
      %1907 = vmatprep.mubr.bf16.mxu0 0
      %1908 = vmatmul.mubr.bf16.gmra.mxu0 %v1869
      %v1909 = vpop.f32.mrf.mxu0
      %v1910 = vadd.f32 0.0, %v1909
      %v1911 = vpop.f32.mrf.mxu0
      %v1912 = vpop.f32.mrf.mxu0
      %v1913 = vpop.f32.mrf.mxu0
      %1914 = vdwg.mxu0
      %v1916 = vsel %vm1450, %v1560, 0
      %v1919 = vsel %vm1871, %v1561, 0
      %1921 = vmatprep.subr.bf16.mxu0 0
      %1922 = vmatpush1.bf16.msra.mxu0 0
      %1923 = vmatprep.subr.bf16.mxu0 0
      %1924 = vmatpush1.bf16.msra.mxu0 0
      %1925 = vmatprep.subr.bf16.mxu0 0
      %1926 = vmatpush1.bf16.msra.mxu0 0
      %1927 = vmatprep.subr.bf16.mxu0 0
      %1928 = vmatpush1.bf16.msra.mxu0 0
      %1929 = vmatprep.subr.bf16.mxu0 0
      %1930 = vmatpush1.bf16.msra.mxu0 0
      %1931 = vmatprep.subr.bf16.mxu0 0
      %1932 = vmatpush1.bf16.msra.mxu0 0
      %1933 = vmatprep.subr.bf16.mxu0 0
      %1934 = vmatpush1.bf16.msra.mxu0 0
      %1935 = vmatprep.subr.bf16.mxu0 0
      %1936 = vmatpush1.bf16.msra.mxu0 %v1919
      %1937 = vmatprep.subr.bf16.mxu0 0
      %1938 = vmatpush2.bf16.msra.mxu0 0
      %1939 = vmatprep.subr.bf16.mxu0 0
      %1940 = vmatpush2.bf16.msra.mxu0 0
      %1941 = vmatprep.subr.bf16.mxu0 0
      %1942 = vmatpush2.bf16.msra.mxu0 0
      %1943 = vmatprep.subr.bf16.mxu0 0
      %1944 = vmatpush2.bf16.msra.mxu0 0
      %1945 = vmatprep.subr.bf16.mxu0 0
      %1946 = vmatpush2.bf16.msra.mxu0 0
      %1947 = vmatprep.subr.bf16.mxu0 0
      %1948 = vmatpush2.bf16.msra.mxu0 0
      %1949 = vmatprep.subr.bf16.mxu0 0
      %1950 = vmatpush2.bf16.msra.mxu0 0
      %1951 = vmatprep.subr.bf16.mxu0 0
      %1952 = vmatpush2.bf16.msra.mxu0 0
      %1953 = vmatprep.mubr.bf16.mxu0 0
      %1954 = vmatmul.mubr.bf16.gmra.mxu0 %v1916
      %v1955 = vpop.f32.mrf.mxu0
      %v1956 = vadd.f32 %v1910, %v1955
      %v1957 = vpop.f32.mrf.mxu0
      %v1958 = vpop.f32.mrf.mxu0
      %v1959 = vpop.f32.mrf.mxu0
      %1960 = vdwg.mxu0
      %s1961 = scalar_lea.vmem %s958, 32
      %v1962 = vld [vmem:[%s1961] sm:$0xf]
      %v1963 = vld [vmem:[%s1961 + $0x4] sm:$0xf]
      %v1964 = vld [vmem:[%s1961 + $0x8] sm:$0xf]
      %v1965 = vld [vmem:[%s1961 + $0xc] sm:$0xf]
      %s1966 = scalar_lea.vmem %s963, 2
      %v1967 = vld [vmem:[%s1966] sm:$0x1]
      %v1969 = vlaneseq
      %v1970 = vshrl.u32 %v1969, 7
      %v1971 = vsub.s32 0, %v1970
      %v1972 = vrot.slane %v1967, %v1971
      %v1978 = vunpack.c.l.b16 %v1962
      %v1979 = vunpack.c.l.b16 %v1963
      %v1980 = vunpack.c.l.b16 %v1964
      %v1981 = vunpack.c.l.b16 %v1965
      %v1982 = vpack.c.b16 %v1979, %v1978
      %v1983 = vpack.c.b16 %v1981, %v1980
      %1986 = vmatprep.subr.bf16.mxu0 0
      %1987 = vmatpush1.bf16.msra.mxu0 0
      %1988 = vmatprep.subr.bf16.mxu0 0
      %1989 = vmatpush1.bf16.msra.mxu0 0
      %1990 = vmatprep.subr.bf16.mxu0 0
      %1991 = vmatpush1.bf16.msra.mxu0 0
      %1992 = vmatprep.subr.bf16.mxu0 0
      %1993 = vmatpush1.bf16.msra.mxu0 0
      %1994 = vmatprep.subr.bf16.mxu0 0
      %1995 = vmatpush1.bf16.msra.mxu0 0
      %1996 = vmatprep.subr.bf16.mxu0 0
      %1997 = vmatpush1.bf16.msra.mxu0 0
      %1998 = vmatprep.subr.bf16.mxu0 0
      %1999 = vmatpush1.bf16.msra.mxu0 %v1983
      %2000 = vmatprep.subr.bf16.mxu0 0
      %2001 = vmatpush1.bf16.msra.mxu0 %v1982
      %2002 = vmatprep.subr.bf16.mxu0 0
      %2003 = vmatpush2.bf16.msra.mxu0 0
      %2004 = vmatprep.subr.bf16.mxu0 0
      %2005 = vmatpush2.bf16.msra.mxu0 0
      %2006 = vmatprep.subr.bf16.mxu0 0
      %2007 = vmatpush2.bf16.msra.mxu0 0
      %2008 = vmatprep.subr.bf16.mxu0 0
      %2009 = vmatpush2.bf16.msra.mxu0 0
      %2010 = vmatprep.subr.bf16.mxu0 0
      %2011 = vmatpush2.bf16.msra.mxu0 0
      %2012 = vmatprep.subr.bf16.mxu0 0
      %2013 = vmatpush2.bf16.msra.mxu0 0
      %2014 = vmatprep.subr.bf16.mxu0 0
      %2015 = vmatpush2.bf16.msra.mxu0 0
      %2016 = vmatprep.subr.bf16.mxu0 0
      %2017 = vmatpush2.bf16.msra.mxu0 0
      %2018 = vmatprep.mubr.bf16.mxu0 0
      %2019 = vmatmul.mubr.bf16.gmra.mxu0 %v1280
      %v2020 = vpop.f32.mrf.mxu0
      %v2021 = vadd.f32 %v1972, %v2020
      %v2022 = vpop.f32.mrf.mxu0
      %v2023 = vpop.f32.mrf.mxu0
      %v2024 = vpop.f32.mrf.mxu0
      %2025 = vdwg.mxu0
      %s2026 = scalar_lea.vmem %s970, 32
      %v2027 = vld [vmem:[%s2026] sm:$0xf]
      %v2028 = vld [vmem:[%s2026 + $0x4] sm:$0xf]
      %v2029 = vld [vmem:[%s2026 + $0x8] sm:$0xf]
      %v2030 = vld [vmem:[%s2026 + $0xc] sm:$0xf]
      %s2031 = scalar_lea.vmem %s975, 2
      %v2032 = vld [vmem:[%s2031] sm:$0x1]
      %v2034 = vlaneseq
      %v2035 = vshrl.u32 %v2034, 7
      %v2036 = vsub.s32 0, %v2035
      %v2037 = vrot.slane %v2032, %v2036
      %v2043 = vunpack.c.l.b16 %v2027
      %v2044 = vunpack.c.l.b16 %v2028
      %v2045 = vunpack.c.l.b16 %v2029
      %v2046 = vunpack.c.l.b16 %v2030
      %v2047 = vpack.c.b16 %v2044, %v2043
      %v2048 = vpack.c.b16 %v2046, %v2045
      %2051 = vmatprep.subr.bf16.mxu0 0
      %2052 = vmatpush1.bf16.msra.mxu0 0
      %2053 = vmatprep.subr.bf16.mxu0 0
      %2054 = vmatpush1.bf16.msra.mxu0 0
      %2055 = vmatprep.subr.bf16.mxu0 0
      %2056 = vmatpush1.bf16.msra.mxu0 0
      %2057 = vmatprep.subr.bf16.mxu0 0
      %2058 = vmatpush1.bf16.msra.mxu0 0
      %2059 = vmatprep.subr.bf16.mxu0 0
      %2060 = vmatpush1.bf16.msra.mxu0 0
      %2061 = vmatprep.subr.bf16.mxu0 0
      %2062 = vmatpush1.bf16.msra.mxu0 0
      %2063 = vmatprep.subr.bf16.mxu0 0
      %2064 = vmatpush1.bf16.msra.mxu0 %v2048
      %2065 = vmatprep.subr.bf16.mxu0 0
      %2066 = vmatpush1.bf16.msra.mxu0 %v2047
      %2067 = vmatprep.subr.bf16.mxu0 0
      %2068 = vmatpush2.bf16.msra.mxu0 0
      %2069 = vmatprep.subr.bf16.mxu0 0
      %2070 = vmatpush2.bf16.msra.mxu0 0
      %2071 = vmatprep.subr.bf16.mxu0 0
      %2072 = vmatpush2.bf16.msra.mxu0 0
      %2073 = vmatprep.subr.bf16.mxu0 0
      %2074 = vmatpush2.bf16.msra.mxu0 0
      %2075 = vmatprep.subr.bf16.mxu0 0
      %2076 = vmatpush2.bf16.msra.mxu0 0
      %2077 = vmatprep.subr.bf16.mxu0 0
      %2078 = vmatpush2.bf16.msra.mxu0 0
      %2079 = vmatprep.subr.bf16.mxu0 0
      %2080 = vmatpush2.bf16.msra.mxu0 0
      %2081 = vmatprep.subr.bf16.mxu0 0
      %2082 = vmatpush2.bf16.msra.mxu0 0
      %2083 = vmatprep.mubr.bf16.mxu0 0
      %2084 = vmatmul.mubr.bf16.gmra.mxu0 %v1280
      %v2085 = vpop.f32.mrf.mxu0
      %v2086 = vadd.f32 %v2037, %v2085
      %v2087 = vpop.f32.mrf.mxu0
      %v2088 = vpop.f32.mrf.mxu0
      %v2089 = vpop.f32.mrf.mxu0
      %2090 = vdwg.mxu0
      %s2091 = scalar_lea.vmem %s982, 32
      %v2092 = vld [vmem:[%s2091] sm:$0xf]
      %v2093 = vld [vmem:[%s2091 + $0x4] sm:$0xf]
      %v2094 = vld [vmem:[%s2091 + $0x8] sm:$0xf]
      %v2095 = vld [vmem:[%s2091 + $0xc] sm:$0xf]
      %s2096 = scalar_lea.vmem %s987, 2
      %v2097 = vld [vmem:[%s2096] sm:$0x1]
      %v2099 = vlaneseq
      %v2100 = vshrl.u32 %v2099, 7
      %v2101 = vsub.s32 0, %v2100
      %v2102 = vrot.slane %v2097, %v2101
      %v2108 = vunpack.c.l.b16 %v2092
      %v2109 = vunpack.c.l.b16 %v2093
      %v2110 = vunpack.c.l.b16 %v2094
      %v2111 = vunpack.c.l.b16 %v2095
      %v2112 = vpack.c.b16 %v2109, %v2108
      %v2113 = vpack.c.b16 %v2111, %v2110
      %2116 = vmatprep.subr.bf16.mxu0 0
      %2117 = vmatpush1.bf16.msra.mxu0 0
      %2118 = vmatprep.subr.bf16.mxu0 0
      %2119 = vmatpush1.bf16.msra.mxu0 0
      %2120 = vmatprep.subr.bf16.mxu0 0
      %2121 = vmatpush1.bf16.msra.mxu0 0
      %2122 = vmatprep.subr.bf16.mxu0 0
      %2123 = vmatpush1.bf16.msra.mxu0 0
      %2124 = vmatprep.subr.bf16.mxu0 0
      %2125 = vmatpush1.bf16.msra.mxu0 0
      %2126 = vmatprep.subr.bf16.mxu0 0
      %2127 = vmatpush1.bf16.msra.mxu0 0
      %2128 = vmatprep.subr.bf16.mxu0 0
      %2129 = vmatpush1.bf16.msra.mxu0 %v2113
      %2130 = vmatprep.subr.bf16.mxu0 0
      %2131 = vmatpush1.bf16.msra.mxu0 %v2112
      %2132 = vmatprep.subr.bf16.mxu0 0
      %2133 = vmatpush2.bf16.msra.mxu0 0
      %2134 = vmatprep.subr.bf16.mxu0 0
      %2135 = vmatpush2.bf16.msra.mxu0 0
      %2136 = vmatprep.subr.bf16.mxu0 0
      %2137 = vmatpush2.bf16.msra.mxu0 0
      %2138 = vmatprep.subr.bf16.mxu0 0
      %2139 = vmatpush2.bf16.msra.mxu0 0
      %2140 = vmatprep.subr.bf16.mxu0 0
      %2141 = vmatpush2.bf16.msra.mxu0 0
      %2142 = vmatprep.subr.bf16.mxu0 0
      %2143 = vmatpush2.bf16.msra.mxu0 0
      %2144 = vmatprep.subr.bf16.mxu0 0
      %2145 = vmatpush2.bf16.msra.mxu0 0
      %2146 = vmatprep.subr.bf16.mxu0 0
      %2147 = vmatpush2.bf16.msra.mxu0 0
      %2148 = vmatprep.mubr.bf16.mxu0 0
      %2149 = vmatmul.mubr.bf16.gmra.mxu0 %v1280
      %v2150 = vpop.f32.mrf.mxu0
      %v2151 = vadd.f32 %v2102, %v2150
      %v2152 = vpop.f32.mrf.mxu0
      %v2153 = vpop.f32.mrf.mxu0
      %v2154 = vpop.f32.mrf.mxu0
      %2155 = vdwg.mxu0
      %v2156 = vpack.c.bf16 %v2021, %v2021
      %v2157 = vpack.c.bf16 %v2086, %v2086
      %v2159 = vsel %vm1450, %v2156, 0
      %v2162 = vsel %vm1450, %v2157, 0
      %2164 = vmatprep.subr.bf16.mxu0 0
      %2165 = vmatpush1.bf16.xpose.msra.mxu0 0
      %2166 = vmatprep.subr.bf16.mxu0 0
      %2167 = vmatpush1.bf16.xpose.msra.mxu0 0
      %2168 = vmatprep.subr.bf16.mxu0 0
      %2169 = vmatpush1.bf16.xpose.msra.mxu0 0
      %2170 = vmatprep.subr.bf16.mxu0 0
      %2171 = vmatpush1.bf16.xpose.msra.mxu0 0
      %2172 = vmatprep.subr.bf16.mxu0 0
      %2173 = vmatpush1.bf16.xpose.msra.mxu0 0
      %2174 = vmatprep.subr.bf16.mxu0 0
      %2175 = vmatpush1.bf16.xpose.msra.mxu0 0
      %2176 = vmatprep.subr.bf16.mxu0 0
      %2177 = vmatpush1.bf16.xpose.msra.mxu0 0
      %2178 = vmatprep.subr.bf16.mxu0 0
      %2179 = vmatpush1.bf16.xpose.msra.mxu0 %v2162
      %2180 = vmatprep.subr.bf16.mxu0 0
      %2181 = vmatpush2.bf16.xpose.msra.mxu0 0
      %2182 = vmatprep.subr.bf16.mxu0 0
      %2183 = vmatpush2.bf16.xpose.msra.mxu0 0
      %2184 = vmatprep.subr.bf16.mxu0 0
      %2185 = vmatpush2.bf16.xpose.msra.mxu0 0
      %2186 = vmatprep.subr.bf16.mxu0 0
      %2187 = vmatpush2.bf16.xpose.msra.mxu0 0
      %2188 = vmatprep.subr.bf16.mxu0 0
      %2189 = vmatpush2.bf16.xpose.msra.mxu0 0
      %2190 = vmatprep.subr.bf16.mxu0 0
      %2191 = vmatpush2.bf16.xpose.msra.mxu0 0
      %2192 = vmatprep.subr.bf16.mxu0 0
      %2193 = vmatpush2.bf16.xpose.msra.mxu0 0
      %2194 = vmatprep.subr.bf16.mxu0 0
      %2195 = vmatpush2.bf16.xpose.msra.mxu0 0
      %2196 = vmatprep.mubr.bf16.mxu0 0
      %2197 = vmatmul.mubr.bf16.gmra.mxu0 %v2159
      %v2198 = vpop.f32.mrf.mxu0
      %v2199 = vadd.f32 0.0, %v2198
      %v2200 = vpop.f32.mrf.mxu0
      %v2201 = vpop.f32.mrf.mxu0
      %v2202 = vpop.f32.mrf.mxu0
      %2203 = vdwg.mxu0
      %v2204 = vmul.f32 %v2199, 0.35355338
      %v2205 = vsel %vm1498, %v2204, -inf
      %2206 = vmax.xlane.f32.xlu0 %v2205
      %v2207 = vpop.xlane.xlu0 %2206
      %v2208 = vsub.f32 %v2204, %v2207
      %v2209 = vmul.f32 %v2208, 1.442695
      %v2210 = vpow.pop %v2209
      %v2211 = vsel %vm1498, %v2210, 0.0
      %2212 = vadd.xlane.f32.xlu0 %v2211
      %v2213 = vpop.xlane.xlu0 %2212
      %v2214 = vrcp.pop %v2213
      %v2215 = vmul.f32 %v2210, %v2214
      %v2216 = vpack.c.bf16 %v2215, %v2215
      %v2217 = vpack.c.bf16 %v2151, %v2151
      %v2219 = vsel %vm1512, %v2216, 0
      %v2222 = vsel %vm1516, %v2217, 0
      %2224 = vmatprep.subr.bf16.mxu0 0
      %2225 = vmatpush1.bf16.msra.mxu0 0
      %2226 = vmatprep.subr.bf16.mxu0 0
      %2227 = vmatpush1.bf16.msra.mxu0 0
      %2228 = vmatprep.subr.bf16.mxu0 0
      %2229 = vmatpush1.bf16.msra.mxu0 0
      %2230 = vmatprep.subr.bf16.mxu0 0
      %2231 = vmatpush1.bf16.msra.mxu0 0
      %2232 = vmatprep.subr.bf16.mxu0 0
      %2233 = vmatpush1.bf16.msra.mxu0 0
      %2234 = vmatprep.subr.bf16.mxu0 0
      %2235 = vmatpush1.bf16.msra.mxu0 0
      %2236 = vmatprep.subr.bf16.mxu0 0
      %2237 = vmatpush1.bf16.msra.mxu0 0
      %2238 = vmatprep.subr.bf16.mxu0 0
      %2239 = vmatpush1.bf16.msra.mxu0 %v2222
      %2240 = vmatprep.subr.bf16.mxu0 0
      %2241 = vmatpush2.bf16.msra.mxu0 0
      %2242 = vmatprep.subr.bf16.mxu0 0
      %2243 = vmatpush2.bf16.msra.mxu0 0
      %2244 = vmatprep.subr.bf16.mxu0 0
      %2245 = vmatpush2.bf16.msra.mxu0 0
      %2246 = vmatprep.subr.bf16.mxu0 0
      %2247 = vmatpush2.bf16.msra.mxu0 0
      %2248 = vmatprep.subr.bf16.mxu0 0
      %2249 = vmatpush2.bf16.msra.mxu0 0
      %2250 = vmatprep.subr.bf16.mxu0 0
      %2251 = vmatpush2.bf16.msra.mxu0 0
      %2252 = vmatprep.subr.bf16.mxu0 0
      %2253 = vmatpush2.bf16.msra.mxu0 0
      %2254 = vmatprep.subr.bf16.mxu0 0
      %2255 = vmatpush2.bf16.msra.mxu0 0
      %2256 = vmatprep.mubr.bf16.mxu0 0
      %2257 = vmatmul.mubr.bf16.gmra.mxu0 %v2219
      %v2258 = vpop.f32.mrf.mxu0
      %v2259 = vadd.f32 0.0, %v2258
      %v2260 = vpop.f32.mrf.mxu0
      %v2261 = vpop.f32.mrf.mxu0
      %v2262 = vpop.f32.mrf.mxu0
      %2263 = vdwg.mxu0
      %v2264 = vpack.c.bf16 %v2259, %v2259
      %s2265 = scalar_lea.vmem %s993, 8
      %v2266 = vld [vmem:[%s2265] sm:$0xf]
      %v2268 = vsel %vm1450, %v2264, 0
      %v2271 = vsel %vm1871, %v2266, 0
      %2273 = vmatprep.subr.bf16.mxu0 0
      %2274 = vmatpush1.bf16.msra.mxu0 0
      %2275 = vmatprep.subr.bf16.mxu0 0
      %2276 = vmatpush1.bf16.msra.mxu0 0
      %2277 = vmatprep.subr.bf16.mxu0 0
      %2278 = vmatpush1.bf16.msra.mxu0 0
      %2279 = vmatprep.subr.bf16.mxu0 0
      %2280 = vmatpush1.bf16.msra.mxu0 0
      %2281 = vmatprep.subr.bf16.mxu0 0
      %2282 = vmatpush1.bf16.msra.mxu0 0
      %2283 = vmatprep.subr.bf16.mxu0 0
      %2284 = vmatpush1.bf16.msra.mxu0 0
      %2285 = vmatprep.subr.bf16.mxu0 0
      %2286 = vmatpush1.bf16.msra.mxu0 0
      %2287 = vmatprep.subr.bf16.mxu0 0
      %2288 = vmatpush1.bf16.msra.mxu0 %v2271
      %2289 = vmatprep.subr.bf16.mxu0 0
      %2290 = vmatpush2.bf16.msra.mxu0 0
      %2291 = vmatprep.subr.bf16.mxu0 0
      %2292 = vmatpush2.bf16.msra.mxu0 0
      %2293 = vmatprep.subr.bf16.mxu0 0
      %2294 = vmatpush2.bf16.msra.mxu0 0
      %2295 = vmatprep.subr.bf16.mxu0 0
      %2296 = vmatpush2.bf16.msra.mxu0 0
      %2297 = vmatprep.subr.bf16.mxu0 0
      %2298 = vmatpush2.bf16.msra.mxu0 0
      %2299 = vmatprep.subr.bf16.mxu0 0
      %2300 = vmatpush2.bf16.msra.mxu0 0
      %2301 = vmatprep.subr.bf16.mxu0 0
      %2302 = vmatpush2.bf16.msra.mxu0 0
      %2303 = vmatprep.subr.bf16.mxu0 0
      %2304 = vmatpush2.bf16.msra.mxu0 0
      %2305 = vmatprep.mubr.bf16.mxu0 0
      %2306 = vmatmul.mubr.bf16.gmra.mxu0 %v2268
      %v2307 = vpop.f32.mrf.mxu0
      %v2308 = vadd.f32 0.0, %v2307
      %v2309 = vpop.f32.mrf.mxu0
      %v2310 = vpop.f32.mrf.mxu0
      %v2311 = vpop.f32.mrf.mxu0
      %2312 = vdwg.mxu0
      %v2313 = vadd.f32 %v1956, %v2308
      %s2314 = scalar_lea.vmem %s958, 48
      %v2315 = vld [vmem:[%s2314] sm:$0xf]
      %v2316 = vld [vmem:[%s2314 + $0x4] sm:$0xf]
      %v2317 = vld [vmem:[%s2314 + $0x8] sm:$0xf]
      %v2318 = vld [vmem:[%s2314 + $0xc] sm:$0xf]
      %s2319 = scalar_lea.vmem %s963, 3
      %v2320 = vld [vmem:[%s2319] sm:$0x1]
      %v2322 = vlaneseq
      %v2323 = vshrl.u32 %v2322, 7
      %v2324 = vsub.s32 0, %v2323
      %v2325 = vrot.slane %v2320, %v2324
      %v2331 = vunpack.c.l.b16 %v2315
      %v2332 = vunpack.c.l.b16 %v2316
      %v2333 = vunpack.c.l.b16 %v2317
      %v2334 = vunpack.c.l.b16 %v2318
      %v2335 = vpack.c.b16 %v2332, %v2331
      %v2336 = vpack.c.b16 %v2334, %v2333
      %2339 = vmatprep.subr.bf16.mxu0 0
      %2340 = vmatpush1.bf16.msra.mxu0 0
      %2341 = vmatprep.subr.bf16.mxu0 0
      %2342 = vmatpush1.bf16.msra.mxu0 0
      %2343 = vmatprep.subr.bf16.mxu0 0
      %2344 = vmatpush1.bf16.msra.mxu0 0
      %2345 = vmatprep.subr.bf16.mxu0 0
      %2346 = vmatpush1.bf16.msra.mxu0 0
      %2347 = vmatprep.subr.bf16.mxu0 0
      %2348 = vmatpush1.bf16.msra.mxu0 0
      %2349 = vmatprep.subr.bf16.mxu0 0
      %2350 = vmatpush1.bf16.msra.mxu0 0
      %2351 = vmatprep.subr.bf16.mxu0 0
      %2352 = vmatpush1.bf16.msra.mxu0 %v2336
      %2353 = vmatprep.subr.bf16.mxu0 0
      %2354 = vmatpush1.bf16.msra.mxu0 %v2335
      %2355 = vmatprep.subr.bf16.mxu0 0
      %2356 = vmatpush2.bf16.msra.mxu0 0
      %2357 = vmatprep.subr.bf16.mxu0 0
      %2358 = vmatpush2.bf16.msra.mxu0 0
      %2359 = vmatprep.subr.bf16.mxu0 0
      %2360 = vmatpush2.bf16.msra.mxu0 0
      %2361 = vmatprep.subr.bf16.mxu0 0
      %2362 = vmatpush2.bf16.msra.mxu0 0
      %2363 = vmatprep.subr.bf16.mxu0 0
      %2364 = vmatpush2.bf16.msra.mxu0 0
      %2365 = vmatprep.subr.bf16.mxu0 0
      %2366 = vmatpush2.bf16.msra.mxu0 0
      %2367 = vmatprep.subr.bf16.mxu0 0
      %2368 = vmatpush2.bf16.msra.mxu0 0
      %2369 = vmatprep.subr.bf16.mxu0 0
      %2370 = vmatpush2.bf16.msra.mxu0 0
      %2371 = vmatprep.mubr.bf16.mxu0 0
      %2372 = vmatmul.mubr.bf16.gmra.mxu0 %v1280
      %v2373 = vpop.f32.mrf.mxu0
      %v2374 = vadd.f32 %v2325, %v2373
      %v2375 = vpop.f32.mrf.mxu0
      %v2376 = vpop.f32.mrf.mxu0
      %v2377 = vpop.f32.mrf.mxu0
      %2378 = vdwg.mxu0
      %s2379 = scalar_lea.vmem %s970, 48
      %v2380 = vld [vmem:[%s2379] sm:$0xf]
      %v2381 = vld [vmem:[%s2379 + $0x4] sm:$0xf]
      %v2382 = vld [vmem:[%s2379 + $0x8] sm:$0xf]
      %v2383 = vld [vmem:[%s2379 + $0xc] sm:$0xf]
      %s2384 = scalar_lea.vmem %s975, 3
      %v2385 = vld [vmem:[%s2384] sm:$0x1]
      %v2387 = vlaneseq
      %v2388 = vshrl.u32 %v2387, 7
      %v2389 = vsub.s32 0, %v2388
      %v2390 = vrot.slane %v2385, %v2389
      %v2396 = vunpack.c.l.b16 %v2380
      %v2397 = vunpack.c.l.b16 %v2381
      %v2398 = vunpack.c.l.b16 %v2382
      %v2399 = vunpack.c.l.b16 %v2383
      %v2400 = vpack.c.b16 %v2397, %v2396
      %v2401 = vpack.c.b16 %v2399, %v2398
      %2404 = vmatprep.subr.bf16.mxu0 0
      %2405 = vmatpush1.bf16.msra.mxu0 0
      %2406 = vmatprep.subr.bf16.mxu0 0
      %2407 = vmatpush1.bf16.msra.mxu0 0
      %2408 = vmatprep.subr.bf16.mxu0 0
      %2409 = vmatpush1.bf16.msra.mxu0 0
      %2410 = vmatprep.subr.bf16.mxu0 0
      %2411 = vmatpush1.bf16.msra.mxu0 0
      %2412 = vmatprep.subr.bf16.mxu0 0
      %2413 = vmatpush1.bf16.msra.mxu0 0
      %2414 = vmatprep.subr.bf16.mxu0 0
      %2415 = vmatpush1.bf16.msra.mxu0 0
      %2416 = vmatprep.subr.bf16.mxu0 0
      %2417 = vmatpush1.bf16.msra.mxu0 %v2401
      %2418 = vmatprep.subr.bf16.mxu0 0
      %2419 = vmatpush1.bf16.msra.mxu0 %v2400
      %2420 = vmatprep.subr.bf16.mxu0 0
      %2421 = vmatpush2.bf16.msra.mxu0 0
      %2422 = vmatprep.subr.bf16.mxu0 0
      %2423 = vmatpush2.bf16.msra.mxu0 0
      %2424 = vmatprep.subr.bf16.mxu0 0
      %2425 = vmatpush2.bf16.msra.mxu0 0
      %2426 = vmatprep.subr.bf16.mxu0 0
      %2427 = vmatpush2.bf16.msra.mxu0 0
      %2428 = vmatprep.subr.bf16.mxu0 0
      %2429 = vmatpush2.bf16.msra.mxu0 0
      %2430 = vmatprep.subr.bf16.mxu0 0
      %2431 = vmatpush2.bf16.msra.mxu0 0
      %2432 = vmatprep.subr.bf16.mxu0 0
      %2433 = vmatpush2.bf16.msra.mxu0 0
      %2434 = vmatprep.subr.bf16.mxu0 0
      %2435 = vmatpush2.bf16.msra.mxu0 0
      %2436 = vmatprep.mubr.bf16.mxu0 0
      %2437 = vmatmul.mubr.bf16.gmra.mxu0 %v1280
      %v2438 = vpop.f32.mrf.mxu0
      %v2439 = vadd.f32 %v2390, %v2438
      %v2440 = vpop.f32.mrf.mxu0
      %v2441 = vpop.f32.mrf.mxu0
      %v2442 = vpop.f32.mrf.mxu0
      %2443 = vdwg.mxu0
      %s2444 = scalar_lea.vmem %s982, 48
      %v2445 = vld [vmem:[%s2444] sm:$0xf]
      %v2446 = vld [vmem:[%s2444 + $0x4] sm:$0xf]
      %v2447 = vld [vmem:[%s2444 + $0x8] sm:$0xf]
      %v2448 = vld [vmem:[%s2444 + $0xc] sm:$0xf]
      %s2449 = scalar_lea.vmem %s987, 3
      %v2450 = vld [vmem:[%s2449] sm:$0x1]
      %v2452 = vlaneseq
      %v2453 = vshrl.u32 %v2452, 7
      %v2454 = vsub.s32 0, %v2453
      %v2455 = vrot.slane %v2450, %v2454
      %v2461 = vunpack.c.l.b16 %v2445
      %v2462 = vunpack.c.l.b16 %v2446
      %v2463 = vunpack.c.l.b16 %v2447
      %v2464 = vunpack.c.l.b16 %v2448
      %v2465 = vpack.c.b16 %v2462, %v2461
      %v2466 = vpack.c.b16 %v2464, %v2463
      %2469 = vmatprep.subr.bf16.mxu0 0
      %2470 = vmatpush1.bf16.msra.mxu0 0
      %2471 = vmatprep.subr.bf16.mxu0 0
      %2472 = vmatpush1.bf16.msra.mxu0 0
      %2473 = vmatprep.subr.bf16.mxu0 0
      %2474 = vmatpush1.bf16.msra.mxu0 0
      %2475 = vmatprep.subr.bf16.mxu0 0
      %2476 = vmatpush1.bf16.msra.mxu0 0
      %2477 = vmatprep.subr.bf16.mxu0 0
      %2478 = vmatpush1.bf16.msra.mxu0 0
      %2479 = vmatprep.subr.bf16.mxu0 0
      %2480 = vmatpush1.bf16.msra.mxu0 0
      %2481 = vmatprep.subr.bf16.mxu0 0
      %2482 = vmatpush1.bf16.msra.mxu0 %v2466
      %2483 = vmatprep.subr.bf16.mxu0 0
      %2484 = vmatpush1.bf16.msra.mxu0 %v2465
      %2485 = vmatprep.subr.bf16.mxu0 0
      %2486 = vmatpush2.bf16.msra.mxu0 0
      %2487 = vmatprep.subr.bf16.mxu0 0
      %2488 = vmatpush2.bf16.msra.mxu0 0
      %2489 = vmatprep.subr.bf16.mxu0 0
      %2490 = vmatpush2.bf16.msra.mxu0 0
      %2491 = vmatprep.subr.bf16.mxu0 0
      %2492 = vmatpush2.bf16.msra.mxu0 0
      %2493 = vmatprep.subr.bf16.mxu0 0
      %2494 = vmatpush2.bf16.msra.mxu0 0
      %2495 = vmatprep.subr.bf16.mxu0 0
      %2496 = vmatpush2.bf16.msra.mxu0 0
      %2497 = vmatprep.subr.bf16.mxu0 0
      %2498 = vmatpush2.bf16.msra.mxu0 0
      %2499 = vmatprep.subr.bf16.mxu0 0
      %2500 = vmatpush2.bf16.msra.mxu0 0
      %2501 = vmatprep.mubr.bf16.mxu0 0
      %2502 = vmatmul.mubr.bf16.gmra.mxu0 %v1280
      %v2503 = vpop.f32.mrf.mxu0
      %v2504 = vadd.f32 %v2455, %v2503
      %v2505 = vpop.f32.mrf.mxu0
      %v2506 = vpop.f32.mrf.mxu0
      %v2507 = vpop.f32.mrf.mxu0
      %2508 = vdwg.mxu0
      %v2509 = vpack.c.bf16 %v2374, %v2374
      %v2510 = vpack.c.bf16 %v2439, %v2439
      %v2512 = vsel %vm1450, %v2509, 0
      %v2515 = vsel %vm1450, %v2510, 0
      %2517 = vmatprep.subr.bf16.mxu0 0
      %2518 = vmatpush1.bf16.xpose.msra.mxu0 0
      %2519 = vmatprep.subr.bf16.mxu0 0
      %2520 = vmatpush1.bf16.xpose.msra.mxu0 0
      %2521 = vmatprep.subr.bf16.mxu0 0
      %2522 = vmatpush1.bf16.xpose.msra.mxu0 0
      %2523 = vmatprep.subr.bf16.mxu0 0
      %2524 = vmatpush1.bf16.xpose.msra.mxu0 0
      %2525 = vmatprep.subr.bf16.mxu0 0
      %2526 = vmatpush1.bf16.xpose.msra.mxu0 0
      %2527 = vmatprep.subr.bf16.mxu0 0
      %2528 = vmatpush1.bf16.xpose.msra.mxu0 0
      %2529 = vmatprep.subr.bf16.mxu0 0
      %2530 = vmatpush1.bf16.xpose.msra.mxu0 0
      %2531 = vmatprep.subr.bf16.mxu0 0
      %2532 = vmatpush1.bf16.xpose.msra.mxu0 %v2515
      %2533 = vmatprep.subr.bf16.mxu0 0
      %2534 = vmatpush2.bf16.xpose.msra.mxu0 0
      %2535 = vmatprep.subr.bf16.mxu0 0
      %2536 = vmatpush2.bf16.xpose.msra.mxu0 0
      %2537 = vmatprep.subr.bf16.mxu0 0
      %2538 = vmatpush2.bf16.xpose.msra.mxu0 0
      %2539 = vmatprep.subr.bf16.mxu0 0
      %2540 = vmatpush2.bf16.xpose.msra.mxu0 0
      %2541 = vmatprep.subr.bf16.mxu0 0
      %2542 = vmatpush2.bf16.xpose.msra.mxu0 0
      %2543 = vmatprep.subr.bf16.mxu0 0
      %2544 = vmatpush2.bf16.xpose.msra.mxu0 0
      %2545 = vmatprep.subr.bf16.mxu0 0
      %2546 = vmatpush2.bf16.xpose.msra.mxu0 0
      %2547 = vmatprep.subr.bf16.mxu0 0
      %2548 = vmatpush2.bf16.xpose.msra.mxu0 0
      %2549 = vmatprep.mubr.bf16.mxu0 0
      %2550 = vmatmul.mubr.bf16.gmra.mxu0 %v2512
      %v2551 = vpop.f32.mrf.mxu0
      %v2552 = vadd.f32 0.0, %v2551
      %v2553 = vpop.f32.mrf.mxu0
      %v2554 = vpop.f32.mrf.mxu0
      %v2555 = vpop.f32.mrf.mxu0
      %2556 = vdwg.mxu0
      %v2557 = vmul.f32 %v2552, 0.35355338
      %v2558 = vsel %vm1498, %v2557, -inf
      %2559 = vmax.xlane.f32.xlu0 %v2558
      %v2560 = vpop.xlane.xlu0 %2559
      %v2561 = vsub.f32 %v2557, %v2560
      %v2562 = vmul.f32 %v2561, 1.442695
      %v2563 = vpow.pop %v2562
      %v2564 = vsel %vm1498, %v2563, 0.0
      %2565 = vadd.xlane.f32.xlu0 %v2564
      %v2566 = vpop.xlane.xlu0 %2565
      %v2567 = vrcp.pop %v2566
      %v2568 = vmul.f32 %v2563, %v2567
      %v2569 = vpack.c.bf16 %v2568, %v2568
      %v2570 = vpack.c.bf16 %v2504, %v2504
      %v2572 = vsel %vm1512, %v2569, 0
      %v2575 = vsel %vm1516, %v2570, 0
      %2577 = vmatprep.subr.bf16.mxu0 0
      %2578 = vmatpush1.bf16.msra.mxu0 0
      %2579 = vmatprep.subr.bf16.mxu0 0
      %2580 = vmatpush1.bf16.msra.mxu0 0
      %2581 = vmatprep.subr.bf16.mxu0 0
      %2582 = vmatpush1.bf16.msra.mxu0 0
      %2583 = vmatprep.subr.bf16.mxu0 0
      %2584 = vmatpush1.bf16.msra.mxu0 0
      %2585 = vmatprep.subr.bf16.mxu0 0
      %2586 = vmatpush1.bf16.msra.mxu0 0
      %2587 = vmatprep.subr.bf16.mxu0 0
      %2588 = vmatpush1.bf16.msra.mxu0 0
      %2589 = vmatprep.subr.bf16.mxu0 0
      %2590 = vmatpush1.bf16.msra.mxu0 0
      %2591 = vmatprep.subr.bf16.mxu0 0
      %2592 = vmatpush1.bf16.msra.mxu0 %v2575
      %2593 = vmatprep.subr.bf16.mxu0 0
      %2594 = vmatpush2.bf16.msra.mxu0 0
      %2595 = vmatprep.subr.bf16.mxu0 0
      %2596 = vmatpush2.bf16.msra.mxu0 0
      %2597 = vmatprep.subr.bf16.mxu0 0
      %2598 = vmatpush2.bf16.msra.mxu0 0
      %2599 = vmatprep.subr.bf16.mxu0 0
      %2600 = vmatpush2.bf16.msra.mxu0 0
      %2601 = vmatprep.subr.bf16.mxu0 0
      %2602 = vmatpush2.bf16.msra.mxu0 0
      %2603 = vmatprep.subr.bf16.mxu0 0
      %2604 = vmatpush2.bf16.msra.mxu0 0
      %2605 = vmatprep.subr.bf16.mxu0 0
      %2606 = vmatpush2.bf16.msra.mxu0 0
      %2607 = vmatprep.subr.bf16.mxu0 0
      %2608 = vmatpush2.bf16.msra.mxu0 0
      %2609 = vmatprep.mubr.bf16.mxu0 0
      %2610 = vmatmul.mubr.bf16.gmra.mxu0 %v2572
      %v2611 = vpop.f32.mrf.mxu0
      %v2612 = vadd.f32 0.0, %v2611
      %v2613 = vpop.f32.mrf.mxu0
      %v2614 = vpop.f32.mrf.mxu0
      %v2615 = vpop.f32.mrf.mxu0
      %2616 = vdwg.mxu0
      %v2617 = vpack.c.bf16 %v2612, %v2612
      %s2618 = scalar_lea.vmem %s993, 12
      %v2619 = vld [vmem:[%s2618] sm:$0xf]
      %v2621 = vsel %vm1450, %v2617, 0
      %v2624 = vsel %vm1871, %v2619, 0
      %2626 = vmatprep.subr.bf16.mxu0 0
      %2627 = vmatpush1.bf16.msra.mxu0 0
      %2628 = vmatprep.subr.bf16.mxu0 0
      %2629 = vmatpush1.bf16.msra.mxu0 0
      %2630 = vmatprep.subr.bf16.mxu0 0
      %2631 = vmatpush1.bf16.msra.mxu0 0
      %2632 = vmatprep.subr.bf16.mxu0 0
      %2633 = vmatpush1.bf16.msra.mxu0 0
      %2634 = vmatprep.subr.bf16.mxu0 0
      %2635 = vmatpush1.bf16.msra.mxu0 0
      %2636 = vmatprep.subr.bf16.mxu0 0
      %2637 = vmatpush1.bf16.msra.mxu0 0
      %2638 = vmatprep.subr.bf16.mxu0 0
      %2639 = vmatpush1.bf16.msra.mxu0 0
      %2640 = vmatprep.subr.bf16.mxu0 0
      %2641 = vmatpush1.bf16.msra.mxu0 %v2624
      %2642 = vmatprep.subr.bf16.mxu0 0
      %2643 = vmatpush2.bf16.msra.mxu0 0
      %2644 = vmatprep.subr.bf16.mxu0 0
      %2645 = vmatpush2.bf16.msra.mxu0 0
      %2646 = vmatprep.subr.bf16.mxu0 0
      %2647 = vmatpush2.bf16.msra.mxu0 0
      %2648 = vmatprep.subr.bf16.mxu0 0
      %2649 = vmatpush2.bf16.msra.mxu0 0
      %2650 = vmatprep.subr.bf16.mxu0 0
      %2651 = vmatpush2.bf16.msra.mxu0 0
      %2652 = vmatprep.subr.bf16.mxu0 0
      %2653 = vmatpush2.bf16.msra.mxu0 0
      %2654 = vmatprep.subr.bf16.mxu0 0
      %2655 = vmatpush2.bf16.msra.mxu0 0
      %2656 = vmatprep.subr.bf16.mxu0 0
      %2657 = vmatpush2.bf16.msra.mxu0 0
      %2658 = vmatprep.mubr.bf16.mxu0 0
      %2659 = vmatmul.mubr.bf16.gmra.mxu0 %v2621
      %v2660 = vpop.f32.mrf.mxu0
      %v2661 = vadd.f32 0.0, %v2660
      %v2662 = vpop.f32.mrf.mxu0
      %v2663 = vpop.f32.mrf.mxu0
      %v2664 = vpop.f32.mrf.mxu0
      %2665 = vdwg.mxu0
      %v2666 = vadd.f32 %v2313, %v2661
      %v2667 = vld [vmem:[%s997] sm:$0x1]
      %v2669 = vlaneseq
      %v2670 = vshrl.u32 %v2669, 7
      %v2671 = vsub.s32 0, %v2670
      %v2672 = vrot.slane %v2667, %v2671
      %v2674 = vadd.f32 %v2666, %v2672
      %v2675 = vadd.f32 %v1253, %v2674
      %v2676 = vld [vmem:[%s1017] sm:$0x1]
      %v2677 = vld [vmem:[%s1020] sm:$0x1]
      %vm2678 = vcmask 254976
      %v2679 = vsel %vm2678, %v2675, 0.0
      %2680 = vadd.xlane.f32.xlu0 %v2679
      %v2681 = vpop.xlane.xlu0 %2680
      %v2682 = vrcp.pop 32.0
      %v2683 = vmul.f32 %v2681, %v2682
      %v2684 = vsub.f32 %v2675, %v2683
      %v2685 = vmul.f32 %v2684, %v2684
      %v2686 = vsel %vm2678, %v2685, 0.0
      %2687 = vadd.xlane.f32.xlu0 %v2686
      %v2688 = vpop.xlane.xlu0 %2687
      %v2689 = vmul.f32 %v2688, %v2682
      %v2690 = vadd.f32 %v2689, 1e-05
      %v2691 = vrsqrt.pop %v2690
      %v2692 = vmul.f32 %v2684, %v2691
      %v2694 = vlaneseq
      %v2695 = vshrl.u32 %v2694, 7
      %v2696 = vsub.s32 0, %v2695
      %v2697 = vrot.slane %v2676, %v2696
      %v2699 = vmul.f32 %v2692, %v2697
      %v2701 = vlaneseq
      %v2702 = vshrl.u32 %v2701, 7
      %v2703 = vsub.s32 0, %v2702
      %v2704 = vrot.slane %v2677, %v2703
      %v2706 = vadd.f32 %v2699, %v2704
      %v2707 = vpack.c.bf16 %v2706, %v2706
      %v2708 = vld [vmem:[%s1002] sm:$0xff]
      %v2709 = vld [vmem:[%s1002 + $0x8] sm:$0xff]
      %v2710 = vld [vmem:[%s1002 + $0x10] sm:$0xff]
      %v2711 = vld [vmem:[%s1002 + $0x18] sm:$0xff]
      %v2712 = vld [vmem:[%s1002 + $0x20] sm:$0xff]
      %v2713 = vld [vmem:[%s1002 + $0x28] sm:$0xff]
      %v2714 = vld [vmem:[%s1002 + $0x30] sm:$0xff]
      %v2715 = vld [vmem:[%s1002 + $0x38] sm:$0xff]
      %v2716 = vld [vmem:[%s1002 + $0x40] sm:$0xff]
      %v2717 = vld [vmem:[%s1002 + $0x48] sm:$0xff]
      %v2718 = vld [vmem:[%s1002 + $0x50] sm:$0xff]
      %v2719 = vld [vmem:[%s1002 + $0x58] sm:$0xff]
      %v2720 = vld [vmem:[%s1002 + $0x60] sm:$0xff]
      %v2721 = vld [vmem:[%s1002 + $0x68] sm:$0xff]
      %v2722 = vld [vmem:[%s1002 + $0x70] sm:$0xff]
      %v2723 = vld [vmem:[%s1002 + $0x78] sm:$0xff]
      %v2724 = vld [vmem:[%s1002 + $0x80] sm:$0xff]
      %v2725 = vld [vmem:[%s1002 + $0x88] sm:$0xff]
      %v2726 = vld [vmem:[%s1002 + $0x90] sm:$0xff]
      %v2727 = vld [vmem:[%s1002 + $0x98] sm:$0xff]
      %v2728 = vld [vmem:[%s1002 + $0xa0] sm:$0xff]
      %v2729 = vld [vmem:[%s1002 + $0xa8] sm:$0xff]
      %v2730 = vld [vmem:[%s1002 + $0xb0] sm:$0xff]
      %v2731 = vld [vmem:[%s1002 + $0xb8] sm:$0xff]
      %v2732 = vld [vmem:[%s1002 + $0xc0] sm:$0xff]
      %v2733 = vld [vmem:[%s1002 + $0xc8] sm:$0xff]
      %v2734 = vld [vmem:[%s1002 + $0xd0] sm:$0xff]
      %v2735 = vld [vmem:[%s1002 + $0xd8] sm:$0xff]
      %v2736 = vld [vmem:[%s1002 + $0xe0] sm:$0xff]
      %v2737 = vld [vmem:[%s1002 + $0xe8] sm:$0xff]
      %v2738 = vld [vmem:[%s1002 + $0xf0] sm:$0xff]
      %v2739 = vld [vmem:[%s1002 + $0xf8] sm:$0xff]
      %v2740 = vld [vmem:[%s1006] sm:$0xff]
      %v2741 = vld [vmem:[%s1006 + $0x8] sm:$0xff]
      %v2744 = vlaneseq
      %v2745 = vshrl.u32 %v2744, 7
      %v2746 = vsub.s32 0, %v2745
      %v2747 = vrot.slane %v2740, %v2746
      %v2748 = vlaneseq
      %v2749 = vshrl.u32 %v2748, 7
      %v2750 = vsub.s32 1, %v2749
      %v2751 = vrot.slane %v2740, %v2750
      %v2752 = vlaneseq
      %v2753 = vshrl.u32 %v2752, 7
      %v2754 = vsub.s32 2, %v2753
      %v2755 = vrot.slane %v2740, %v2754
      %v2756 = vlaneseq
      %v2757 = vshrl.u32 %v2756, 7
      %v2758 = vsub.s32 3, %v2757
      %v2759 = vrot.slane %v2740, %v2758
      %v2760 = vlaneseq
      %v2761 = vshrl.u32 %v2760, 7
      %v2762 = vsub.s32 4, %v2761
      %v2763 = vrot.slane %v2740, %v2762
      %v2764 = vlaneseq
      %v2765 = vshrl.u32 %v2764, 7
      %v2766 = vsub.s32 5, %v2765
      %v2767 = vrot.slane %v2740, %v2766
      %v2768 = vlaneseq
      %v2769 = vshrl.u32 %v2768, 7
      %v2770 = vsub.s32 6, %v2769
      %v2771 = vrot.slane %v2740, %v2770
      %v2772 = vlaneseq
      %v2773 = vshrl.u32 %v2772, 7
      %v2774 = vsub.s32 7, %v2773
      %v2775 = vrot.slane %v2740, %v2774
      %v2776 = vlaneseq
      %v2777 = vshrl.u32 %v2776, 7
      %v2778 = vsub.s32 0, %v2777
      %v2779 = vrot.slane %v2741, %v2778
      %v2780 = vlaneseq
      %v2781 = vshrl.u32 %v2780, 7
      %v2782 = vsub.s32 1, %v2781
      %v2783 = vrot.slane %v2741, %v2782
      %v2784 = vlaneseq
      %v2785 = vshrl.u32 %v2784, 7
      %v2786 = vsub.s32 2, %v2785
      %v2787 = vrot.slane %v2741, %v2786
      %v2788 = vlaneseq
      %v2789 = vshrl.u32 %v2788, 7
      %v2790 = vsub.s32 3, %v2789
      %v2791 = vrot.slane %v2741, %v2790
      %v2792 = vlaneseq
      %v2793 = vshrl.u32 %v2792, 7
      %v2794 = vsub.s32 4, %v2793
      %v2795 = vrot.slane %v2741, %v2794
      %v2796 = vlaneseq
      %v2797 = vshrl.u32 %v2796, 7
      %v2798 = vsub.s32 5, %v2797
      %v2799 = vrot.slane %v2741, %v2798
      %v2800 = vlaneseq
      %v2801 = vshrl.u32 %v2800, 7
      %v2802 = vsub.s32 6, %v2801
      %v2803 = vrot.slane %v2741, %v2802
      %v2804 = vlaneseq
      %v2805 = vshrl.u32 %v2804, 7
      %v2806 = vsub.s32 7, %v2805
      %v2807 = vrot.slane %v2741, %v2806
      %v2856 = vunpack.c.l.b16 %v2708
      %v2857 = vunpack.c.h.b16 %v2708
      %v2858 = vunpack.c.l.b16 %v2709
      %v2859 = vunpack.c.h.b16 %v2709
      %v2860 = vunpack.c.l.b16 %v2710
      %v2861 = vunpack.c.h.b16 %v2710
      %v2862 = vunpack.c.l.b16 %v2711
      %v2863 = vunpack.c.h.b16 %v2711
      %v2864 = vunpack.c.l.b16 %v2712
      %v2865 = vunpack.c.h.b16 %v2712
      %v2866 = vunpack.c.l.b16 %v2713
      %v2867 = vunpack.c.h.b16 %v2713
      %v2868 = vunpack.c.l.b16 %v2714
      %v2869 = vunpack.c.h.b16 %v2714
      %v2870 = vunpack.c.l.b16 %v2715
      %v2871 = vunpack.c.h.b16 %v2715
      %v2872 = vunpack.c.l.b16 %v2716
      %v2873 = vunpack.c.h.b16 %v2716
      %v2874 = vunpack.c.l.b16 %v2717
      %v2875 = vunpack.c.h.b16 %v2717
      %v2876 = vunpack.c.l.b16 %v2718
      %v2877 = vunpack.c.h.b16 %v2718
      %v2878 = vunpack.c.l.b16 %v2719
      %v2879 = vunpack.c.h.b16 %v2719
      %v2880 = vunpack.c.l.b16 %v2720
      %v2881 = vunpack.c.h.b16 %v2720
      %v2882 = vunpack.c.l.b16 %v2721
      %v2883 = vunpack.c.h.b16 %v2721
      %v2884 = vunpack.c.l.b16 %v2722
      %v2885 = vunpack.c.h.b16 %v2722
      %v2886 = vunpack.c.l.b16 %v2723
      %v2887 = vunpack.c.h.b16 %v2723
      %v2888 = vunpack.c.l.b16 %v2724
      %v2889 = vunpack.c.h.b16 %v2724
      %v2890 = vunpack.c.l.b16 %v2725
      %v2891 = vunpack.c.h.b16 %v2725
      %v2892 = vunpack.c.l.b16 %v2726
      %v2893 = vunpack.c.h.b16 %v2726
      %v2894 = vunpack.c.l.b16 %v2727
      %v2895 = vunpack.c.h.b16 %v2727
      %v2896 = vunpack.c.l.b16 %v2728
      %v2897 = vunpack.c.h.b16 %v2728
      %v2898 = vunpack.c.l.b16 %v2729
      %v2899 = vunpack.c.h.b16 %v2729
      %v2900 = vunpack.c.l.b16 %v2730
      %v2901 = vunpack.c.h.b16 %v2730
      %v2902 = vunpack.c.l.b16 %v2731
      %v2903 = vunpack.c.h.b16 %v2731
      %v2904 = vunpack.c.l.b16 %v2732
      %v2905 = vunpack.c.h.b16 %v2732
      %v2906 = vunpack.c.l.b16 %v2733
      %v2907 = vunpack.c.h.b16 %v2733
      %v2908 = vunpack.c.l.b16 %v2734
      %v2909 = vunpack.c.h.b16 %v2734
      %v2910 = vunpack.c.l.b16 %v2735
      %v2911 = vunpack.c.h.b16 %v2735
      %v2912 = vunpack.c.l.b16 %v2736
      %v2913 = vunpack.c.h.b16 %v2736
      %v2914 = vunpack.c.l.b16 %v2737
      %v2915 = vunpack.c.h.b16 %v2737
      %v2916 = vunpack.c.l.b16 %v2738
      %v2917 = vunpack.c.h.b16 %v2738
      %v2918 = vunpack.c.l.b16 %v2739
      %v2919 = vunpack.c.h.b16 %v2739
      %v2920 = vpack.c.b16 %v2872, %v2856
      %v2921 = vpack.c.b16 %v2873, %v2857
      %v2922 = vpack.c.b16 %v2874, %v2858
      %v2923 = vpack.c.b16 %v2875, %v2859
      %v2924 = vpack.c.b16 %v2876, %v2860
      %v2925 = vpack.c.b16 %v2877, %v2861
      %v2926 = vpack.c.b16 %v2878, %v2862
      %v2927 = vpack.c.b16 %v2879, %v2863
      %v2928 = vpack.c.b16 %v2880, %v2864
      %v2929 = vpack.c.b16 %v2881, %v2865
      %v2930 = vpack.c.b16 %v2882, %v2866
      %v2931 = vpack.c.b16 %v2883, %v2867
      %v2932 = vpack.c.b16 %v2884, %v2868
      %v2933 = vpack.c.b16 %v2885, %v2869
      %v2934 = vpack.c.b16 %v2886, %v2870
      %v2935 = vpack.c.b16 %v2887, %v2871
      %v2936 = vpack.c.b16 %v2904, %v2888
      %v2937 = vpack.c.b16 %v2905, %v2889
      %v2938 = vpack.c.b16 %v2906, %v2890
      %v2939 = vpack.c.b16 %v2907, %v2891
      %v2940 = vpack.c.b16 %v2908, %v2892
      %v2941 = vpack.c.b16 %v2909, %v2893
      %v2942 = vpack.c.b16 %v2910, %v2894
      %v2943 = vpack.c.b16 %v2911, %v2895
      %v2944 = vpack.c.b16 %v2912, %v2896
      %v2945 = vpack.c.b16 %v2913, %v2897
      %v2946 = vpack.c.b16 %v2914, %v2898
      %v2947 = vpack.c.b16 %v2915, %v2899
      %v2948 = vpack.c.b16 %v2916, %v2900
      %v2949 = vpack.c.b16 %v2917, %v2901
      %v2950 = vpack.c.b16 %v2918, %v2902
      %v2951 = vpack.c.b16 %v2919, %v2903
      %v2985 = vsel %vm1278, %v2707, 0
      %2987 = vmatprep.subr.bf16.mxu0 0
      %2988 = vmatpush1.bf16.msra.mxu0 0
      %2989 = vmatprep.subr.bf16.mxu0 0
      %2990 = vmatpush1.bf16.msra.mxu0 0
      %2991 = vmatprep.subr.bf16.mxu0 0
      %2992 = vmatpush1.bf16.msra.mxu0 0
      %2993 = vmatprep.subr.bf16.mxu0 0
      %2994 = vmatpush1.bf16.msra.mxu0 0
      %2995 = vmatprep.subr.bf16.mxu0 0
      %2996 = vmatpush1.bf16.msra.mxu0 0
      %2997 = vmatprep.subr.bf16.mxu0 0
      %2998 = vmatpush1.bf16.msra.mxu0 0
      %2999 = vmatprep.subr.bf16.mxu0 %v2937
      %3000 = vmatpush1.bf16.msra.mxu0 %v2936
      %3001 = vmatprep.subr.bf16.mxu0 %v2921
      %3002 = vmatpush1.bf16.msra.mxu0 %v2920
      %3003 = vmatprep.subr.bf16.mxu0 0
      %3004 = vmatpush2.bf16.msra.mxu0 0
      %3005 = vmatprep.subr.bf16.mxu0 0
      %3006 = vmatpush2.bf16.msra.mxu0 0
      %3007 = vmatprep.subr.bf16.mxu0 0
      %3008 = vmatpush2.bf16.msra.mxu0 0
      %3009 = vmatprep.subr.bf16.mxu0 0
      %3010 = vmatpush2.bf16.msra.mxu0 0
      %3011 = vmatprep.subr.bf16.mxu0 0
      %3012 = vmatpush2.bf16.msra.mxu0 0
      %3013 = vmatprep.subr.bf16.mxu0 0
      %3014 = vmatpush2.bf16.msra.mxu0 0
      %3015 = vmatprep.subr.bf16.mxu0 0
      %3016 = vmatpush2.bf16.msra.mxu0 0
      %3017 = vmatprep.subr.bf16.mxu0 0
      %3018 = vmatpush2.bf16.msra.mxu0 0
      %3019 = vmatprep.mubr.bf16.mxu0 0
      %3020 = vmatmul.mubr.bf16.gmra.mxu0 %v2985
      %v3021 = vpop.f32.mrf.mxu0
      %v3022 = vadd.f32 %v2747, %v3021
      %v3023 = vpop.f32.mrf.mxu0
      %v3024 = vadd.f32 %v2751, %v3023
      %v3025 = vpop.f32.mrf.mxu0
      %v3026 = vpop.f32.mrf.mxu0
      %3027 = vdwg.mxu0
      %3028 = vmatprep.subr.bf16.mxu0 0
      %3029 = vmatpush1.bf16.msra.mxu0 0
      %3030 = vmatprep.subr.bf16.mxu0 0
      %3031 = vmatpush1.bf16.msra.mxu0 0
      %3032 = vmatprep.subr.bf16.mxu0 0
      %3033 = vmatpush1.bf16.msra.mxu0 0
      %3034 = vmatprep.subr.bf16.mxu0 0
      %3035 = vmatpush1.bf16.msra.mxu0 0
      %3036 = vmatprep.subr.bf16.mxu0 0
      %3037 = vmatpush1.bf16.msra.mxu0 0
      %3038 = vmatprep.subr.bf16.mxu0 0
      %3039 = vmatpush1.bf16.msra.mxu0 0
      %3040 = vmatprep.subr.bf16.mxu0 %v2939
      %3041 = vmatpush1.bf16.msra.mxu0 %v2938
      %3042 = vmatprep.subr.bf16.mxu0 %v2923
      %3043 = vmatpush1.bf16.msra.mxu0 %v2922
      %3044 = vmatprep.subr.bf16.mxu0 0
      %3045 = vmatpush2.bf16.msra.mxu0 0
      %3046 = vmatprep.subr.bf16.mxu0 0
      %3047 = vmatpush2.bf16.msra.mxu0 0
      %3048 = vmatprep.subr.bf16.mxu0 0
      %3049 = vmatpush2.bf16.msra.mxu0 0
      %3050 = vmatprep.subr.bf16.mxu0 0
      %3051 = vmatpush2.bf16.msra.mxu0 0
      %3052 = vmatprep.subr.bf16.mxu0 0
      %3053 = vmatpush2.bf16.msra.mxu0 0
      %3054 = vmatprep.subr.bf16.mxu0 0
      %3055 = vmatpush2.bf16.msra.mxu0 0
      %3056 = vmatprep.subr.bf16.mxu0 0
      %3057 = vmatpush2.bf16.msra.mxu0 0
      %3058 = vmatprep.subr.bf16.mxu0 0
      %3059 = vmatpush2.bf16.msra.mxu0 0
      %3060 = vmatprep.mubr.bf16.mxu0 0
      %3061 = vmatmul.mubr.bf16.gmra.mxu0 %v2985
      %v3062 = vpop.f32.mrf.mxu0
      %v3063 = vadd.f32 %v2755, %v3062
      %v3064 = vpop.f32.mrf.mxu0
      %v3065 = vadd.f32 %v2759, %v3064
      %v3066 = vpop.f32.mrf.mxu0
      %v3067 = vpop.f32.mrf.mxu0
      %3068 = vdwg.mxu0
      %3069 = vmatprep.subr.bf16.mxu0 0
      %3070 = vmatpush1.bf16.msra.mxu0 0
      %3071 = vmatprep.subr.bf16.mxu0 0
      %3072 = vmatpush1.bf16.msra.mxu0 0
      %3073 = vmatprep.subr.bf16.mxu0 0
      %3074 = vmatpush1.bf16.msra.mxu0 0
      %3075 = vmatprep.subr.bf16.mxu0 0
      %3076 = vmatpush1.bf16.msra.mxu0 0
      %3077 = vmatprep.subr.bf16.mxu0 0
      %3078 = vmatpush1.bf16.msra.mxu0 0
      %3079 = vmatprep.subr.bf16.mxu0 0
      %3080 = vmatpush1.bf16.msra.mxu0 0
      %3081 = vmatprep.subr.bf16.mxu0 %v2941
      %3082 = vmatpush1.bf16.msra.mxu0 %v2940
      %3083 = vmatprep.subr.bf16.mxu0 %v2925
      %3084 = vmatpush1.bf16.msra.mxu0 %v2924
      %3085 = vmatprep.subr.bf16.mxu0 0
      %3086 = vmatpush2.bf16.msra.mxu0 0
      %3087 = vmatprep.subr.bf16.mxu0 0
      %3088 = vmatpush2.bf16.msra.mxu0 0
      %3089 = vmatprep.subr.bf16.mxu0 0
      %3090 = vmatpush2.bf16.msra.mxu0 0
      %3091 = vmatprep.subr.bf16.mxu0 0
      %3092 = vmatpush2.bf16.msra.mxu0 0
      %3093 = vmatprep.subr.bf16.mxu0 0
      %3094 = vmatpush2.bf16.msra.mxu0 0
      %3095 = vmatprep.subr.bf16.mxu0 0
      %3096 = vmatpush2.bf16.msra.mxu0 0
      %3097 = vmatprep.subr.bf16.mxu0 0
      %3098 = vmatpush2.bf16.msra.mxu0 0
      %3099 = vmatprep.subr.bf16.mxu0 0
      %3100 = vmatpush2.bf16.msra.mxu0 0
      %3101 = vmatprep.mubr.bf16.mxu0 0
      %3102 = vmatmul.mubr.bf16.gmra.mxu0 %v2985
      %v3103 = vpop.f32.mrf.mxu0
      %v3104 = vadd.f32 %v2763, %v3103
      %v3105 = vpop.f32.mrf.mxu0
      %v3106 = vadd.f32 %v2767, %v3105
      %v3107 = vpop.f32.mrf.mxu0
      %v3108 = vpop.f32.mrf.mxu0
      %3109 = vdwg.mxu0
      %3110 = vmatprep.subr.bf16.mxu0 0
      %3111 = vmatpush1.bf16.msra.mxu0 0
      %3112 = vmatprep.subr.bf16.mxu0 0
      %3113 = vmatpush1.bf16.msra.mxu0 0
      %3114 = vmatprep.subr.bf16.mxu0 0
      %3115 = vmatpush1.bf16.msra.mxu0 0
      %3116 = vmatprep.subr.bf16.mxu0 0
      %3117 = vmatpush1.bf16.msra.mxu0 0
      %3118 = vmatprep.subr.bf16.mxu0 0
      %3119 = vmatpush1.bf16.msra.mxu0 0
      %3120 = vmatprep.subr.bf16.mxu0 0
      %3121 = vmatpush1.bf16.msra.mxu0 0
      %3122 = vmatprep.subr.bf16.mxu0 %v2943
      %3123 = vmatpush1.bf16.msra.mxu0 %v2942
      %3124 = vmatprep.subr.bf16.mxu0 %v2927
      %3125 = vmatpush1.bf16.msra.mxu0 %v2926
      %3126 = vmatprep.subr.bf16.mxu0 0
      %3127 = vmatpush2.bf16.msra.mxu0 0
      %3128 = vmatprep.subr.bf16.mxu0 0
      %3129 = vmatpush2.bf16.msra.mxu0 0
      %3130 = vmatprep.subr.bf16.mxu0 0
      %3131 = vmatpush2.bf16.msra.mxu0 0
      %3132 = vmatprep.subr.bf16.mxu0 0
      %3133 = vmatpush2.bf16.msra.mxu0 0
      %3134 = vmatprep.subr.bf16.mxu0 0
      %3135 = vmatpush2.bf16.msra.mxu0 0
      %3136 = vmatprep.subr.bf16.mxu0 0
      %3137 = vmatpush2.bf16.msra.mxu0 0
      %3138 = vmatprep.subr.bf16.mxu0 0
      %3139 = vmatpush2.bf16.msra.mxu0 0
      %3140 = vmatprep.subr.bf16.mxu0 0
      %3141 = vmatpush2.bf16.msra.mxu0 0
      %3142 = vmatprep.mubr.bf16.mxu0 0
      %3143 = vmatmul.mubr.bf16.gmra.mxu0 %v2985
      %v3144 = vpop.f32.mrf.mxu0
      %v3145 = vadd.f32 %v2771, %v3144
      %v3146 = vpop.f32.mrf.mxu0
      %v3147 = vadd.f32 %v2775, %v3146
      %v3148 = vpop.f32.mrf.mxu0
      %v3149 = vpop.f32.mrf.mxu0
      %3150 = vdwg.mxu0
      %3151 = vmatprep.subr.bf16.mxu0 0
      %3152 = vmatpush1.bf16.msra.mxu0 0
      %3153 = vmatprep.subr.bf16.mxu0 0
      %3154 = vmatpush1.bf16.msra.mxu0 0
      %3155 = vmatprep.subr.bf16.mxu0 0
      %3156 = vmatpush1.bf16.msra.mxu0 0
      %3157 = vmatprep.subr.bf16.mxu0 0
      %3158 = vmatpush1.bf16.msra.mxu0 0
      %3159 = vmatprep.subr.bf16.mxu0 0
      %3160 = vmatpush1.bf16.msra.mxu0 0
      %3161 = vmatprep.subr.bf16.mxu0 0
      %3162 = vmatpush1.bf16.msra.mxu0 0
      %3163 = vmatprep.subr.bf16.mxu0 %v2945
      %3164 = vmatpush1.bf16.msra.mxu0 %v2944
      %3165 = vmatprep.subr.bf16.mxu0 %v2929
      %3166 = vmatpush1.bf16.msra.mxu0 %v2928
      %3167 = vmatprep.subr.bf16.mxu0 0
      %3168 = vmatpush2.bf16.msra.mxu0 0
      %3169 = vmatprep.subr.bf16.mxu0 0
      %3170 = vmatpush2.bf16.msra.mxu0 0
      %3171 = vmatprep.subr.bf16.mxu0 0
      %3172 = vmatpush2.bf16.msra.mxu0 0
      %3173 = vmatprep.subr.bf16.mxu0 0
      %3174 = vmatpush2.bf16.msra.mxu0 0
      %3175 = vmatprep.subr.bf16.mxu0 0
      %3176 = vmatpush2.bf16.msra.mxu0 0
      %3177 = vmatprep.subr.bf16.mxu0 0
      %3178 = vmatpush2.bf16.msra.mxu0 0
      %3179 = vmatprep.subr.bf16.mxu0 0
      %3180 = vmatpush2.bf16.msra.mxu0 0
      %3181 = vmatprep.subr.bf16.mxu0 0
      %3182 = vmatpush2.bf16.msra.mxu0 0
      %3183 = vmatprep.mubr.bf16.mxu0 0
      %3184 = vmatmul.mubr.bf16.gmra.mxu0 %v2985
      %v3185 = vpop.f32.mrf.mxu0
      %v3186 = vadd.f32 %v2779, %v3185
      %v3187 = vpop.f32.mrf.mxu0
      %v3188 = vadd.f32 %v2783, %v3187
      %v3189 = vpop.f32.mrf.mxu0
      %v3190 = vpop.f32.mrf.mxu0
      %3191 = vdwg.mxu0
      %3192 = vmatprep.subr.bf16.mxu0 0
      %3193 = vmatpush1.bf16.msra.mxu0 0
      %3194 = vmatprep.subr.bf16.mxu0 0
      %3195 = vmatpush1.bf16.msra.mxu0 0
      %3196 = vmatprep.subr.bf16.mxu0 0
      %3197 = vmatpush1.bf16.msra.mxu0 0
      %3198 = vmatprep.subr.bf16.mxu0 0
      %3199 = vmatpush1.bf16.msra.mxu0 0
      %3200 = vmatprep.subr.bf16.mxu0 0
      %3201 = vmatpush1.bf16.msra.mxu0 0
      %3202 = vmatprep.subr.bf16.mxu0 0
      %3203 = vmatpush1.bf16.msra.mxu0 0
      %3204 = vmatprep.subr.bf16.mxu0 %v2947
      %3205 = vmatpush1.bf16.msra.mxu0 %v2946
      %3206 = vmatprep.subr.bf16.mxu0 %v2931
      %3207 = vmatpush1.bf16.msra.mxu0 %v2930
      %3208 = vmatprep.subr.bf16.mxu0 0
      %3209 = vmatpush2.bf16.msra.mxu0 0
      %3210 = vmatprep.subr.bf16.mxu0 0
      %3211 = vmatpush2.bf16.msra.mxu0 0
      %3212 = vmatprep.subr.bf16.mxu0 0
      %3213 = vmatpush2.bf16.msra.mxu0 0
      %3214 = vmatprep.subr.bf16.mxu0 0
      %3215 = vmatpush2.bf16.msra.mxu0 0
      %3216 = vmatprep.subr.bf16.mxu0 0
      %3217 = vmatpush2.bf16.msra.mxu0 0
      %3218 = vmatprep.subr.bf16.mxu0 0
      %3219 = vmatpush2.bf16.msra.mxu0 0
      %3220 = vmatprep.subr.bf16.mxu0 0
      %3221 = vmatpush2.bf16.msra.mxu0 0
      %3222 = vmatprep.subr.bf16.mxu0 0
      %3223 = vmatpush2.bf16.msra.mxu0 0
      %3224 = vmatprep.mubr.bf16.mxu0 0
      %3225 = vmatmul.mubr.bf16.gmra.mxu0 %v2985
      %v3226 = vpop.f32.mrf.mxu0
      %v3227 = vadd.f32 %v2787, %v3226
      %v3228 = vpop.f32.mrf.mxu0
      %v3229 = vadd.f32 %v2791, %v3228
      %v3230 = vpop.f32.mrf.mxu0
      %v3231 = vpop.f32.mrf.mxu0
      %3232 = vdwg.mxu0
      %3233 = vmatprep.subr.bf16.mxu0 0
      %3234 = vmatpush1.bf16.msra.mxu0 0
      %3235 = vmatprep.subr.bf16.mxu0 0
      %3236 = vmatpush1.bf16.msra.mxu0 0
      %3237 = vmatprep.subr.bf16.mxu0 0
      %3238 = vmatpush1.bf16.msra.mxu0 0
      %3239 = vmatprep.subr.bf16.mxu0 0
      %3240 = vmatpush1.bf16.msra.mxu0 0
      %3241 = vmatprep.subr.bf16.mxu0 0
      %3242 = vmatpush1.bf16.msra.mxu0 0
      %3243 = vmatprep.subr.bf16.mxu0 0
      %3244 = vmatpush1.bf16.msra.mxu0 0
      %3245 = vmatprep.subr.bf16.mxu0 %v2949
      %3246 = vmatpush1.bf16.msra.mxu0 %v2948
      %3247 = vmatprep.subr.bf16.mxu0 %v2933
      %3248 = vmatpush1.bf16.msra.mxu0 %v2932
      %3249 = vmatprep.subr.bf16.mxu0 0
      %3250 = vmatpush2.bf16.msra.mxu0 0
      %3251 = vmatprep.subr.bf16.mxu0 0
      %3252 = vmatpush2.bf16.msra.mxu0 0
      %3253 = vmatprep.subr.bf16.mxu0 0
      %3254 = vmatpush2.bf16.msra.mxu0 0
      %3255 = vmatprep.subr.bf16.mxu0 0
      %3256 = vmatpush2.bf16.msra.mxu0 0
      %3257 = vmatprep.subr.bf16.mxu0 0
      %3258 = vmatpush2.bf16.msra.mxu0 0
      %3259 = vmatprep.subr.bf16.mxu0 0
      %3260 = vmatpush2.bf16.msra.mxu0 0
      %3261 = vmatprep.subr.bf16.mxu0 0
      %3262 = vmatpush2.bf16.msra.mxu0 0
      %3263 = vmatprep.subr.bf16.mxu0 0
      %3264 = vmatpush2.bf16.msra.mxu0 0
      %3265 = vmatprep.mubr.bf16.mxu0 0
      %3266 = vmatmul.mubr.bf16.gmra.mxu0 %v2985
      %v3267 = vpop.f32.mrf.mxu0
      %v3268 = vadd.f32 %v2795, %v3267
      %v3269 = vpop.f32.mrf.mxu0
      %v3270 = vadd.f32 %v2799, %v3269
      %v3271 = vpop.f32.mrf.mxu0
      %v3272 = vpop.f32.mrf.mxu0
      %3273 = vdwg.mxu0
      %3274 = vmatprep.subr.bf16.mxu0 0
      %3275 = vmatpush1.bf16.msra.mxu0 0
      %3276 = vmatprep.subr.bf16.mxu0 0
      %3277 = vmatpush1.bf16.msra.mxu0 0
      %3278 = vmatprep.subr.bf16.mxu0 0
      %3279 = vmatpush1.bf16.msra.mxu0 0
      %3280 = vmatprep.subr.bf16.mxu0 0
      %3281 = vmatpush1.bf16.msra.mxu0 0
      %3282 = vmatprep.subr.bf16.mxu0 0
      %3283 = vmatpush1.bf16.msra.mxu0 0
      %3284 = vmatprep.subr.bf16.mxu0 0
      %3285 = vmatpush1.bf16.msra.mxu0 0
      %3286 = vmatprep.subr.bf16.mxu0 %v2951
      %3287 = vmatpush1.bf16.msra.mxu0 %v2950
      %3288 = vmatprep.subr.bf16.mxu0 %v2935
      %3289 = vmatpush1.bf16.msra.mxu0 %v2934
      %3290 = vmatprep.subr.bf16.mxu0 0
      %3291 = vmatpush2.bf16.msra.mxu0 0
      %3292 = vmatprep.subr.bf16.mxu0 0
      %3293 = vmatpush2.bf16.msra.mxu0 0
      %3294 = vmatprep.subr.bf16.mxu0 0
      %3295 = vmatpush2.bf16.msra.mxu0 0
      %3296 = vmatprep.subr.bf16.mxu0 0
      %3297 = vmatpush2.bf16.msra.mxu0 0
      %3298 = vmatprep.subr.bf16.mxu0 0
      %3299 = vmatpush2.bf16.msra.mxu0 0
      %3300 = vmatprep.subr.bf16.mxu0 0
      %3301 = vmatpush2.bf16.msra.mxu0 0
      %3302 = vmatprep.subr.bf16.mxu0 0
      %3303 = vmatpush2.bf16.msra.mxu0 0
      %3304 = vmatprep.subr.bf16.mxu0 0
      %3305 = vmatpush2.bf16.msra.mxu0 0
      %3306 = vmatprep.mubr.bf16.mxu0 0
      %3307 = vmatmul.mubr.bf16.gmra.mxu0 %v2985
      %v3308 = vpop.f32.mrf.mxu0
      %v3309 = vadd.f32 %v2803, %v3308
      %v3310 = vpop.f32.mrf.mxu0
      %v3311 = vadd.f32 %v2807, %v3310
      %v3312 = vpop.f32.mrf.mxu0
      %v3313 = vpop.f32.mrf.mxu0
      %3314 = vdwg.mxu0
      %v3315 = vmax.f32 %v3022, 0.0
      %v3316 = vmax.f32 %v3024, 0.0
      %v3317 = vmax.f32 %v3063, 0.0
      %v3318 = vmax.f32 %v3065, 0.0
      %v3319 = vmax.f32 %v3104, 0.0
      %v3320 = vmax.f32 %v3106, 0.0
      %v3321 = vmax.f32 %v3145, 0.0
      %v3322 = vmax.f32 %v3147, 0.0
      %v3323 = vmax.f32 %v3186, 0.0
      %v3324 = vmax.f32 %v3188, 0.0
      %v3325 = vmax.f32 %v3227, 0.0
      %v3326 = vmax.f32 %v3229, 0.0
      %v3327 = vmax.f32 %v3268, 0.0
      %v3328 = vmax.f32 %v3270, 0.0
      %v3329 = vmax.f32 %v3309, 0.0
      %v3330 = vmax.f32 %v3311, 0.0
      %v3331 = vpack.c.bf16 %v3315, %v3315
      %v3332 = vpack.c.bf16 %v3316, %v3316
      %v3333 = vpack.c.bf16 %v3317, %v3317
      %v3334 = vpack.c.bf16 %v3318, %v3318
      %v3335 = vpack.c.bf16 %v3319, %v3319
      %v3336 = vpack.c.bf16 %v3320, %v3320
      %v3337 = vpack.c.bf16 %v3321, %v3321
      %v3338 = vpack.c.bf16 %v3322, %v3322
      %v3339 = vpack.c.bf16 %v3323, %v3323
      %v3340 = vpack.c.bf16 %v3324, %v3324
      %v3341 = vpack.c.bf16 %v3325, %v3325
      %v3342 = vpack.c.bf16 %v3326, %v3326
      %v3343 = vpack.c.bf16 %v3327, %v3327
      %v3344 = vpack.c.bf16 %v3328, %v3328
      %v3345 = vpack.c.bf16 %v3329, %v3329
      %v3346 = vpack.c.bf16 %v3330, %v3330
      %v3347 = vld [vmem:[%s1011] sm:$0xf]
      %v3348 = vld [vmem:[%s1011 + $0x4] sm:$0xf]
      %v3349 = vld [vmem:[%s1011 + $0x8] sm:$0xf]
      %v3350 = vld [vmem:[%s1011 + $0xc] sm:$0xf]
      %v3351 = vld [vmem:[%s1011 + $0x10] sm:$0xf]
      %v3352 = vld [vmem:[%s1011 + $0x14] sm:$0xf]
      %v3353 = vld [vmem:[%s1011 + $0x18] sm:$0xf]
      %v3354 = vld [vmem:[%s1011 + $0x1c] sm:$0xf]
      %v3355 = vld [vmem:[%s1011 + $0x20] sm:$0xf]
      %v3356 = vld [vmem:[%s1011 + $0x24] sm:$0xf]
      %v3357 = vld [vmem:[%s1011 + $0x28] sm:$0xf]
      %v3358 = vld [vmem:[%s1011 + $0x2c] sm:$0xf]
      %v3359 = vld [vmem:[%s1011 + $0x30] sm:$0xf]
      %v3360 = vld [vmem:[%s1011 + $0x34] sm:$0xf]
      %v3361 = vld [vmem:[%s1011 + $0x38] sm:$0xf]
      %v3362 = vld [vmem:[%s1011 + $0x3c] sm:$0xf]
      %v3363 = vld [vmem:[%s1011 + $0x40] sm:$0xf]
      %v3364 = vld [vmem:[%s1011 + $0x44] sm:$0xf]
      %v3365 = vld [vmem:[%s1011 + $0x48] sm:$0xf]
      %v3366 = vld [vmem:[%s1011 + $0x4c] sm:$0xf]
      %v3367 = vld [vmem:[%s1011 + $0x50] sm:$0xf]
      %v3368 = vld [vmem:[%s1011 + $0x54] sm:$0xf]
      %v3369 = vld [vmem:[%s1011 + $0x58] sm:$0xf]
      %v3370 = vld [vmem:[%s1011 + $0x5c] sm:$0xf]
      %v3371 = vld [vmem:[%s1011 + $0x60] sm:$0xf]
      %v3372 = vld [vmem:[%s1011 + $0x64] sm:$0xf]
      %v3373 = vld [vmem:[%s1011 + $0x68] sm:$0xf]
      %v3374 = vld [vmem:[%s1011 + $0x6c] sm:$0xf]
      %v3375 = vld [vmem:[%s1011 + $0x70] sm:$0xf]
      %v3376 = vld [vmem:[%s1011 + $0x74] sm:$0xf]
      %v3377 = vld [vmem:[%s1011 + $0x78] sm:$0xf]
      %v3378 = vld [vmem:[%s1011 + $0x7c] sm:$0xf]
      %v3379 = vld [vmem:[%s1011 + $0x80] sm:$0xf]
      %v3380 = vld [vmem:[%s1011 + $0x84] sm:$0xf]
      %v3381 = vld [vmem:[%s1011 + $0x88] sm:$0xf]
      %v3382 = vld [vmem:[%s1011 + $0x8c] sm:$0xf]
      %v3383 = vld [vmem:[%s1011 + $0x90] sm:$0xf]
      %v3384 = vld [vmem:[%s1011 + $0x94] sm:$0xf]
      %v3385 = vld [vmem:[%s1011 + $0x98] sm:$0xf]
      %v3386 = vld [vmem:[%s1011 + $0x9c] sm:$0xf]
      %v3387 = vld [vmem:[%s1011 + $0xa0] sm:$0xf]
      %v3388 = vld [vmem:[%s1011 + $0xa4] sm:$0xf]
      %v3389 = vld [vmem:[%s1011 + $0xa8] sm:$0xf]
      %v3390 = vld [vmem:[%s1011 + $0xac] sm:$0xf]
      %v3391 = vld [vmem:[%s1011 + $0xb0] sm:$0xf]
      %v3392 = vld [vmem:[%s1011 + $0xb4] sm:$0xf]
      %v3393 = vld [vmem:[%s1011 + $0xb8] sm:$0xf]
      %v3394 = vld [vmem:[%s1011 + $0xbc] sm:$0xf]
      %v3395 = vld [vmem:[%s1011 + $0xc0] sm:$0xf]
      %v3396 = vld [vmem:[%s1011 + $0xc4] sm:$0xf]
      %v3397 = vld [vmem:[%s1011 + $0xc8] sm:$0xf]
      %v3398 = vld [vmem:[%s1011 + $0xcc] sm:$0xf]
      %v3399 = vld [vmem:[%s1011 + $0xd0] sm:$0xf]
      %v3400 = vld [vmem:[%s1011 + $0xd4] sm:$0xf]
      %v3401 = vld [vmem:[%s1011 + $0xd8] sm:$0xf]
      %v3402 = vld [vmem:[%s1011 + $0xdc] sm:$0xf]
      %v3403 = vld [vmem:[%s1011 + $0xe0] sm:$0xf]
      %v3404 = vld [vmem:[%s1011 + $0xe4] sm:$0xf]
      %v3405 = vld [vmem:[%s1011 + $0xe8] sm:$0xf]
      %v3406 = vld [vmem:[%s1011 + $0xec] sm:$0xf]
      %v3407 = vld [vmem:[%s1011 + $0xf0] sm:$0xf]
      %v3408 = vld [vmem:[%s1011 + $0xf4] sm:$0xf]
      %v3409 = vld [vmem:[%s1011 + $0xf8] sm:$0xf]
      %v3410 = vld [vmem:[%s1011 + $0xfc] sm:$0xf]
      %v3411 = vld [vmem:[%s1011 + $0x100] sm:$0xf]
      %v3412 = vld [vmem:[%s1011 + $0x104] sm:$0xf]
      %v3413 = vld [vmem:[%s1011 + $0x108] sm:$0xf]
      %v3414 = vld [vmem:[%s1011 + $0x10c] sm:$0xf]
      %v3415 = vld [vmem:[%s1011 + $0x110] sm:$0xf]
      %v3416 = vld [vmem:[%s1011 + $0x114] sm:$0xf]
      %v3417 = vld [vmem:[%s1011 + $0x118] sm:$0xf]
      %v3418 = vld [vmem:[%s1011 + $0x11c] sm:$0xf]
      %v3419 = vld [vmem:[%s1011 + $0x120] sm:$0xf]
      %v3420 = vld [vmem:[%s1011 + $0x124] sm:$0xf]
      %v3421 = vld [vmem:[%s1011 + $0x128] sm:$0xf]
      %v3422 = vld [vmem:[%s1011 + $0x12c] sm:$0xf]
      %v3423 = vld [vmem:[%s1011 + $0x130] sm:$0xf]
      %v3424 = vld [vmem:[%s1011 + $0x134] sm:$0xf]
      %v3425 = vld [vmem:[%s1011 + $0x138] sm:$0xf]
      %v3426 = vld [vmem:[%s1011 + $0x13c] sm:$0xf]
      %v3427 = vld [vmem:[%s1011 + $0x140] sm:$0xf]
      %v3428 = vld [vmem:[%s1011 + $0x144] sm:$0xf]
      %v3429 = vld [vmem:[%s1011 + $0x148] sm:$0xf]
      %v3430 = vld [vmem:[%s1011 + $0x14c] sm:$0xf]
      %v3431 = vld [vmem:[%s1011 + $0x150] sm:$0xf]
      %v3432 = vld [vmem:[%s1011 + $0x154] sm:$0xf]
      %v3433 = vld [vmem:[%s1011 + $0x158] sm:$0xf]
      %v3434 = vld [vmem:[%s1011 + $0x15c] sm:$0xf]
      %v3435 = vld [vmem:[%s1011 + $0x160] sm:$0xf]
      %v3436 = vld [vmem:[%s1011 + $0x164] sm:$0xf]
      %v3437 = vld [vmem:[%s1011 + $0x168] sm:$0xf]
      %v3438 = vld [vmem:[%s1011 + $0x16c] sm:$0xf]
      %v3439 = vld [vmem:[%s1011 + $0x170] sm:$0xf]
      %v3440 = vld [vmem:[%s1011 + $0x174] sm:$0xf]
      %v3441 = vld [vmem:[%s1011 + $0x178] sm:$0xf]
      %v3442 = vld [vmem:[%s1011 + $0x17c] sm:$0xf]
      %v3443 = vld [vmem:[%s1011 + $0x180] sm:$0xf]
      %v3444 = vld [vmem:[%s1011 + $0x184] sm:$0xf]
      %v3445 = vld [vmem:[%s1011 + $0x188] sm:$0xf]
      %v3446 = vld [vmem:[%s1011 + $0x18c] sm:$0xf]
      %v3447 = vld [vmem:[%s1011 + $0x190] sm:$0xf]
      %v3448 = vld [vmem:[%s1011 + $0x194] sm:$0xf]
      %v3449 = vld [vmem:[%s1011 + $0x198] sm:$0xf]
      %v3450 = vld [vmem:[%s1011 + $0x19c] sm:$0xf]
      %v3451 = vld [vmem:[%s1011 + $0x1a0] sm:$0xf]
      %v3452 = vld [vmem:[%s1011 + $0x1a4] sm:$0xf]
      %v3453 = vld [vmem:[%s1011 + $0x1a8] sm:$0xf]
      %v3454 = vld [vmem:[%s1011 + $0x1ac] sm:$0xf]
      %v3455 = vld [vmem:[%s1011 + $0x1b0] sm:$0xf]
      %v3456 = vld [vmem:[%s1011 + $0x1b4] sm:$0xf]
      %v3457 = vld [vmem:[%s1011 + $0x1b8] sm:$0xf]
      %v3458 = vld [vmem:[%s1011 + $0x1bc] sm:$0xf]
      %v3459 = vld [vmem:[%s1011 + $0x1c0] sm:$0xf]
      %v3460 = vld [vmem:[%s1011 + $0x1c4] sm:$0xf]
      %v3461 = vld [vmem:[%s1011 + $0x1c8] sm:$0xf]
      %v3462 = vld [vmem:[%s1011 + $0x1cc] sm:$0xf]
      %v3463 = vld [vmem:[%s1011 + $0x1d0] sm:$0xf]
      %v3464 = vld [vmem:[%s1011 + $0x1d4] sm:$0xf]
      %v3465 = vld [vmem:[%s1011 + $0x1d8] sm:$0xf]
      %v3466 = vld [vmem:[%s1011 + $0x1dc] sm:$0xf]
      %v3467 = vld [vmem:[%s1011 + $0x1e0] sm:$0xf]
      %v3468 = vld [vmem:[%s1011 + $0x1e4] sm:$0xf]
      %v3469 = vld [vmem:[%s1011 + $0x1e8] sm:$0xf]
      %v3470 = vld [vmem:[%s1011 + $0x1ec] sm:$0xf]
      %v3471 = vld [vmem:[%s1011 + $0x1f0] sm:$0xf]
      %v3472 = vld [vmem:[%s1011 + $0x1f4] sm:$0xf]
      %v3473 = vld [vmem:[%s1011 + $0x1f8] sm:$0xf]
      %v3474 = vld [vmem:[%s1011 + $0x1fc] sm:$0xf]
      %v3475 = vld [vmem:[%s1011 + $0x200] sm:$0xf]
      %v3476 = vld [vmem:[%s1011 + $0x204] sm:$0xf]
      %v3477 = vld [vmem:[%s1011 + $0x208] sm:$0xf]
      %v3478 = vld [vmem:[%s1011 + $0x20c] sm:$0xf]
      %v3479 = vld [vmem:[%s1011 + $0x210] sm:$0xf]
      %v3480 = vld [vmem:[%s1011 + $0x214] sm:$0xf]
      %v3481 = vld [vmem:[%s1011 + $0x218] sm:$0xf]
      %v3482 = vld [vmem:[%s1011 + $0x21c] sm:$0xf]
      %v3483 = vld [vmem:[%s1011 + $0x220] sm:$0xf]
      %v3484 = vld [vmem:[%s1011 + $0x224] sm:$0xf]
      %v3485 = vld [vmem:[%s1011 + $0x228] sm:$0xf]
      %v3486 = vld [vmem:[%s1011 + $0x22c] sm:$0xf]
      %v3487 = vld [vmem:[%s1011 + $0x230] sm:$0xf]
      %v3488 = vld [vmem:[%s1011 + $0x234] sm:$0xf]
      %v3489 = vld [vmem:[%s1011 + $0x238] sm:$0xf]
      %v3490 = vld [vmem:[%s1011 + $0x23c] sm:$0xf]
      %v3491 = vld [vmem:[%s1011 + $0x240] sm:$0xf]
      %v3492 = vld [vmem:[%s1011 + $0x244] sm:$0xf]
      %v3493 = vld [vmem:[%s1011 + $0x248] sm:$0xf]
      %v3494 = vld [vmem:[%s1011 + $0x24c] sm:$0xf]
      %v3495 = vld [vmem:[%s1011 + $0x250] sm:$0xf]
      %v3496 = vld [vmem:[%s1011 + $0x254] sm:$0xf]
      %v3497 = vld [vmem:[%s1011 + $0x258] sm:$0xf]
      %v3498 = vld [vmem:[%s1011 + $0x25c] sm:$0xf]
      %v3499 = vld [vmem:[%s1011 + $0x260] sm:$0xf]
      %v3500 = vld [vmem:[%s1011 + $0x264] sm:$0xf]
      %v3501 = vld [vmem:[%s1011 + $0x268] sm:$0xf]
      %v3502 = vld [vmem:[%s1011 + $0x26c] sm:$0xf]
      %v3503 = vld [vmem:[%s1011 + $0x270] sm:$0xf]
      %v3504 = vld [vmem:[%s1011 + $0x274] sm:$0xf]
      %v3505 = vld [vmem:[%s1011 + $0x278] sm:$0xf]
      %v3506 = vld [vmem:[%s1011 + $0x27c] sm:$0xf]
      %v3507 = vld [vmem:[%s1011 + $0x280] sm:$0xf]
      %v3508 = vld [vmem:[%s1011 + $0x284] sm:$0xf]
      %v3509 = vld [vmem:[%s1011 + $0x288] sm:$0xf]
      %v3510 = vld [vmem:[%s1011 + $0x28c] sm:$0xf]
      %v3511 = vld [vmem:[%s1011 + $0x290] sm:$0xf]
      %v3512 = vld [vmem:[%s1011 + $0x294] sm:$0xf]
      %v3513 = vld [vmem:[%s1011 + $0x298] sm:$0xf]
      %v3514 = vld [vmem:[%s1011 + $0x29c] sm:$0xf]
      %v3515 = vld [vmem:[%s1011 + $0x2a0] sm:$0xf]
      %v3516 = vld [vmem:[%s1011 + $0x2a4] sm:$0xf]
      %v3517 = vld [vmem:[%s1011 + $0x2a8] sm:$0xf]
      %v3518 = vld [vmem:[%s1011 + $0x2ac] sm:$0xf]
      %v3519 = vld [vmem:[%s1011 + $0x2b0] sm:$0xf]
      %v3520 = vld [vmem:[%s1011 + $0x2b4] sm:$0xf]
      %v3521 = vld [vmem:[%s1011 + $0x2b8] sm:$0xf]
      %v3522 = vld [vmem:[%s1011 + $0x2bc] sm:$0xf]
      %v3523 = vld [vmem:[%s1011 + $0x2c0] sm:$0xf]
      %v3524 = vld [vmem:[%s1011 + $0x2c4] sm:$0xf]
      %v3525 = vld [vmem:[%s1011 + $0x2c8] sm:$0xf]
      %v3526 = vld [vmem:[%s1011 + $0x2cc] sm:$0xf]
      %v3527 = vld [vmem:[%s1011 + $0x2d0] sm:$0xf]
      %v3528 = vld [vmem:[%s1011 + $0x2d4] sm:$0xf]
      %v3529 = vld [vmem:[%s1011 + $0x2d8] sm:$0xf]
      %v3530 = vld [vmem:[%s1011 + $0x2dc] sm:$0xf]
      %v3531 = vld [vmem:[%s1011 + $0x2e0] sm:$0xf]
      %v3532 = vld [vmem:[%s1011 + $0x2e4] sm:$0xf]
      %v3533 = vld [vmem:[%s1011 + $0x2e8] sm:$0xf]
      %v3534 = vld [vmem:[%s1011 + $0x2ec] sm:$0xf]
      %v3535 = vld [vmem:[%s1011 + $0x2f0] sm:$0xf]
      %v3536 = vld [vmem:[%s1011 + $0x2f4] sm:$0xf]
      %v3537 = vld [vmem:[%s1011 + $0x2f8] sm:$0xf]
      %v3538 = vld [vmem:[%s1011 + $0x2fc] sm:$0xf]
      %v3539 = vld [vmem:[%s1011 + $0x300] sm:$0xf]
      %v3540 = vld [vmem:[%s1011 + $0x304] sm:$0xf]
      %v3541 = vld [vmem:[%s1011 + $0x308] sm:$0xf]
      %v3542 = vld [vmem:[%s1011 + $0x30c] sm:$0xf]
      %v3543 = vld [vmem:[%s1011 + $0x310] sm:$0xf]
      %v3544 = vld [vmem:[%s1011 + $0x314] sm:$0xf]
      %v3545 = vld [vmem:[%s1011 + $0x318] sm:$0xf]
      %v3546 = vld [vmem:[%s1011 + $0x31c] sm:$0xf]
      %v3547 = vld [vmem:[%s1011 + $0x320] sm:$0xf]
      %v3548 = vld [vmem:[%s1011 + $0x324] sm:$0xf]
      %v3549 = vld [vmem:[%s1011 + $0x328] sm:$0xf]
      %v3550 = vld [vmem:[%s1011 + $0x32c] sm:$0xf]
      %v3551 = vld [vmem:[%s1011 + $0x330] sm:$0xf]
      %v3552 = vld [vmem:[%s1011 + $0x334] sm:$0xf]
      %v3553 = vld [vmem:[%s1011 + $0x338] sm:$0xf]
      %v3554 = vld [vmem:[%s1011 + $0x33c] sm:$0xf]
      %v3555 = vld [vmem:[%s1011 + $0x340] sm:$0xf]
      %v3556 = vld [vmem:[%s1011 + $0x344] sm:$0xf]
      %v3557 = vld [vmem:[%s1011 + $0x348] sm:$0xf]
      %v3558 = vld [vmem:[%s1011 + $0x34c] sm:$0xf]
      %v3559 = vld [vmem:[%s1011 + $0x350] sm:$0xf]
      %v3560 = vld [vmem:[%s1011 + $0x354] sm:$0xf]
      %v3561 = vld [vmem:[%s1011 + $0x358] sm:$0xf]
      %v3562 = vld [vmem:[%s1011 + $0x35c] sm:$0xf]
      %v3563 = vld [vmem:[%s1011 + $0x360] sm:$0xf]
      %v3564 = vld [vmem:[%s1011 + $0x364] sm:$0xf]
      %v3565 = vld [vmem:[%s1011 + $0x368] sm:$0xf]
      %v3566 = vld [vmem:[%s1011 + $0x36c] sm:$0xf]
      %v3567 = vld [vmem:[%s1011 + $0x370] sm:$0xf]
      %v3568 = vld [vmem:[%s1011 + $0x374] sm:$0xf]
      %v3569 = vld [vmem:[%s1011 + $0x378] sm:$0xf]
      %v3570 = vld [vmem:[%s1011 + $0x37c] sm:$0xf]
      %v3571 = vld [vmem:[%s1011 + $0x380] sm:$0xf]
      %v3572 = vld [vmem:[%s1011 + $0x384] sm:$0xf]
      %v3573 = vld [vmem:[%s1011 + $0x388] sm:$0xf]
      %v3574 = vld [vmem:[%s1011 + $0x38c] sm:$0xf]
      %v3575 = vld [vmem:[%s1011 + $0x390] sm:$0xf]
      %v3576 = vld [vmem:[%s1011 + $0x394] sm:$0xf]
      %v3577 = vld [vmem:[%s1011 + $0x398] sm:$0xf]
      %v3578 = vld [vmem:[%s1011 + $0x39c] sm:$0xf]
      %v3579 = vld [vmem:[%s1011 + $0x3a0] sm:$0xf]
      %v3580 = vld [vmem:[%s1011 + $0x3a4] sm:$0xf]
      %v3581 = vld [vmem:[%s1011 + $0x3a8] sm:$0xf]
      %v3582 = vld [vmem:[%s1011 + $0x3ac] sm:$0xf]
      %v3583 = vld [vmem:[%s1011 + $0x3b0] sm:$0xf]
      %v3584 = vld [vmem:[%s1011 + $0x3b4] sm:$0xf]
      %v3585 = vld [vmem:[%s1011 + $0x3b8] sm:$0xf]
      %v3586 = vld [vmem:[%s1011 + $0x3bc] sm:$0xf]
      %v3587 = vld [vmem:[%s1011 + $0x3c0] sm:$0xf]
      %v3588 = vld [vmem:[%s1011 + $0x3c4] sm:$0xf]
      %v3589 = vld [vmem:[%s1011 + $0x3c8] sm:$0xf]
      %v3590 = vld [vmem:[%s1011 + $0x3cc] sm:$0xf]
      %v3591 = vld [vmem:[%s1011 + $0x3d0] sm:$0xf]
      %v3592 = vld [vmem:[%s1011 + $0x3d4] sm:$0xf]
      %v3593 = vld [vmem:[%s1011 + $0x3d8] sm:$0xf]
      %v3594 = vld [vmem:[%s1011 + $0x3dc] sm:$0xf]
      %v3595 = vld [vmem:[%s1011 + $0x3e0] sm:$0xf]
      %v3596 = vld [vmem:[%s1011 + $0x3e4] sm:$0xf]
      %v3597 = vld [vmem:[%s1011 + $0x3e8] sm:$0xf]
      %v3598 = vld [vmem:[%s1011 + $0x3ec] sm:$0xf]
      %v3599 = vld [vmem:[%s1011 + $0x3f0] sm:$0xf]
      %v3600 = vld [vmem:[%s1011 + $0x3f4] sm:$0xf]
      %v3601 = vld [vmem:[%s1011 + $0x3f8] sm:$0xf]
      %v3602 = vld [vmem:[%s1011 + $0x3fc] sm:$0xf]
      %v3603 = vld [vmem:[%s1014] sm:$0x1]
      %v3605 = vlaneseq
      %v3606 = vshrl.u32 %v3605, 7
      %v3607 = vsub.s32 0, %v3606
      %v3608 = vrot.slane %v3603, %v3607
      %v3866 = vunpack.c.l.b16 %v3347
      %v3867 = vunpack.c.l.b16 %v3348
      %v3868 = vunpack.c.l.b16 %v3349
      %v3869 = vunpack.c.l.b16 %v3350
      %v3870 = vunpack.c.l.b16 %v3351
      %v3871 = vunpack.c.l.b16 %v3352
      %v3872 = vunpack.c.l.b16 %v3353
      %v3873 = vunpack.c.l.b16 %v3354
      %v3874 = vunpack.c.l.b16 %v3355
      %v3875 = vunpack.c.l.b16 %v3356
      %v3876 = vunpack.c.l.b16 %v3357
      %v3877 = vunpack.c.l.b16 %v3358
      %v3878 = vunpack.c.l.b16 %v3359
      %v3879 = vunpack.c.l.b16 %v3360
      %v3880 = vunpack.c.l.b16 %v3361
      %v3881 = vunpack.c.l.b16 %v3362
      %v3882 = vunpack.c.l.b16 %v3363
      %v3883 = vunpack.c.l.b16 %v3364
      %v3884 = vunpack.c.l.b16 %v3365
      %v3885 = vunpack.c.l.b16 %v3366
      %v3886 = vunpack.c.l.b16 %v3367
      %v3887 = vunpack.c.l.b16 %v3368
      %v3888 = vunpack.c.l.b16 %v3369
      %v3889 = vunpack.c.l.b16 %v3370
      %v3890 = vunpack.c.l.b16 %v3371
      %v3891 = vunpack.c.l.b16 %v3372
      %v3892 = vunpack.c.l.b16 %v3373
      %v3893 = vunpack.c.l.b16 %v3374
      %v3894 = vunpack.c.l.b16 %v3375
      %v3895 = vunpack.c.l.b16 %v3376
      %v3896 = vunpack.c.l.b16 %v3377
      %v3897 = vunpack.c.l.b16 %v3378
      %v3898 = vunpack.c.l.b16 %v3379
      %v3899 = vunpack.c.l.b16 %v3380
      %v3900 = vunpack.c.l.b16 %v3381
      %v3901 = vunpack.c.l.b16 %v3382
      %v3902 = vunpack.c.l.b16 %v3383
      %v3903 = vunpack.c.l.b16 %v3384
      %v3904 = vunpack.c.l.b16 %v3385
      %v3905 = vunpack.c.l.b16 %v3386
      %v3906 = vunpack.c.l.b16 %v3387
      %v3907 = vunpack.c.l.b16 %v3388
      %v3908 = vunpack.c.l.b16 %v3389
      %v3909 = vunpack.c.l.b16 %v3390
      %v3910 = vunpack.c.l.b16 %v3391
      %v3911 = vunpack.c.l.b16 %v3392
      %v3912 = vunpack.c.l.b16 %v3393
      %v3913 = vunpack.c.l.b16 %v3394
      %v3914 = vunpack.c.l.b16 %v3395
      %v3915 = vunpack.c.l.b16 %v3396
      %v3916 = vunpack.c.l.b16 %v3397
      %v3917 = vunpack.c.l.b16 %v3398
      %v3918 = vunpack.c.l.b16 %v3399
      %v3919 = vunpack.c.l.b16 %v3400
      %v3920 = vunpack.c.l.b16 %v3401
      %v3921 = vunpack.c.l.b16 %v3402
      %v3922 = vunpack.c.l.b16 %v3403
      %v3923 = vunpack.c.l.b16 %v3404
      %v3924 = vunpack.c.l.b16 %v3405
      %v3925 = vunpack.c.l.b16 %v3406
      %v3926 = vunpack.c.l.b16 %v3407
      %v3927 = vunpack.c.l.b16 %v3408
      %v3928 = vunpack.c.l.b16 %v3409
      %v3929 = vunpack.c.l.b16 %v3410
      %v3930 = vunpack.c.l.b16 %v3411
      %v3931 = vunpack.c.l.b16 %v3412
      %v3932 = vunpack.c.l.b16 %v3413
      %v3933 = vunpack.c.l.b16 %v3414
      %v3934 = vunpack.c.l.b16 %v3415
      %v3935 = vunpack.c.l.b16 %v3416
      %v3936 = vunpack.c.l.b16 %v3417
      %v3937 = vunpack.c.l.b16 %v3418
      %v3938 = vunpack.c.l.b16 %v3419
      %v3939 = vunpack.c.l.b16 %v3420
      %v3940 = vunpack.c.l.b16 %v3421
      %v3941 = vunpack.c.l.b16 %v3422
      %v3942 = vunpack.c.l.b16 %v3423
      %v3943 = vunpack.c.l.b16 %v3424
      %v3944 = vunpack.c.l.b16 %v3425
      %v3945 = vunpack.c.l.b16 %v3426
      %v3946 = vunpack.c.l.b16 %v3427
      %v3947 = vunpack.c.l.b16 %v3428
      %v3948 = vunpack.c.l.b16 %v3429
      %v3949 = vunpack.c.l.b16 %v3430
      %v3950 = vunpack.c.l.b16 %v3431
      %v3951 = vunpack.c.l.b16 %v3432
      %v3952 = vunpack.c.l.b16 %v3433
      %v3953 = vunpack.c.l.b16 %v3434
      %v3954 = vunpack.c.l.b16 %v3435
      %v3955 = vunpack.c.l.b16 %v3436
      %v3956 = vunpack.c.l.b16 %v3437
      %v3957 = vunpack.c.l.b16 %v3438
      %v3958 = vunpack.c.l.b16 %v3439
      %v3959 = vunpack.c.l.b16 %v3440
      %v3960 = vunpack.c.l.b16 %v3441
      %v3961 = vunpack.c.l.b16 %v3442
      %v3962 = vunpack.c.l.b16 %v3443
      %v3963 = vunpack.c.l.b16 %v3444
      %v3964 = vunpack.c.l.b16 %v3445
      %v3965 = vunpack.c.l.b16 %v3446
      %v3966 = vunpack.c.l.b16 %v3447
      %v3967 = vunpack.c.l.b16 %v3448
      %v3968 = vunpack.c.l.b16 %v3449
      %v3969 = vunpack.c.l.b16 %v3450
      %v3970 = vunpack.c.l.b16 %v3451
      %v3971 = vunpack.c.l.b16 %v3452
      %v3972 = vunpack.c.l.b16 %v3453
      %v3973 = vunpack.c.l.b16 %v3454
      %v3974 = vunpack.c.l.b16 %v3455
      %v3975 = vunpack.c.l.b16 %v3456
      %v3976 = vunpack.c.l.b16 %v3457
      %v3977 = vunpack.c.l.b16 %v3458
      %v3978 = vunpack.c.l.b16 %v3459
      %v3979 = vunpack.c.l.b16 %v3460
      %v3980 = vunpack.c.l.b16 %v3461
      %v3981 = vunpack.c.l.b16 %v3462
      %v3982 = vunpack.c.l.b16 %v3463
      %v3983 = vunpack.c.l.b16 %v3464
      %v3984 = vunpack.c.l.b16 %v3465
      %v3985 = vunpack.c.l.b16 %v3466
      %v3986 = vunpack.c.l.b16 %v3467
      %v3987 = vunpack.c.l.b16 %v3468
      %v3988 = vunpack.c.l.b16 %v3469
      %v3989 = vunpack.c.l.b16 %v3470
      %v3990 = vunpack.c.l.b16 %v3471
      %v3991 = vunpack.c.l.b16 %v3472
      %v3992 = vunpack.c.l.b16 %v3473
      %v3993 = vunpack.c.l.b16 %v3474
      %v3994 = vunpack.c.l.b16 %v3475
      %v3995 = vunpack.c.l.b16 %v3476
      %v3996 = vunpack.c.l.b16 %v3477
      %v3997 = vunpack.c.l.b16 %v3478
      %v3998 = vunpack.c.l.b16 %v3479
      %v3999 = vunpack.c.l.b16 %v3480
      %v4000 = vunpack.c.l.b16 %v3481
      %v4001 = vunpack.c.l.b16 %v3482
      %v4002 = vunpack.c.l.b16 %v3483
      %v4003 = vunpack.c.l.b16 %v3484
      %v4004 = vunpack.c.l.b16 %v3485
      %v4005 = vunpack.c.l.b16 %v3486
      %v4006 = vunpack.c.l.b16 %v3487
      %v4007 = vunpack.c.l.b16 %v3488
      %v4008 = vunpack.c.l.b16 %v3489
      %v4009 = vunpack.c.l.b16 %v3490
      %v4010 = vunpack.c.l.b16 %v3491
      %v4011 = vunpack.c.l.b16 %v3492
      %v4012 = vunpack.c.l.b16 %v3493
      %v4013 = vunpack.c.l.b16 %v3494
      %v4014 = vunpack.c.l.b16 %v3495
      %v4015 = vunpack.c.l.b16 %v3496
      %v4016 = vunpack.c.l.b16 %v3497
      %v4017 = vunpack.c.l.b16 %v3498
      %v4018 = vunpack.c.l.b16 %v3499
      %v4019 = vunpack.c.l.b16 %v3500
      %v4020 = vunpack.c.l.b16 %v3501
      %v4021 = vunpack.c.l.b16 %v3502
      %v4022 = vunpack.c.l.b16 %v3503
      %v4023 = vunpack.c.l.b16 %v3504
      %v4024 = vunpack.c.l.b16 %v3505
      %v4025 = vunpack.c.l.b16 %v3506
      %v4026 = vunpack.c.l.b16 %v3507
      %v4027 = vunpack.c.l.b16 %v3508
      %v4028 = vunpack.c.l.b16 %v3509
      %v4029 = vunpack.c.l.b16 %v3510
      %v4030 = vunpack.c.l.b16 %v3511
      %v4031 = vunpack.c.l.b16 %v3512
      %v4032 = vunpack.c.l.b16 %v3513
      %v4033 = vunpack.c.l.b16 %v3514
      %v4034 = vunpack.c.l.b16 %v3515
      %v4035 = vunpack.c.l.b16 %v3516
      %v4036 = vunpack.c.l.b16 %v3517
      %v4037 = vunpack.c.l.b16 %v3518
      %v4038 = vunpack.c.l.b16 %v3519
      %v4039 = vunpack.c.l.b16 %v3520
      %v4040 = vunpack.c.l.b16 %v3521
      %v4041 = vunpack.c.l.b16 %v3522
      %v4042 = vunpack.c.l.b16 %v3523
      %v4043 = vunpack.c.l.b16 %v3524
      %v4044 = vunpack.c.l.b16 %v3525
      %v4045 = vunpack.c.l.b16 %v3526
      %v4046 = vunpack.c.l.b16 %v3527
      %v4047 = vunpack.c.l.b16 %v3528
      %v4048 = vunpack.c.l.b16 %v3529
      %v4049 = vunpack.c.l.b16 %v3530
      %v4050 = vunpack.c.l.b16 %v3531
      %v4051 = vunpack.c.l.b16 %v3532
      %v4052 = vunpack.c.l.b16 %v3533
      %v4053 = vunpack.c.l.b16 %v3534
      %v4054 = vunpack.c.l.b16 %v3535
      %v4055 = vunpack.c.l.b16 %v3536
      %v4056 = vunpack.c.l.b16 %v3537
      %v4057 = vunpack.c.l.b16 %v3538
      %v4058 = vunpack.c.l.b16 %v3539
      %v4059 = vunpack.c.l.b16 %v3540
      %v4060 = vunpack.c.l.b16 %v3541
      %v4061 = vunpack.c.l.b16 %v3542
      %v4062 = vunpack.c.l.b16 %v3543
      %v4063 = vunpack.c.l.b16 %v3544
      %v4064 = vunpack.c.l.b16 %v3545
      %v4065 = vunpack.c.l.b16 %v3546
      %v4066 = vunpack.c.l.b16 %v3547
      %v4067 = vunpack.c.l.b16 %v3548
      %v4068 = vunpack.c.l.b16 %v3549
      %v4069 = vunpack.c.l.b16 %v3550
      %v4070 = vunpack.c.l.b16 %v3551
      %v4071 = vunpack.c.l.b16 %v3552
      %v4072 = vunpack.c.l.b16 %v3553
      %v4073 = vunpack.c.l.b16 %v3554
      %v4074 = vunpack.c.l.b16 %v3555
      %v4075 = vunpack.c.l.b16 %v3556
      %v4076 = vunpack.c.l.b16 %v3557
      %v4077 = vunpack.c.l.b16 %v3558
      %v4078 = vunpack.c.l.b16 %v3559
      %v4079 = vunpack.c.l.b16 %v3560
      %v4080 = vunpack.c.l.b16 %v3561
      %v4081 = vunpack.c.l.b16 %v3562
      %v4082 = vunpack.c.l.b16 %v3563
      %v4083 = vunpack.c.l.b16 %v3564
      %v4084 = vunpack.c.l.b16 %v3565
      %v4085 = vunpack.c.l.b16 %v3566
      %v4086 = vunpack.c.l.b16 %v3567
      %v4087 = vunpack.c.l.b16 %v3568
      %v4088 = vunpack.c.l.b16 %v3569
      %v4089 = vunpack.c.l.b16 %v3570
      %v4090 = vunpack.c.l.b16 %v3571
      %v4091 = vunpack.c.l.b16 %v3572
      %v4092 = vunpack.c.l.b16 %v3573
      %v4093 = vunpack.c.l.b16 %v3574
      %v4094 = vunpack.c.l.b16 %v3575
      %v4095 = vunpack.c.l.b16 %v3576
      %v4096 = vunpack.c.l.b16 %v3577
      %v4097 = vunpack.c.l.b16 %v3578
      %v4098 = vunpack.c.l.b16 %v3579
      %v4099 = vunpack.c.l.b16 %v3580
      %v4100 = vunpack.c.l.b16 %v3581
      %v4101 = vunpack.c.l.b16 %v3582
      %v4102 = vunpack.c.l.b16 %v3583
      %v4103 = vunpack.c.l.b16 %v3584
      %v4104 = vunpack.c.l.b16 %v3585
      %v4105 = vunpack.c.l.b16 %v3586
      %v4106 = vunpack.c.l.b16 %v3587
      %v4107 = vunpack.c.l.b16 %v3588
      %v4108 = vunpack.c.l.b16 %v3589
      %v4109 = vunpack.c.l.b16 %v3590
      %v4110 = vunpack.c.l.b16 %v3591
      %v4111 = vunpack.c.l.b16 %v3592
      %v4112 = vunpack.c.l.b16 %v3593
      %v4113 = vunpack.c.l.b16 %v3594
      %v4114 = vunpack.c.l.b16 %v3595
      %v4115 = vunpack.c.l.b16 %v3596
      %v4116 = vunpack.c.l.b16 %v3597
      %v4117 = vunpack.c.l.b16 %v3598
      %v4118 = vunpack.c.l.b16 %v3599
      %v4119 = vunpack.c.l.b16 %v3600
      %v4120 = vunpack.c.l.b16 %v3601
      %v4121 = vunpack.c.l.b16 %v3602
      %v4122 = vpack.c.b16 %v3867, %v3866
      %v4123 = vpack.c.b16 %v3869, %v3868
      %v4124 = vpack.c.b16 %v3871, %v3870
      %v4125 = vpack.c.b16 %v3873, %v3872
      %v4126 = vpack.c.b16 %v3875, %v3874
      %v4127 = vpack.c.b16 %v3877, %v3876
      %v4128 = vpack.c.b16 %v3879, %v3878
      %v4129 = vpack.c.b16 %v3881, %v3880
      %v4130 = vpack.c.b16 %v3883, %v3882
      %v4131 = vpack.c.b16 %v3885, %v3884
      %v4132 = vpack.c.b16 %v3887, %v3886
      %v4133 = vpack.c.b16 %v3889, %v3888
      %v4134 = vpack.c.b16 %v3891, %v3890
      %v4135 = vpack.c.b16 %v3893, %v3892
      %v4136 = vpack.c.b16 %v3895, %v3894
      %v4137 = vpack.c.b16 %v3897, %v3896
      %v4138 = vpack.c.b16 %v3899, %v3898
      %v4139 = vpack.c.b16 %v3901, %v3900
      %v4140 = vpack.c.b16 %v3903, %v3902
      %v4141 = vpack.c.b16 %v3905, %v3904
      %v4142 = vpack.c.b16 %v3907, %v3906
      %v4143 = vpack.c.b16 %v3909, %v3908
      %v4144 = vpack.c.b16 %v3911, %v3910
      %v4145 = vpack.c.b16 %v3913, %v3912
      %v4146 = vpack.c.b16 %v3915, %v3914
      %v4147 = vpack.c.b16 %v3917, %v3916
      %v4148 = vpack.c.b16 %v3919, %v3918
      %v4149 = vpack.c.b16 %v3921, %v3920
      %v4150 = vpack.c.b16 %v3923, %v3922
      %v4151 = vpack.c.b16 %v3925, %v3924
      %v4152 = vpack.c.b16 %v3927, %v3926
      %v4153 = vpack.c.b16 %v3929, %v3928
      %v4154 = vpack.c.b16 %v3931, %v3930
      %v4155 = vpack.c.b16 %v3933, %v3932
      %v4156 = vpack.c.b16 %v3935, %v3934
      %v4157 = vpack.c.b16 %v3937, %v3936
      %v4158 = vpack.c.b16 %v3939, %v3938
      %v4159 = vpack.c.b16 %v3941, %v3940
      %v4160 = vpack.c.b16 %v3943, %v3942
      %v4161 = vpack.c.b16 %v3945, %v3944
      %v4162 = vpack.c.b16 %v3947, %v3946
      %v4163 = vpack.c.b16 %v3949, %v3948
      %v4164 = vpack.c.b16 %v3951, %v3950
      %v4165 = vpack.c.b16 %v3953, %v3952
      %v4166 = vpack.c.b16 %v3955, %v3954
      %v4167 = vpack.c.b16 %v3957, %v3956
      %v4168 = vpack.c.b16 %v3959, %v3958
      %v4169 = vpack.c.b16 %v3961, %v3960
      %v4170 = vpack.c.b16 %v3963, %v3962
      %v4171 = vpack.c.b16 %v3965, %v3964
      %v4172 = vpack.c.b16 %v3967, %v3966
      %v4173 = vpack.c.b16 %v3969, %v3968
      %v4174 = vpack.c.b16 %v3971, %v3970
      %v4175 = vpack.c.b16 %v3973, %v3972
      %v4176 = vpack.c.b16 %v3975, %v3974
      %v4177 = vpack.c.b16 %v3977, %v3976
      %v4178 = vpack.c.b16 %v3979, %v3978
      %v4179 = vpack.c.b16 %v3981, %v3980
      %v4180 = vpack.c.b16 %v3983, %v3982
      %v4181 = vpack.c.b16 %v3985, %v3984
      %v4182 = vpack.c.b16 %v3987, %v3986
      %v4183 = vpack.c.b16 %v3989, %v3988
      %v4184 = vpack.c.b16 %v3991, %v3990
      %v4185 = vpack.c.b16 %v3993, %v3992
      %v4186 = vpack.c.b16 %v3995, %v3994
      %v4187 = vpack.c.b16 %v3997, %v3996
      %v4188 = vpack.c.b16 %v3999, %v3998
      %v4189 = vpack.c.b16 %v4001, %v4000
      %v4190 = vpack.c.b16 %v4003, %v4002
      %v4191 = vpack.c.b16 %v4005, %v4004
      %v4192 = vpack.c.b16 %v4007, %v4006
      %v4193 = vpack.c.b16 %v4009, %v4008
      %v4194 = vpack.c.b16 %v4011, %v4010
      %v4195 = vpack.c.b16 %v4013, %v4012
      %v4196 = vpack.c.b16 %v4015, %v4014
      %v4197 = vpack.c.b16 %v4017, %v4016
      %v4198 = vpack.c.b16 %v4019, %v4018
      %v4199 = vpack.c.b16 %v4021, %v4020
      %v4200 = vpack.c.b16 %v4023, %v4022
      %v4201 = vpack.c.b16 %v4025, %v4024
      %v4202 = vpack.c.b16 %v4027, %v4026
      %v4203 = vpack.c.b16 %v4029, %v4028
      %v4204 = vpack.c.b16 %v4031, %v4030
      %v4205 = vpack.c.b16 %v4033, %v4032
      %v4206 = vpack.c.b16 %v4035, %v4034
      %v4207 = vpack.c.b16 %v4037, %v4036
      %v4208 = vpack.c.b16 %v4039, %v4038
      %v4209 = vpack.c.b16 %v4041, %v4040
      %v4210 = vpack.c.b16 %v4043, %v4042
      %v4211 = vpack.c.b16 %v4045, %v4044
      %v4212 = vpack.c.b16 %v4047, %v4046
      %v4213 = vpack.c.b16 %v4049, %v4048
      %v4214 = vpack.c.b16 %v4051, %v4050
      %v4215 = vpack.c.b16 %v4053, %v4052
      %v4216 = vpack.c.b16 %v4055, %v4054
      %v4217 = vpack.c.b16 %v4057, %v4056
      %v4218 = vpack.c.b16 %v4059, %v4058
      %v4219 = vpack.c.b16 %v4061, %v4060
      %v4220 = vpack.c.b16 %v4063, %v4062
      %v4221 = vpack.c.b16 %v4065, %v4064
      %v4222 = vpack.c.b16 %v4067, %v4066
      %v4223 = vpack.c.b16 %v4069, %v4068
      %v4224 = vpack.c.b16 %v4071, %v4070
      %v4225 = vpack.c.b16 %v4073, %v4072
      %v4226 = vpack.c.b16 %v4075, %v4074
      %v4227 = vpack.c.b16 %v4077, %v4076
      %v4228 = vpack.c.b16 %v4079, %v4078
      %v4229 = vpack.c.b16 %v4081, %v4080
      %v4230 = vpack.c.b16 %v4083, %v4082
      %v4231 = vpack.c.b16 %v4085, %v4084
      %v4232 = vpack.c.b16 %v4087, %v4086
      %v4233 = vpack.c.b16 %v4089, %v4088
      %v4234 = vpack.c.b16 %v4091, %v4090
      %v4235 = vpack.c.b16 %v4093, %v4092
      %v4236 = vpack.c.b16 %v4095, %v4094
      %v4237 = vpack.c.b16 %v4097, %v4096
      %v4238 = vpack.c.b16 %v4099, %v4098
      %v4239 = vpack.c.b16 %v4101, %v4100
      %v4240 = vpack.c.b16 %v4103, %v4102
      %v4241 = vpack.c.b16 %v4105, %v4104
      %v4242 = vpack.c.b16 %v4107, %v4106
      %v4243 = vpack.c.b16 %v4109, %v4108
      %v4244 = vpack.c.b16 %v4111, %v4110
      %v4245 = vpack.c.b16 %v4113, %v4112
      %v4246 = vpack.c.b16 %v4115, %v4114
      %v4247 = vpack.c.b16 %v4117, %v4116
      %v4248 = vpack.c.b16 %v4119, %v4118
      %v4249 = vpack.c.b16 %v4121, %v4120
      %4378 = vmatprep.subr.bf16.mxu0 0
      %4379 = vmatpush1.bf16.msra.mxu0 %v4129
      %4380 = vmatprep.subr.bf16.mxu0 0
      %4381 = vmatpush1.bf16.msra.mxu0 %v4128
      %4382 = vmatprep.subr.bf16.mxu0 0
      %4383 = vmatpush1.bf16.msra.mxu0 %v4127
      %4384 = vmatprep.subr.bf16.mxu0 0
      %4385 = vmatpush1.bf16.msra.mxu0 %v4126
      %4386 = vmatprep.subr.bf16.mxu0 0
      %4387 = vmatpush1.bf16.msra.mxu0 %v4125
      %4388 = vmatprep.subr.bf16.mxu0 0
      %4389 = vmatpush1.bf16.msra.mxu0 %v4124
      %4390 = vmatprep.subr.bf16.mxu0 0
      %4391 = vmatpush1.bf16.msra.mxu0 %v4123
      %4392 = vmatprep.subr.bf16.mxu0 0
      %4393 = vmatpush1.bf16.msra.mxu0 %v4122
      %4394 = vmatprep.subr.bf16.mxu0 0
      %4395 = vmatpush2.bf16.msra.mxu0 %v4137
      %4396 = vmatprep.subr.bf16.mxu0 0
      %4397 = vmatpush2.bf16.msra.mxu0 %v4136
      %4398 = vmatprep.subr.bf16.mxu0 0
      %4399 = vmatpush2.bf16.msra.mxu0 %v4135
      %4400 = vmatprep.subr.bf16.mxu0 0
      %4401 = vmatpush2.bf16.msra.mxu0 %v4134
      %4402 = vmatprep.subr.bf16.mxu0 0
      %4403 = vmatpush2.bf16.msra.mxu0 %v4133
      %4404 = vmatprep.subr.bf16.mxu0 0
      %4405 = vmatpush2.bf16.msra.mxu0 %v4132
      %4406 = vmatprep.subr.bf16.mxu0 0
      %4407 = vmatpush2.bf16.msra.mxu0 %v4131
      %4408 = vmatprep.subr.bf16.mxu0 0
      %4409 = vmatpush2.bf16.msra.mxu0 %v4130
      %4410 = vmatprep.mubr.bf16.mxu0 %v3332
      %4411 = vmatmul.mubr.bf16.gmra.mxu0 %v3331
      %v4412 = vpop.f32.mrf.mxu0
      %v4413 = vadd.f32 %v3608, %v4412
      %v4414 = vpop.f32.mrf.mxu0
      %v4415 = vpop.f32.mrf.mxu0
      %v4416 = vpop.f32.mrf.mxu0
      %4417 = vdwg.mxu0
      %4418 = vmatprep.subr.bf16.mxu0 0
      %4419 = vmatpush1.bf16.msra.mxu0 %v4145
      %4420 = vmatprep.subr.bf16.mxu0 0
      %4421 = vmatpush1.bf16.msra.mxu0 %v4144
      %4422 = vmatprep.subr.bf16.mxu0 0
      %4423 = vmatpush1.bf16.msra.mxu0 %v4143
      %4424 = vmatprep.subr.bf16.mxu0 0
      %4425 = vmatpush1.bf16.msra.mxu0 %v4142
      %4426 = vmatprep.subr.bf16.mxu0 0
      %4427 = vmatpush1.bf16.msra.mxu0 %v4141
      %4428 = vmatprep.subr.bf16.mxu0 0
      %4429 = vmatpush1.bf16.msra.mxu0 %v4140
      %4430 = vmatprep.subr.bf16.mxu0 0
      %4431 = vmatpush1.bf16.msra.mxu0 %v4139
      %4432 = vmatprep.subr.bf16.mxu0 0
      %4433 = vmatpush1.bf16.msra.mxu0 %v4138
      %4434 = vmatprep.subr.bf16.mxu0 0
      %4435 = vmatpush2.bf16.msra.mxu0 %v4153
      %4436 = vmatprep.subr.bf16.mxu0 0
      %4437 = vmatpush2.bf16.msra.mxu0 %v4152
      %4438 = vmatprep.subr.bf16.mxu0 0
      %4439 = vmatpush2.bf16.msra.mxu0 %v4151
      %4440 = vmatprep.subr.bf16.mxu0 0
      %4441 = vmatpush2.bf16.msra.mxu0 %v4150
      %4442 = vmatprep.subr.bf16.mxu0 0
      %4443 = vmatpush2.bf16.msra.mxu0 %v4149
      %4444 = vmatprep.subr.bf16.mxu0 0
      %4445 = vmatpush2.bf16.msra.mxu0 %v4148
      %4446 = vmatprep.subr.bf16.mxu0 0
      %4447 = vmatpush2.bf16.msra.mxu0 %v4147
      %4448 = vmatprep.subr.bf16.mxu0 0
      %4449 = vmatpush2.bf16.msra.mxu0 %v4146
      %4450 = vmatprep.mubr.bf16.mxu0 %v3334
      %4451 = vmatmul.mubr.bf16.gmra.mxu0 %v3333
      %v4452 = vpop.f32.mrf.mxu0
      %v4453 = vadd.f32 %v4413, %v4452
      %v4454 = vpop.f32.mrf.mxu0
      %v4455 = vpop.f32.mrf.mxu0
      %v4456 = vpop.f32.mrf.mxu0
      %4457 = vdwg.mxu0
      %4458 = vmatprep.subr.bf16.mxu0 0
      %4459 = vmatpush1.bf16.msra.mxu0 %v4161
      %4460 = vmatprep.subr.bf16.mxu0 0
      %4461 = vmatpush1.bf16.msra.mxu0 %v4160
      %4462 = vmatprep.subr.bf16.mxu0 0
      %4463 = vmatpush1.bf16.msra.mxu0 %v4159
      %4464 = vmatprep.subr.bf16.mxu0 0
      %4465 = vmatpush1.bf16.msra.mxu0 %v4158
      %4466 = vmatprep.subr.bf16.mxu0 0
      %4467 = vmatpush1.bf16.msra.mxu0 %v4157
      %4468 = vmatprep.subr.bf16.mxu0 0
      %4469 = vmatpush1.bf16.msra.mxu0 %v4156
      %4470 = vmatprep.subr.bf16.mxu0 0
      %4471 = vmatpush1.bf16.msra.mxu0 %v4155
      %4472 = vmatprep.subr.bf16.mxu0 0
      %4473 = vmatpush1.bf16.msra.mxu0 %v4154
      %4474 = vmatprep.subr.bf16.mxu0 0
      %4475 = vmatpush2.bf16.msra.mxu0 %v4169
      %4476 = vmatprep.subr.bf16.mxu0 0
      %4477 = vmatpush2.bf16.msra.mxu0 %v4168
      %4478 = vmatprep.subr.bf16.mxu0 0
      %4479 = vmatpush2.bf16.msra.mxu0 %v4167
      %4480 = vmatprep.subr.bf16.mxu0 0
      %4481 = vmatpush2.bf16.msra.mxu0 %v4166
      %4482 = vmatprep.subr.bf16.mxu0 0
      %4483 = vmatpush2.bf16.msra.mxu0 %v4165
      %4484 = vmatprep.subr.bf16.mxu0 0
      %4485 = vmatpush2.bf16.msra.mxu0 %v4164
      %4486 = vmatprep.subr.bf16.mxu0 0
      %4487 = vmatpush2.bf16.msra.mxu0 %v4163
      %4488 = vmatprep.subr.bf16.mxu0 0
      %4489 = vmatpush2.bf16.msra.mxu0 %v4162
      %4490 = vmatprep.mubr.bf16.mxu0 %v3336
      %4491 = vmatmul.mubr.bf16.gmra.mxu0 %v3335
      %v4492 = vpop.f32.mrf.mxu0
      %v4493 = vadd.f32 %v4453, %v4492
      %v4494 = vpop.f32.mrf.mxu0
      %v4495 = vpop.f32.mrf.mxu0
      %v4496 = vpop.f32.mrf.mxu0
      %4497 = vdwg.mxu0
      %4498 = vmatprep.subr.bf16.mxu0 0
      %4499 = vmatpush1.bf16.msra.mxu0 %v4177
      %4500 = vmatprep.subr.bf16.mxu0 0
      %4501 = vmatpush1.bf16.msra.mxu0 %v4176
      %4502 = vmatprep.subr.bf16.mxu0 0
      %4503 = vmatpush1.bf16.msra.mxu0 %v4175
      %4504 = vmatprep.subr.bf16.mxu0 0
      %4505 = vmatpush1.bf16.msra.mxu0 %v4174
      %4506 = vmatprep.subr.bf16.mxu0 0
      %4507 = vmatpush1.bf16.msra.mxu0 %v4173
      %4508 = vmatprep.subr.bf16.mxu0 0
      %4509 = vmatpush1.bf16.msra.mxu0 %v4172
      %4510 = vmatprep.subr.bf16.mxu0 0
      %4511 = vmatpush1.bf16.msra.mxu0 %v4171
      %4512 = vmatprep.subr.bf16.mxu0 0
      %4513 = vmatpush1.bf16.msra.mxu0 %v4170
      %4514 = vmatprep.subr.bf16.mxu0 0
      %4515 = vmatpush2.bf16.msra.mxu0 %v4185
      %4516 = vmatprep.subr.bf16.mxu0 0
      %4517 = vmatpush2.bf16.msra.mxu0 %v4184
      %4518 = vmatprep.subr.bf16.mxu0 0
      %4519 = vmatpush2.bf16.msra.mxu0 %v4183
      %4520 = vmatprep.subr.bf16.mxu0 0
      %4521 = vmatpush2.bf16.msra.mxu0 %v4182
      %4522 = vmatprep.subr.bf16.mxu0 0
      %4523 = vmatpush2.bf16.msra.mxu0 %v4181
      %4524 = vmatprep.subr.bf16.mxu0 0
      %4525 = vmatpush2.bf16.msra.mxu0 %v4180
      %4526 = vmatprep.subr.bf16.mxu0 0
      %4527 = vmatpush2.bf16.msra.mxu0 %v4179
      %4528 = vmatprep.subr.bf16.mxu0 0
      %4529 = vmatpush2.bf16.msra.mxu0 %v4178
      %4530 = vmatprep.mubr.bf16.mxu0 %v3338
      %4531 = vmatmul.mubr.bf16.gmra.mxu0 %v3337
      %v4532 = vpop.f32.mrf.mxu0
      %v4533 = vadd.f32 %v4493, %v4532
      %v4534 = vpop.f32.mrf.mxu0
      %v4535 = vpop.f32.mrf.mxu0
      %v4536 = vpop.f32.mrf.mxu0
      %4537 = vdwg.mxu0
      %4538 = vmatprep.subr.bf16.mxu0 0
      %4539 = vmatpush1.bf16.msra.mxu0 %v4193
      %4540 = vmatprep.subr.bf16.mxu0 0
      %4541 = vmatpush1.bf16.msra.mxu0 %v4192
      %4542 = vmatprep.subr.bf16.mxu0 0
      %4543 = vmatpush1.bf16.msra.mxu0 %v4191
      %4544 = vmatprep.subr.bf16.mxu0 0
      %4545 = vmatpush1.bf16.msra.mxu0 %v4190
      %4546 = vmatprep.subr.bf16.mxu0 0
      %4547 = vmatpush1.bf16.msra.mxu0 %v4189
      %4548 = vmatprep.subr.bf16.mxu0 0
      %4549 = vmatpush1.bf16.msra.mxu0 %v4188
      %4550 = vmatprep.subr.bf16.mxu0 0
      %4551 = vmatpush1.bf16.msra.mxu0 %v4187
      %4552 = vmatprep.subr.bf16.mxu0 0
      %4553 = vmatpush1.bf16.msra.mxu0 %v4186
      %4554 = vmatprep.subr.bf16.mxu0 0
      %4555 = vmatpush2.bf16.msra.mxu0 %v4201
      %4556 = vmatprep.subr.bf16.mxu0 0
      %4557 = vmatpush2.bf16.msra.mxu0 %v4200
      %4558 = vmatprep.subr.bf16.mxu0 0
      %4559 = vmatpush2.bf16.msra.mxu0 %v4199
      %4560 = vmatprep.subr.bf16.mxu0 0
      %4561 = vmatpush2.bf16.msra.mxu0 %v4198
      %4562 = vmatprep.subr.bf16.mxu0 0
      %4563 = vmatpush2.bf16.msra.mxu0 %v4197
      %4564 = vmatprep.subr.bf16.mxu0 0
      %4565 = vmatpush2.bf16.msra.mxu0 %v4196
      %4566 = vmatprep.subr.bf16.mxu0 0
      %4567 = vmatpush2.bf16.msra.mxu0 %v4195
      %4568 = vmatprep.subr.bf16.mxu0 0
      %4569 = vmatpush2.bf16.msra.mxu0 %v4194
      %4570 = vmatprep.mubr.bf16.mxu0 %v3340
      %4571 = vmatmul.mubr.bf16.gmra.mxu0 %v3339
      %v4572 = vpop.f32.mrf.mxu0
      %v4573 = vadd.f32 %v4533, %v4572
      %v4574 = vpop.f32.mrf.mxu0
      %v4575 = vpop.f32.mrf.mxu0
      %v4576 = vpop.f32.mrf.mxu0
      %4577 = vdwg.mxu0
      %4578 = vmatprep.subr.bf16.mxu0 0
      %4579 = vmatpush1.bf16.msra.mxu0 %v4209
      %4580 = vmatprep.subr.bf16.mxu0 0
      %4581 = vmatpush1.bf16.msra.mxu0 %v4208
      %4582 = vmatprep.subr.bf16.mxu0 0
      %4583 = vmatpush1.bf16.msra.mxu0 %v4207
      %4584 = vmatprep.subr.bf16.mxu0 0
      %4585 = vmatpush1.bf16.msra.mxu0 %v4206
      %4586 = vmatprep.subr.bf16.mxu0 0
      %4587 = vmatpush1.bf16.msra.mxu0 %v4205
      %4588 = vmatprep.subr.bf16.mxu0 0
      %4589 = vmatpush1.bf16.msra.mxu0 %v4204
      %4590 = vmatprep.subr.bf16.mxu0 0
      %4591 = vmatpush1.bf16.msra.mxu0 %v4203
      %4592 = vmatprep.subr.bf16.mxu0 0
      %4593 = vmatpush1.bf16.msra.mxu0 %v4202
      %4594 = vmatprep.subr.bf16.mxu0 0
      %4595 = vmatpush2.bf16.msra.mxu0 %v4217
      %4596 = vmatprep.subr.bf16.mxu0 0
      %4597 = vmatpush2.bf16.msra.mxu0 %v4216
      %4598 = vmatprep.subr.bf16.mxu0 0
      %4599 = vmatpush2.bf16.msra.mxu0 %v4215
      %4600 = vmatprep.subr.bf16.mxu0 0
      %4601 = vmatpush2.bf16.msra.mxu0 %v4214
      %4602 = vmatprep.subr.bf16.mxu0 0
      %4603 = vmatpush2.bf16.msra.mxu0 %v4213
      %4604 = vmatprep.subr.bf16.mxu0 0
      %4605 = vmatpush2.bf16.msra.mxu0 %v4212
      %4606 = vmatprep.subr.bf16.mxu0 0
      %4607 = vmatpush2.bf16.msra.mxu0 %v4211
      %4608 = vmatprep.subr.bf16.mxu0 0
      %4609 = vmatpush2.bf16.msra.mxu0 %v4210
      %4610 = vmatprep.mubr.bf16.mxu0 %v3342
      %4611 = vmatmul.mubr.bf16.gmra.mxu0 %v3341
      %v4612 = vpop.f32.mrf.mxu0
      %v4613 = vadd.f32 %v4573, %v4612
      %v4614 = vpop.f32.mrf.mxu0
      %v4615 = vpop.f32.mrf.mxu0
      %v4616 = vpop.f32.mrf.mxu0
      %4617 = vdwg.mxu0
      %4618 = vmatprep.subr.bf16.mxu0 0
      %4619 = vmatpush1.bf16.msra.mxu0 %v4225
      %4620 = vmatprep.subr.bf16.mxu0 0
      %4621 = vmatpush1.bf16.msra.mxu0 %v4224
      %4622 = vmatprep.subr.bf16.mxu0 0
      %4623 = vmatpush1.bf16.msra.mxu0 %v4223
      %4624 = vmatprep.subr.bf16.mxu0 0
      %4625 = vmatpush1.bf16.msra.mxu0 %v4222
      %4626 = vmatprep.subr.bf16.mxu0 0
      %4627 = vmatpush1.bf16.msra.mxu0 %v4221
      %4628 = vmatprep.subr.bf16.mxu0 0
      %4629 = vmatpush1.bf16.msra.mxu0 %v4220
      %4630 = vmatprep.subr.bf16.mxu0 0
      %4631 = vmatpush1.bf16.msra.mxu0 %v4219
      %4632 = vmatprep.subr.bf16.mxu0 0
      %4633 = vmatpush1.bf16.msra.mxu0 %v4218
      %4634 = vmatprep.subr.bf16.mxu0 0
      %4635 = vmatpush2.bf16.msra.mxu0 %v4233
      %4636 = vmatprep.subr.bf16.mxu0 0
      %4637 = vmatpush2.bf16.msra.mxu0 %v4232
      %4638 = vmatprep.subr.bf16.mxu0 0
      %4639 = vmatpush2.bf16.msra.mxu0 %v4231
      %4640 = vmatprep.subr.bf16.mxu0 0
      %4641 = vmatpush2.bf16.msra.mxu0 %v4230
      %4642 = vmatprep.subr.bf16.mxu0 0
      %4643 = vmatpush2.bf16.msra.mxu0 %v4229
      %4644 = vmatprep.subr.bf16.mxu0 0
      %4645 = vmatpush2.bf16.msra.mxu0 %v4228
      %4646 = vmatprep.subr.bf16.mxu0 0
      %4647 = vmatpush2.bf16.msra.mxu0 %v4227
      %4648 = vmatprep.subr.bf16.mxu0 0
      %4649 = vmatpush2.bf16.msra.mxu0 %v4226
      %4650 = vmatprep.mubr.bf16.mxu0 %v3344
      %4651 = vmatmul.mubr.bf16.gmra.mxu0 %v3343
      %v4652 = vpop.f32.mrf.mxu0
      %v4653 = vadd.f32 %v4613, %v4652
      %v4654 = vpop.f32.mrf.mxu0
      %v4655 = vpop.f32.mrf.mxu0
      %v4656 = vpop.f32.mrf.mxu0
      %4657 = vdwg.mxu0
      %4658 = vmatprep.subr.bf16.mxu0 0
      %4659 = vmatpush1.bf16.msra.mxu0 %v4241
      %4660 = vmatprep.subr.bf16.mxu0 0
      %4661 = vmatpush1.bf16.msra.mxu0 %v4240
      %4662 = vmatprep.subr.bf16.mxu0 0
      %4663 = vmatpush1.bf16.msra.mxu0 %v4239
      %4664 = vmatprep.subr.bf16.mxu0 0
      %4665 = vmatpush1.bf16.msra.mxu0 %v4238
      %4666 = vmatprep.subr.bf16.mxu0 0
      %4667 = vmatpush1.bf16.msra.mxu0 %v4237
      %4668 = vmatprep.subr.bf16.mxu0 0
      %4669 = vmatpush1.bf16.msra.mxu0 %v4236
      %4670 = vmatprep.subr.bf16.mxu0 0
      %4671 = vmatpush1.bf16.msra.mxu0 %v4235
      %4672 = vmatprep.subr.bf16.mxu0 0
      %4673 = vmatpush1.bf16.msra.mxu0 %v4234
      %4674 = vmatprep.subr.bf16.mxu0 0
      %4675 = vmatpush2.bf16.msra.mxu0 %v4249
      %4676 = vmatprep.subr.bf16.mxu0 0
      %4677 = vmatpush2.bf16.msra.mxu0 %v4248
      %4678 = vmatprep.subr.bf16.mxu0 0
      %4679 = vmatpush2.bf16.msra.mxu0 %v4247
      %4680 = vmatprep.subr.bf16.mxu0 0
      %4681 = vmatpush2.bf16.msra.mxu0 %v4246
      %4682 = vmatprep.subr.bf16.mxu0 0
      %4683 = vmatpush2.bf16.msra.mxu0 %v4245
      %4684 = vmatprep.subr.bf16.mxu0 0
      %4685 = vmatpush2.bf16.msra.mxu0 %v4244
      %4686 = vmatprep.subr.bf16.mxu0 0
      %4687 = vmatpush2.bf16.msra.mxu0 %v4243
      %4688 = vmatprep.subr.bf16.mxu0 0
      %4689 = vmatpush2.bf16.msra.mxu0 %v4242
      %4690 = vmatprep.mubr.bf16.mxu0 %v3346
      %4691 = vmatmul.mubr.bf16.gmra.mxu0 %v3345
      %v4692 = vpop.f32.mrf.mxu0
      %v4693 = vadd.f32 %v4653, %v4692
      %v4694 = vpop.f32.mrf.mxu0
      %v4695 = vpop.f32.mrf.mxu0
      %v4696 = vpop.f32.mrf.mxu0
      %4697 = vdwg.mxu0
      %v4698 = vadd.f32 %v2706, %v4693
      %v4699 = vld [vmem:[%s1023] sm:$0x1]
      %v4700 = vld [vmem:[%s1026] sm:$0x1]
      %v4701 = vsel %vm2678, %v4698, 0.0
      %4702 = vadd.xlane.f32.xlu0 %v4701
      %v4703 = vpop.xlane.xlu0 %4702
      %v4704 = vmul.f32 %v4703, %v2682
      %v4705 = vsub.f32 %v4698, %v4704
      %v4706 = vmul.f32 %v4705, %v4705
      %v4707 = vsel %vm2678, %v4706, 0.0
      %4708 = vadd.xlane.f32.xlu0 %v4707
      %v4709 = vpop.xlane.xlu0 %4708
      %v4710 = vmul.f32 %v4709, %v2682
      %v4711 = vadd.f32 %v4710, 1e-05
      %v4712 = vrsqrt.pop %v4711
      %v4713 = vmul.f32 %v4705, %v4712
      %v4715 = vlaneseq
      %v4716 = vshrl.u32 %v4715, 7
      %v4717 = vsub.s32 0, %v4716
      %v4718 = vrot.slane %v4699, %v4717
      %v4720 = vmul.f32 %v4713, %v4718
      %v4722 = vlaneseq
      %v4723 = vshrl.u32 %v4722, 7
      %v4724 = vsub.s32 0, %v4723
      %v4725 = vrot.slane %v4700, %v4724
      %v4727 = vadd.f32 %v4720, %v4725
      %4728 = vst.msk [vmem:[#allocation2] sm:$0x3] %vm2678, %v4727
      %p4729 = scmp.eq.s32.totalorder %s38, 1
      // Predicated region
      $region125: #{tft_forward.1} parent=119 // pred_check
        %p4730 = pneg %p4729
      $region126: #{tft_forward.1} parent=119 // pred_check_branch
        %4732 = sbr.rel (%p4730) target = $region128
      $region127: #{tft_forward.1} parent=119 // pred_region
        %v4733 = vpack.c.bf16 %v4727, %v4727
        %v4734 = vld [vmem:[%s23] sm:$0xf]
        %v4735 = vld [vmem:[%s23 + $0x4] sm:$0xf]
        %v4736 = vld [vmem:[%s23 + $0x8] sm:$0xf]
        %v4737 = vld [vmem:[%s23 + $0xc] sm:$0xf]
        %v4738 = vld [vmem:[#allocation3] sm:$0x1]
        %v4740 = vlaneseq
        %v4741 = vshrl.u32 %v4740, 7
        %v4742 = vsub.s32 0, %v4741
        %v4743 = vrot.slane %v4738, %v4742
        %v4749 = vunpack.c.l.b16 %v4734
        %v4750 = vunpack.c.l.b16 %v4735
        %v4751 = vunpack.c.l.b16 %v4736
        %v4752 = vunpack.c.l.b16 %v4737
        %v4753 = vpack.c.b16 %v4750, %v4749
        %v4754 = vpack.c.b16 %v4752, %v4751
        %v4758 = vsel %vm1278, %v4733, 0
        %4760 = vmatprep.subr.bf16.mxu0 0
        %4761 = vmatpush1.bf16.msra.mxu0 0
        %4762 = vmatprep.subr.bf16.mxu0 0
        %4763 = vmatpush1.bf16.msra.mxu0 0
        %4764 = vmatprep.subr.bf16.mxu0 0
        %4765 = vmatpush1.bf16.msra.mxu0 0
        %4766 = vmatprep.subr.bf16.mxu0 0
        %4767 = vmatpush1.bf16.msra.mxu0 0
        %4768 = vmatprep.subr.bf16.mxu0 0
        %4769 = vmatpush1.bf16.msra.mxu0 0
        %4770 = vmatprep.subr.bf16.mxu0 0
        %4771 = vmatpush1.bf16.msra.mxu0 0
        %4772 = vmatprep.subr.bf16.mxu0 0
        %4773 = vmatpush1.bf16.msra.mxu0 %v4754
        %4774 = vmatprep.subr.bf16.mxu0 0
        %4775 = vmatpush1.bf16.msra.mxu0 %v4753
        %4776 = vmatprep.subr.bf16.mxu0 0
        %4777 = vmatpush2.bf16.msra.mxu0 0
        %4778 = vmatprep.subr.bf16.mxu0 0
        %4779 = vmatpush2.bf16.msra.mxu0 0
        %4780 = vmatprep.subr.bf16.mxu0 0
        %4781 = vmatpush2.bf16.msra.mxu0 0
        %4782 = vmatprep.subr.bf16.mxu0 0
        %4783 = vmatpush2.bf16.msra.mxu0 0
        %4784 = vmatprep.subr.bf16.mxu0 0
        %4785 = vmatpush2.bf16.msra.mxu0 0
        %4786 = vmatprep.subr.bf16.mxu0 0
        %4787 = vmatpush2.bf16.msra.mxu0 0
        %4788 = vmatprep.subr.bf16.mxu0 0
        %4789 = vmatpush2.bf16.msra.mxu0 0
        %4790 = vmatprep.subr.bf16.mxu0 0
        %4791 = vmatpush2.bf16.msra.mxu0 0
        %4792 = vmatprep.mubr.bf16.mxu0 0
        %4793 = vmatmul.mubr.bf16.gmra.mxu0 %v4758
        %v4794 = vpop.f32.mrf.mxu0
        %v4795 = vadd.f32 %v4743, %v4794
        %v4796 = vpop.f32.mrf.mxu0
        %v4797 = vpop.f32.mrf.mxu0
        %v4798 = vpop.f32.mrf.mxu0
        %4799 = vdwg.mxu0
        %vm4800 = vcmask 1024
        %4801 = vst.msk [vmem:[%s25] sm:$0x3] %vm4800, %v4795
      $region128: #{tft_forward.1} parent=119 // pred_fallthru
        _
      // Predicated region
      $region129: #{tft_forward.1} parent=119 // pred_check
        %p4802 = pneg %p656
      $region130: #{tft_forward.1} parent=119 // pred_check_branch
        %4804 = sbr.rel (%p4802) target = $region132
      $region131: #{tft_forward.1} parent=119 // pred_region
        _
      $region132: #{tft_forward.1} parent=119 // pred_fallthru
        _
      // Predicated region
      $region133: #{tft_forward.1} parent=119 // pred_check
        %p4805 = pneg %p656
      $region134: #{tft_forward.1} parent=119 // pred_check_branch
        %4807 = sbr.rel (%p4805) target = $region136
      $region135: #{tft_forward.1} parent=119 // pred_region
        _
      $region136: #{tft_forward.1} parent=119 // pred_fallthru
        _
    $region120: #{tft_forward.1} parent=5 // pred_fallthru
      _
    %p4808 = scmp.le.s32.totalorder 2, %s33
    // Predicated region
    $region137: #{tft_forward.1} parent=5 // pred_check
      %p4809 = pneg %p4808
    $region138: #{tft_forward.1} parent=5 // pred_check_branch
      %4811 = sbr.rel (%p4809) target = $region140
    $region139: #{tft_forward.1} parent=5 // pred_region
      %s4812 = ssub.s32 %s33, 2
    $region140: #{tft_forward.1} parent=5 // pred_fallthru
      _
  $region6: #{tft_forward.1} parent=0 // loop_footer
    %s37 = sadd.s32 1, %s33
  $region7: #{tft_forward.1} parent=0 // loop_footer_branch
    %32 = sbr.rel target = $region3
  $region8: #{tft_forward.1} parent=0 // loop_exit
    _

</llo_original>
